<compile_context>
chip_gen: v7x
topology: tpu7x:2x2x1
jax: 0.10.0
libtpu: 0.0.40
codegen_flags: <defaults>
</compile_context>

<pallas_src>
import jax
import jax.numpy as jnp
from jax.experimental import pallas as pl
from jax.experimental.pallas import tpu as pltpu

CHANNELS = (512, 32, 32, 32, 32, 32, 32, 32, 32)
TOTAL_C = sum(CHANNELS)      # 768
EPS = 1e-5
CHUNK = 128                  # channels per inner step (sublane chunk), keeps vreg use low


def _cat_bn_kernel(x0, x1, x2, x3, x4, x5, x6, x7, x8,
                   gamma_ref, beta_ref, out_ref):
    n = out_ref.shape[0]
    hw = out_ref.shape[2]
    inv_count = 1.0 / float(n * hw)          # true sample count (N*H*W) per channel

    off = 0
    for ref in (x0, x1, x2, x3, x4, x5, x6, x7, x8):
        c = ref.shape[1]
        for j in range(0, c, CHUNK):
            cc = min(CHUNK, c - j)
            x = ref[:, j:j + cc, :].astype(jnp.float32)            # (n, cc, hw)
            # Per-channel batch mean over (N, H*W): lane reduce, then batch reduce.
            s1 = jnp.sum(x, axis=2, keepdims=True)                 # (n, cc, 1)
            s1 = jnp.sum(s1, axis=0, keepdims=True)                # (1, cc, 1)
            mean = s1 * inv_count
            # Two-pass (centered) variance -- chunk already lives in registers.
            d = x - mean
            s2 = jnp.sum(d * d, axis=2, keepdims=True)
            s2 = jnp.sum(s2, axis=0, keepdims=True)
            var = s2 * inv_count
            g = gamma_ref[:, off + j:off + j + cc, :].astype(jnp.float32)  # (1, cc, 1)
            b = beta_ref[:, off + j:off + j + cc, :].astype(jnp.float32)   # (1, cc, 1)
            scale = jax.lax.rsqrt(var + EPS) * g                   # (1, cc, 1), cheap
            out_ref[:, off + j:off + j + cc, :] = (d * scale + b).astype(out_ref.dtype)
        off += c


def fused_cat_batchnorm(xs, gamma, beta):
    """xs: list of 9 NCHW arrays (channel counts per CHANNELS); gamma/beta: (768,)."""
    N, _, H, W = xs[0].shape
    HW = H * W

    # Free views: NCHW -> (N, C_i, H*W); no transpose, no concat, no copy.
    xs_3d = [x.reshape(N, x.shape[1], HW) for x in xs]
    g3 = gamma.reshape(1, TOTAL_C, 1)
    b3 = beta.reshape(1, TOTAL_C, 1)

    in_specs = (
        [pl.BlockSpec((N, c, HW), lambda i: (0, 0, 0)) for c in CHANNELS]
        + [pl.BlockSpec((1, TOTAL_C, 1), lambda i: (0, 0, 0)),
           pl.BlockSpec((1, TOTAL_C, 1), lambda i: (0, 0, 0))]
    )
    out_spec = pl.BlockSpec((N, TOTAL_C, HW), lambda i: (0, 0, 0))

    out = pl.pallas_call(
        _cat_bn_kernel,
        out_shape=jax.ShapeDtypeStruct((N, TOTAL_C, HW), xs[0].dtype),
        grid=(1,),
        in_specs=in_specs,
        out_specs=out_spec,
        compiler_params=pltpu.CompilerParams(
            dimension_semantics=("arbitrary",)),
    )(*xs_3d, g3, b3)

    # Free reshape back to NCHW.
    return out.reshape(N, TOTAL_C, H, W)


def _reference(xs, gamma, beta):
    x = jnp.concatenate(xs, axis=1)                                # (N, 768, H, W)
    mean = jnp.mean(x, axis=(0, 2, 3), keepdims=True)
    var = jnp.mean((x - mean) ** 2, axis=(0, 2, 3), keepdims=True)
    g = gamma.reshape(1, -1, 1, 1)
    b = beta.reshape(1, -1, 1, 1)
    return (x - mean) * jax.lax.rsqrt(var + EPS) * g + b


if __name__ == "__main__":
    key = jax.random.PRNGKey(0)
    keys = jax.random.split(key, len(CHANNELS) + 2)

    # Inputs matching the module: (1, 512, 7, 7) and eight (1, 32, 7, 7).
    xs = [
        jax.random.normal(keys[i], (1, c, 7, 7), dtype=jnp.float32)
        for i, c in enumerate(CHANNELS)
    ]
    # PyTorch default init is weight=1, bias=0; perturb slightly so the affine path
    # is actually exercised.
    gamma = 1.0 + 0.1 * jax.random.normal(keys[-2], (TOTAL_C,), dtype=jnp.float32)
    beta = 0.1 * jax.random.normal(keys[-1], (TOTAL_C,), dtype=jnp.float32)

    out = fused_cat_batchnorm(xs, gamma, beta)
    out = jax.block_until_ready(out)

    ref = _reference(xs, gamma, beta)
    assert out.shape == (1, TOTAL_C, 7, 7)
    assert jnp.allclose(out, ref, atol=1e-4, rtol=1e-4), float(jnp.max(jnp.abs(out - ref)))

    print("KERNEL_OK")
</pallas_src>

<mosaic_0001>
module attributes {stable_mosaic.version = 11 : i64} {
  func.func @_cat_bn_kernel(%arg0: i32, %arg1: memref<1x512x49xf32, #tpu.memory_space<vmem>>, %arg2: memref<1x32x49xf32, #tpu.memory_space<vmem>>, %arg3: memref<1x32x49xf32, #tpu.memory_space<vmem>>, %arg4: memref<1x32x49xf32, #tpu.memory_space<vmem>>, %arg5: memref<1x32x49xf32, #tpu.memory_space<vmem>>, %arg6: memref<1x32x49xf32, #tpu.memory_space<vmem>>, %arg7: memref<1x32x49xf32, #tpu.memory_space<vmem>>, %arg8: memref<1x32x49xf32, #tpu.memory_space<vmem>>, %arg9: memref<1x32x49xf32, #tpu.memory_space<vmem>>, %arg10: memref<1x768x1xf32, #tpu.memory_space<vmem>>, %arg11: memref<1x768x1xf32, #tpu.memory_space<vmem>>, %arg12: memref<1x768x49xf32, #tpu.memory_space<vmem>>) attributes {dimension_semantics = [#tpu.dimension_semantics<arbitrary>], iteration_bounds = array<i64: 1>, scalar_prefetch = 0 : i64, scratch_operands = 0 : i64, tpu.core_type = #tpu.core_type<tc>, window_params = [{pipeline_mode = #tpu.pipeline_mode<synchronous>, transform_indices = @transform_0, window_bounds = array<i64: 1, 512, 49>}, {pipeline_mode = #tpu.pipeline_mode<synchronous>, transform_indices = @transform_1, window_bounds = array<i64: 1, 32, 49>}, {pipeline_mode = #tpu.pipeline_mode<synchronous>, transform_indices = @transform_2, window_bounds = array<i64: 1, 32, 49>}, {pipeline_mode = #tpu.pipeline_mode<synchronous>, transform_indices = @transform_3, window_bounds = array<i64: 1, 32, 49>}, {pipeline_mode = #tpu.pipeline_mode<synchronous>, transform_indices = @transform_4, window_bounds = array<i64: 1, 32, 49>}, {pipeline_mode = #tpu.pipeline_mode<synchronous>, transform_indices = @transform_5, window_bounds = array<i64: 1, 32, 49>}, {pipeline_mode = #tpu.pipeline_mode<synchronous>, transform_indices = @transform_6, window_bounds = array<i64: 1, 32, 49>}, {pipeline_mode = #tpu.pipeline_mode<synchronous>, transform_indices = @transform_7, window_bounds = array<i64: 1, 32, 49>}, {pipeline_mode = #tpu.pipeline_mode<synchronous>, transform_indices = @transform_8, window_bounds = array<i64: 1, 32, 49>}, {pipeline_mode = #tpu.pipeline_mode<synchronous>, transform_indices = @transform_9, window_bounds = array<i64: 1, 768, 1>}, {pipeline_mode = #tpu.pipeline_mode<synchronous>, transform_indices = @transform_10, window_bounds = array<i64: 1, 768, 1>}, {pipeline_mode = #tpu.pipeline_mode<synchronous>, transform_indices = @transform_11, window_bounds = array<i64: 1, 768, 49>}]} {
    %c0 = arith.constant 0 : index
    %c0_0 = arith.constant 0 : index
    %c0_1 = arith.constant 0 : index
    %0 = vector.load %arg1[%c0, %c0_0, %c0_1] : memref<1x512x49xf32, #tpu.memory_space<vmem>>, vector<1x128x49xf32>
    %cst = arith.constant dense<0.000000e+00> : vector<1x128xf32>
    %1 = vector.multi_reduction <add>, %0, %cst [2] : vector<1x128x49xf32> to vector<1x128xf32>
    %2 = vector.shape_cast %1 : vector<1x128xf32> to vector<1x128x1xf32>
    %cst_2 = arith.constant dense<0.000000e+00> : vector<128x1xf32>
    %3 = vector.multi_reduction <add>, %2, %cst_2 [0] : vector<1x128x1xf32> to vector<128x1xf32>
    %4 = vector.shape_cast %3 : vector<128x1xf32> to vector<1x128x1xf32>
    %cst_3 = arith.constant 0.0204081628 : f32
    %5 = vector.broadcast %cst_3 : f32 to vector<1x128x1xf32>
    %6 = arith.mulf %4, %5 : vector<1x128x1xf32>
    %7 = vector.broadcast %6 : vector<1x128x1xf32> to vector<1x128x49xf32>
    %8 = arith.subf %0, %7 : vector<1x128x49xf32>
    %9 = arith.mulf %8, %8 : vector<1x128x49xf32>
    %cst_4 = arith.constant dense<0.000000e+00> : vector<1x128xf32>
    %10 = vector.multi_reduction <add>, %9, %cst_4 [2] : vector<1x128x49xf32> to vector<1x128xf32>
    %11 = vector.shape_cast %10 : vector<1x128xf32> to vector<1x128x1xf32>
    %cst_5 = arith.constant dense<0.000000e+00> : vector<128x1xf32>
    %12 = vector.multi_reduction <add>, %11, %cst_5 [0] : vector<1x128x1xf32> to vector<128x1xf32>
    %13 = vector.shape_cast %12 : vector<128x1xf32> to vector<1x128x1xf32>
    %cst_6 = arith.constant 0.0204081628 : f32
    %14 = vector.broadcast %cst_6 : f32 to vector<1x128x1xf32>
    %15 = arith.mulf %13, %14 : vector<1x128x1xf32>
    %c0_7 = arith.constant 0 : index
    %c0_8 = arith.constant 0 : index
    %c0_9 = arith.constant 0 : index
    %16 = vector.load %arg10[%c0_7, %c0_8, %c0_9] : memref<1x768x1xf32, #tpu.memory_space<vmem>>, vector<1x128x1xf32>
    %c0_10 = arith.constant 0 : index
    %c0_11 = arith.constant 0 : index
    %c0_12 = arith.constant 0 : index
    %17 = vector.load %arg11[%c0_10, %c0_11, %c0_12] : memref<1x768x1xf32, #tpu.memory_space<vmem>>, vector<1x128x1xf32>
    %cst_13 = arith.constant 9.99999974E-6 : f32
    %18 = vector.broadcast %cst_13 : f32 to vector<1x128x1xf32>
    %19 = arith.addf %15, %18 : vector<1x128x1xf32>
    %20 = math.rsqrt %19 : vector<1x128x1xf32>
    %21 = arith.mulf %20, %16 : vector<1x128x1xf32>
    %22 = vector.broadcast %21 : vector<1x128x1xf32> to vector<1x128x49xf32>
    %23 = arith.mulf %8, %22 : vector<1x128x49xf32>
    %24 = vector.broadcast %17 : vector<1x128x1xf32> to vector<1x128x49xf32>
    %25 = arith.addf %23, %24 : vector<1x128x49xf32>
    %c0_14 = arith.constant 0 : index
    %c0_15 = arith.constant 0 : index
    %c0_16 = arith.constant 0 : index
    %26 = vector.load %arg12[%c0_14, %c0_15, %c0_16] : memref<1x768x49xf32, #tpu.memory_space<vmem>>, vector<1x128x49xf32>
    tpu.vector_store %arg12[%c0_14, %c0_15, %c0_16], %25 {strides = array<i32>} : memref<1x768x49xf32, #tpu.memory_space<vmem>>, vector<1x128x49xf32>,
    %c0_17 = arith.constant 0 : index
    %c128 = arith.constant 128 : index
    %c0_18 = arith.constant 0 : index
    %27 = vector.load %arg1[%c0_17, %c128, %c0_18] : memref<1x512x49xf32, #tpu.memory_space<vmem>>, vector<1x128x49xf32>
    %cst_19 = arith.constant dense<0.000000e+00> : vector<1x128xf32>
    %28 = vector.multi_reduction <add>, %27, %cst_19 [2] : vector<1x128x49xf32> to vector<1x128xf32>
    %29 = vector.shape_cast %28 : vector<1x128xf32> to vector<1x128x1xf32>
    %cst_20 = arith.constant dense<0.000000e+00> : vector<128x1xf32>
    %30 = vector.multi_reduction <add>, %29, %cst_20 [0] : vector<1x128x1xf32> to vector<128x1xf32>
    %31 = vector.shape_cast %30 : vector<128x1xf32> to vector<1x128x1xf32>
    %cst_21 = arith.constant 0.0204081628 : f32
    %32 = vector.broadcast %cst_21 : f32 to vector<1x128x1xf32>
    %33 = arith.mulf %31, %32 : vector<1x128x1xf32>
    %34 = vector.broadcast %33 : vector<1x128x1xf32> to vector<1x128x49xf32>
    %35 = arith.subf %27, %34 : vector<1x128x49xf32>
    %36 = arith.mulf %35, %35 : vector<1x128x49xf32>
    %cst_22 = arith.constant dense<0.000000e+00> : vector<1x128xf32>
    %37 = vector.multi_reduction <add>, %36, %cst_22 [2] : vector<1x128x49xf32> to vector<1x128xf32>
    %38 = vector.shape_cast %37 : vector<1x128xf32> to vector<1x128x1xf32>
    %cst_23 = arith.constant dense<0.000000e+00> : vector<128x1xf32>
    %39 = vector.multi_reduction <add>, %38, %cst_23 [0] : vector<1x128x1xf32> to vector<128x1xf32>
    %40 = vector.shape_cast %39 : vector<128x1xf32> to vector<1x128x1xf32>
    %cst_24 = arith.constant 0.0204081628 : f32
    %41 = vector.broadcast %cst_24 : f32 to vector<1x128x1xf32>
    %42 = arith.mulf %40, %41 : vector<1x128x1xf32>
    %c0_25 = arith.constant 0 : index
    %c128_26 = arith.constant 128 : index
    %c0_27 = arith.constant 0 : index
    %43 = vector.load %arg10[%c0_25, %c128_26, %c0_27] : memref<1x768x1xf32, #tpu.memory_space<vmem>>, vector<1x128x1xf32>
    %c0_28 = arith.constant 0 : index
    %c128_29 = arith.constant 128 : index
    %c0_30 = arith.constant 0 : index
    %44 = vector.load %arg11[%c0_28, %c128_29, %c0_30] : memref<1x768x1xf32, #tpu.memory_space<vmem>>, vector<1x128x1xf32>
    %cst_31 = arith.constant 9.99999974E-6 : f32
    %45 = vector.broadcast %cst_31 : f32 to vector<1x128x1xf32>
    %46 = arith.addf %42, %45 : vector<1x128x1xf32>
    %47 = math.rsqrt %46 : vector<1x128x1xf32>
    %48 = arith.mulf %47, %43 : vector<1x128x1xf32>
    %49 = vector.broadcast %48 : vector<1x128x1xf32> to vector<1x128x49xf32>
    %50 = arith.mulf %35, %49 : vector<1x128x49xf32>
    %51 = vector.broadcast %44 : vector<1x128x1xf32> to vector<1x128x49xf32>
    %52 = arith.addf %50, %51 : vector<1x128x49xf32>
    %c0_32 = arith.constant 0 : index
    %c128_33 = arith.constant 128 : index
    %c0_34 = arith.constant 0 : index
    %53 = vector.load %arg12[%c0_32, %c128_33, %c0_34] : memref<1x768x49xf32, #tpu.memory_space<vmem>>, vector<1x128x49xf32>
    tpu.vector_store %arg12[%c0_32, %c128_33, %c0_34], %52 {strides = array<i32>} : memref<1x768x49xf32, #tpu.memory_space<vmem>>, vector<1x128x49xf32>,
    %c0_35 = arith.constant 0 : index
    %c256 = arith.constant 256 : index
    %c0_36 = arith.constant 0 : index
    %54 = vector.load %arg1[%c0_35, %c256, %c0_36] : memref<1x512x49xf32, #tpu.memory_space<vmem>>, vector<1x128x49xf32>
    %cst_37 = arith.constant dense<0.000000e+00> : vector<1x128xf32>
    %55 = vector.multi_reduction <add>, %54, %cst_37 [2] : vector<1x128x49xf32> to vector<1x128xf32>
    %56 = vector.shape_cast %55 : vector<1x128xf32> to vector<1x128x1xf32>
    %cst_38 = arith.constant dense<0.000000e+00> : vector<128x1xf32>
    %57 = vector.multi_reduction <add>, %56, %cst_38 [0] : vector<1x128x1xf32> to vector<128x1xf32>
    %58 = vector.shape_cast %57 : vector<128x1xf32> to vector<1x128x1xf32>
    %cst_39 = arith.constant 0.0204081628 : f32
    %59 = vector.broadcast %cst_39 : f32 to vector<1x128x1xf32>
    %60 = arith.mulf %58, %59 : vector<1x128x1xf32>
    %61 = vector.broadcast %60 : vector<1x128x1xf32> to vector<1x128x49xf32>
    %62 = arith.subf %54, %61 : vector<1x128x49xf32>
    %63 = arith.mulf %62, %62 : vector<1x128x49xf32>
    %cst_40 = arith.constant dense<0.000000e+00> : vector<1x128xf32>
    %64 = vector.multi_reduction <add>, %63, %cst_40 [2] : vector<1x128x49xf32> to vector<1x128xf32>
    %65 = vector.shape_cast %64 : vector<1x128xf32> to vector<1x128x1xf32>
    %cst_41 = arith.constant dense<0.000000e+00> : vector<128x1xf32>
    %66 = vector.multi_reduction <add>, %65, %cst_41 [0] : vector<1x128x1xf32> to vector<128x1xf32>
    %67 = vector.shape_cast %66 : vector<128x1xf32> to vector<1x128x1xf32>
    %cst_42 = arith.constant 0.0204081628 : f32
    %68 = vector.broadcast %cst_42 : f32 to vector<1x128x1xf32>
    %69 = arith.mulf %67, %68 : vector<1x128x1xf32>
    %c0_43 = arith.constant 0 : index
    %c256_44 = arith.constant 256 : index
    %c0_45 = arith.constant 0 : index
    %70 = vector.load %arg10[%c0_43, %c256_44, %c0_45] : memref<1x768x1xf32, #tpu.memory_space<vmem>>, vector<1x128x1xf32>
    %c0_46 = arith.constant 0 : index
    %c256_47 = arith.constant 256 : index
    %c0_48 = arith.constant 0 : index
    %71 = vector.load %arg11[%c0_46, %c256_47, %c0_48] : memref<1x768x1xf32, #tpu.memory_space<vmem>>, vector<1x128x1xf32>
    %cst_49 = arith.constant 9.99999974E-6 : f32
    %72 = vector.broadcast %cst_49 : f32 to vector<1x128x1xf32>
    %73 = arith.addf %69, %72 : vector<1x128x1xf32>
    %74 = math.rsqrt %73 : vector<1x128x1xf32>
    %75 = arith.mulf %74, %70 : vector<1x128x1xf32>
    %76 = vector.broadcast %75 : vector<1x128x1xf32> to vector<1x128x49xf32>
    %77 = arith.mulf %62, %76 : vector<1x128x49xf32>
    %78 = vector.broadcast %71 : vector<1x128x1xf32> to vector<1x128x49xf32>
    %79 = arith.addf %77, %78 : vector<1x128x49xf32>
    %c0_50 = arith.constant 0 : index
    %c256_51 = arith.constant 256 : index
    %c0_52 = arith.constant 0 : index
    %80 = vector.load %arg12[%c0_50, %c256_51, %c0_52] : memref<1x768x49xf32, #tpu.memory_space<vmem>>, vector<1x128x49xf32>
    tpu.vector_store %arg12[%c0_50, %c256_51, %c0_52], %79 {strides = array<i32>} : memref<1x768x49xf32, #tpu.memory_space<vmem>>, vector<1x128x49xf32>,
    %c0_53 = arith.constant 0 : index
    %c384 = arith.constant 384 : index
    %c0_54 = arith.constant 0 : index
    %81 = vector.load %arg1[%c0_53, %c384, %c0_54] : memref<1x512x49xf32, #tpu.memory_space<vmem>>, vector<1x128x49xf32>
    %cst_55 = arith.constant dense<0.000000e+00> : vector<1x128xf32>
    %82 = vector.multi_reduction <add>, %81, %cst_55 [2] : vector<1x128x49xf32> to vector<1x128xf32>
    %83 = vector.shape_cast %82 : vector<1x128xf32> to vector<1x128x1xf32>
    %cst_56 = arith.constant dense<0.000000e+00> : vector<128x1xf32>
    %84 = vector.multi_reduction <add>, %83, %cst_56 [0] : vector<1x128x1xf32> to vector<128x1xf32>
    %85 = vector.shape_cast %84 : vector<128x1xf32> to vector<1x128x1xf32>
    %cst_57 = arith.constant 0.0204081628 : f32
    %86 = vector.broadcast %cst_57 : f32 to vector<1x128x1xf32>
    %87 = arith.mulf %85, %86 : vector<1x128x1xf32>
    %88 = vector.broadcast %87 : vector<1x128x1xf32> to vector<1x128x49xf32>
    %89 = arith.subf %81, %88 : vector<1x128x49xf32>
    %90 = arith.mulf %89, %89 : vector<1x128x49xf32>
    %cst_58 = arith.constant dense<0.000000e+00> : vector<1x128xf32>
    %91 = vector.multi_reduction <add>, %90, %cst_58 [2] : vector<1x128x49xf32> to vector<1x128xf32>
    %92 = vector.shape_cast %91 : vector<1x128xf32> to vector<1x128x1xf32>
    %cst_59 = arith.constant dense<0.000000e+00> : vector<128x1xf32>
    %93 = vector.multi_reduction <add>, %92, %cst_59 [0] : vector<1x128x1xf32> to vector<128x1xf32>
    %94 = vector.shape_cast %93 : vector<128x1xf32> to vector<1x128x1xf32>
    %cst_60 = arith.constant 0.0204081628 : f32
    %95 = vector.broadcast %cst_60 : f32 to vector<1x128x1xf32>
    %96 = arith.mulf %94, %95 : vector<1x128x1xf32>
    %c0_61 = arith.constant 0 : index
    %c384_62 = arith.constant 384 : index
    %c0_63 = arith.constant 0 : index
    %97 = vector.load %arg10[%c0_61, %c384_62, %c0_63] : memref<1x768x1xf32, #tpu.memory_space<vmem>>, vector<1x128x1xf32>
    %c0_64 = arith.constant 0 : index
    %c384_65 = arith.constant 384 : index
    %c0_66 = arith.constant 0 : index
    %98 = vector.load %arg11[%c0_64, %c384_65, %c0_66] : memref<1x768x1xf32, #tpu.memory_space<vmem>>, vector<1x128x1xf32>
    %cst_67 = arith.constant 9.99999974E-6 : f32
    %99 = vector.broadcast %cst_67 : f32 to vector<1x128x1xf32>
    %100 = arith.addf %96, %99 : vector<1x128x1xf32>
    %101 = math.rsqrt %100 : vector<1x128x1xf32>
    %102 = arith.mulf %101, %97 : vector<1x128x1xf32>
    %103 = vector.broadcast %102 : vector<1x128x1xf32> to vector<1x128x49xf32>
    %104 = arith.mulf %89, %103 : vector<1x128x49xf32>
    %105 = vector.broadcast %98 : vector<1x128x1xf32> to vector<1x128x49xf32>
    %106 = arith.addf %104, %105 : vector<1x128x49xf32>
    %c0_68 = arith.constant 0 : index
    %c384_69 = arith.constant 384 : index
    %c0_70 = arith.constant 0 : index
    %107 = vector.load %arg12[%c0_68, %c384_69, %c0_70] : memref<1x768x49xf32, #tpu.memory_space<vmem>>, vector<1x128x49xf32>
    tpu.vector_store %arg12[%c0_68, %c384_69, %c0_70], %106 {strides = array<i32>} : memref<1x768x49xf32, #tpu.memory_space<vmem>>, vector<1x128x49xf32>,
    %c0_71 = arith.constant 0 : index
    %c0_72 = arith.constant 0 : index
    %c0_73 = arith.constant 0 : index
    %108 = vector.load %arg2[%c0_71, %c0_72, %c0_73] : memref<1x32x49xf32, #tpu.memory_space<vmem>>, vector<1x32x49xf32>
    %cst_74 = arith.constant dense<0.000000e+00> : vector<1x32xf32>
    %109 = vector.multi_reduction <add>, %108, %cst_74 [2] : vector<1x32x49xf32> to vector<1x32xf32>
    %110 = vector.shape_cast %109 : vector<1x32xf32> to vector<1x32x1xf32>
    %cst_75 = arith.constant dense<0.000000e+00> : vector<32x1xf32>
    %111 = vector.multi_reduction <add>, %110, %cst_75 [0] : vector<1x32x1xf32> to vector<32x1xf32>
    %112 = vector.shape_cast %111 : vector<32x1xf32> to vector<1x32x1xf32>
    %cst_76 = arith.constant 0.0204081628 : f32
    %113 = vector.broadcast %cst_76 : f32 to vector<1x32x1xf32>
    %114 = arith.mulf %112, %113 : vector<1x32x1xf32>
    %115 = vector.broadcast %114 : vector<1x32x1xf32> to vector<1x32x49xf32>
    %116 = arith.subf %108, %115 : vector<1x32x49xf32>
    %117 = arith.mulf %116, %116 : vector<1x32x49xf32>
    %cst_77 = arith.constant dense<0.000000e+00> : vector<1x32xf32>
    %118 = vector.multi_reduction <add>, %117, %cst_77 [2] : vector<1x32x49xf32> to vector<1x32xf32>
    %119 = vector.shape_cast %118 : vector<1x32xf32> to vector<1x32x1xf32>
    %cst_78 = arith.constant dense<0.000000e+00> : vector<32x1xf32>
    %120 = vector.multi_reduction <add>, %119, %cst_78 [0] : vector<1x32x1xf32> to vector<32x1xf32>
    %121 = vector.shape_cast %120 : vector<32x1xf32> to vector<1x32x1xf32>
    %cst_79 = arith.constant 0.0204081628 : f32
    %122 = vector.broadcast %cst_79 : f32 to vector<1x32x1xf32>
    %123 = arith.mulf %121, %122 : vector<1x32x1xf32>
    %c0_80 = arith.constant 0 : index
    %c512 = arith.constant 512 : index
    %c0_81 = arith.constant 0 : index
    %124 = vector.load %arg10[%c0_80, %c512, %c0_81] : memref<1x768x1xf32, #tpu.memory_space<vmem>>, vector<1x32x1xf32>
    %c0_82 = arith.constant 0 : index
    %c512_83 = arith.constant 512 : index
    %c0_84 = arith.constant 0 : index
    %125 = vector.load %arg11[%c0_82, %c512_83, %c0_84] : memref<1x768x1xf32, #tpu.memory_space<vmem>>, vector<1x32x1xf32>
    %cst_85 = arith.constant 9.99999974E-6 : f32
    %126 = vector.broadcast %cst_85 : f32 to vector<1x32x1xf32>
    %127 = arith.addf %123, %126 : vector<1x32x1xf32>
    %128 = math.rsqrt %127 : vector<1x32x1xf32>
    %129 = arith.mulf %128, %124 : vector<1x32x1xf32>
    %130 = vector.broadcast %129 : vector<1x32x1xf32> to vector<1x32x49xf32>
    %131 = arith.mulf %116, %130 : vector<1x32x49xf32>
    %132 = vector.broadcast %125 : vector<1x32x1xf32> to vector<1x32x49xf32>
    %133 = arith.addf %131, %132 : vector<1x32x49xf32>
    %c0_86 = arith.constant 0 : index
    %c512_87 = arith.constant 512 : index
    %c0_88 = arith.constant 0 : index
    %134 = vector.load %arg12[%c0_86, %c512_87, %c0_88] : memref<1x768x49xf32, #tpu.memory_space<vmem>>, vector<1x32x49xf32>
    tpu.vector_store %arg12[%c0_86, %c512_87, %c0_88], %133 {strides = array<i32>} : memref<1x768x49xf32, #tpu.memory_space<vmem>>, vector<1x32x49xf32>,
    %c0_89 = arith.constant 0 : index
    %c0_90 = arith.constant 0 : index
    %c0_91 = arith.constant 0 : index
    %135 = vector.load %arg3[%c0_89, %c0_90, %c0_91] : memref<1x32x49xf32, #tpu.memory_space<vmem>>, vector<1x32x49xf32>
    %cst_92 = arith.constant dense<0.000000e+00> : vector<1x32xf32>
    %136 = vector.multi_reduction <add>, %135, %cst_92 [2] : vector<1x32x49xf32> to vector<1x32xf32>
    %137 = vector.shape_cast %136 : vector<1x32xf32> to vector<1x32x1xf32>
    %cst_93 = arith.constant dense<0.000000e+00> : vector<32x1xf32>
    %138 = vector.multi_reduction <add>, %137, %cst_93 [0] : vector<1x32x1xf32> to vector<32x1xf32>
    %139 = vector.shape_cast %138 : vector<32x1xf32> to vector<1x32x1xf32>
    %cst_94 = arith.constant 0.0204081628 : f32
    %140 = vector.broadcast %cst_94 : f32 to vector<1x32x1xf32>
    %141 = arith.mulf %139, %140 : vector<1x32x1xf32>
    %142 = vector.broadcast %141 : vector<1x32x1xf32> to vector<1x32x49xf32>
    %143 = arith.subf %135, %142 : vector<1x32x49xf32>
    %144 = arith.mulf %143, %143 : vector<1x32x49xf32>
    %cst_95 = arith.constant dense<0.000000e+00> : vector<1x32xf32>
    %145 = vector.multi_reduction <add>, %144, %cst_95 [2] : vector<1x32x49xf32> to vector<1x32xf32>
    %146 = vector.shape_cast %145 : vector<1x32xf32> to vector<1x32x1xf32>
    %cst_96 = arith.constant dense<0.000000e+00> : vector<32x1xf32>
    %147 = vector.multi_reduction <add>, %146, %cst_96 [0] : vector<1x32x1xf32> to vector<32x1xf32>
    %148 = vector.shape_cast %147 : vector<32x1xf32> to vector<1x32x1xf32>
    %cst_97 = arith.constant 0.0204081628 : f32
    %149 = vector.broadcast %cst_97 : f32 to vector<1x32x1xf32>
    %150 = arith.mulf %148, %149 : vector<1x32x1xf32>
    %c0_98 = arith.constant 0 : index
    %c544 = arith.constant 544 : index
    %c0_99 = arith.constant 0 : index
    %151 = vector.load %arg10[%c0_98, %c544, %c0_99] : memref<1x768x1xf32, #tpu.memory_space<vmem>>, vector<1x32x1xf32>
    %c0_100 = arith.constant 0 : index
    %c544_101 = arith.constant 544 : index
    %c0_102 = arith.constant 0 : index
    %152 = vector.load %arg11[%c0_100, %c544_101, %c0_102] : memref<1x768x1xf32, #tpu.memory_space<vmem>>, vector<1x32x1xf32>
    %cst_103 = arith.constant 9.99999974E-6 : f32
    %153 = vector.broadcast %cst_103 : f32 to vector<1x32x1xf32>
    %154 = arith.addf %150, %153 : vector<1x32x1xf32>
    %155 = math.rsqrt %154 : vector<1x32x1xf32>
    %156 = arith.mulf %155, %151 : vector<1x32x1xf32>
    %157 = vector.broadcast %156 : vector<1x32x1xf32> to vector<1x32x49xf32>
    %158 = arith.mulf %143, %157 : vector<1x32x49xf32>
    %159 = vector.broadcast %152 : vector<1x32x1xf32> to vector<1x32x49xf32>
    %160 = arith.addf %158, %159 : vector<1x32x49xf32>
    %c0_104 = arith.constant 0 : index
    %c544_105 = arith.constant 544 : index
    %c0_106 = arith.constant 0 : index
    %161 = vector.load %arg12[%c0_104, %c544_105, %c0_106] : memref<1x768x49xf32, #tpu.memory_space<vmem>>, vector<1x32x49xf32>
    tpu.vector_store %arg12[%c0_104, %c544_105, %c0_106], %160 {strides = array<i32>} : memref<1x768x49xf32, #tpu.memory_space<vmem>>, vector<1x32x49xf32>,
    %c0_107 = arith.constant 0 : index
    %c0_108 = arith.constant 0 : index
    %c0_109 = arith.constant 0 : index
    %162 = vector.load %arg4[%c0_107, %c0_108, %c0_109] : memref<1x32x49xf32, #tpu.memory_space<vmem>>, vector<1x32x49xf32>
    %cst_110 = arith.constant dense<0.000000e+00> : vector<1x32xf32>
    %163 = vector.multi_reduction <add>, %162, %cst_110 [2] : vector<1x32x49xf32> to vector<1x32xf32>
    %164 = vector.shape_cast %163 : vector<1x32xf32> to vector<1x32x1xf32>
    %cst_111 = arith.constant dense<0.000000e+00> : vector<32x1xf32>
    %165 = vector.multi_reduction <add>, %164, %cst_111 [0] : vector<1x32x1xf32> to vector<32x1xf32>
    %166 = vector.shape_cast %165 : vector<32x1xf32> to vector<1x32x1xf32>
    %cst_112 = arith.constant 0.0204081628 : f32
    %167 = vector.broadcast %cst_112 : f32 to vector<1x32x1xf32>
    %168 = arith.mulf %166, %167 : vector<1x32x1xf32>
    %169 = vector.broadcast %168 : vector<1x32x1xf32> to vector<1x32x49xf32>
    %170 = arith.subf %162, %169 : vector<1x32x49xf32>
    %171 = arith.mulf %170, %170 : vector<1x32x49xf32>
    %cst_113 = arith.constant dense<0.000000e+00> : vector<1x32xf32>
    %172 = vector.multi_reduction <add>, %171, %cst_113 [2] : vector<1x32x49xf32> to vector<1x32xf32>
    %173 = vector.shape_cast %172 : vector<1x32xf32> to vector<1x32x1xf32>
    %cst_114 = arith.constant dense<0.000000e+00> : vector<32x1xf32>
    %174 = vector.multi_reduction <add>, %173, %cst_114 [0] : vector<1x32x1xf32> to vector<32x1xf32>
    %175 = vector.shape_cast %174 : vector<32x1xf32> to vector<1x32x1xf32>
    %cst_115 = arith.constant 0.0204081628 : f32
    %176 = vector.broadcast %cst_115 : f32 to vector<1x32x1xf32>
    %177 = arith.mulf %175, %176 : vector<1x32x1xf32>
    %c0_116 = arith.constant 0 : index
    %c576 = arith.constant 576 : index
    %c0_117 = arith.constant 0 : index
    %178 = vector.load %arg10[%c0_116, %c576, %c0_117] : memref<1x768x1xf32, #tpu.memory_space<vmem>>, vector<1x32x1xf32>
    %c0_118 = arith.constant 0 : index
    %c576_119 = arith.constant 576 : index
    %c0_120 = arith.constant 0 : index
    %179 = vector.load %arg11[%c0_118, %c576_119, %c0_120] : memref<1x768x1xf32, #tpu.memory_space<vmem>>, vector<1x32x1xf32>
    %cst_121 = arith.constant 9.99999974E-6 : f32
    %180 = vector.broadcast %cst_121 : f32 to vector<1x32x1xf32>
    %181 = arith.addf %177, %180 : vector<1x32x1xf32>
    %182 = math.rsqrt %181 : vector<1x32x1xf32>
    %183 = arith.mulf %182, %178 : vector<1x32x1xf32>
    %184 = vector.broadcast %183 : vector<1x32x1xf32> to vector<1x32x49xf32>
    %185 = arith.mulf %170, %184 : vector<1x32x49xf32>
    %186 = vector.broadcast %179 : vector<1x32x1xf32> to vector<1x32x49xf32>
    %187 = arith.addf %185, %186 : vector<1x32x49xf32>
    %c0_122 = arith.constant 0 : index
    %c576_123 = arith.constant 576 : index
    %c0_124 = arith.constant 0 : index
    %188 = vector.load %arg12[%c0_122, %c576_123, %c0_124] : memref<1x768x49xf32, #tpu.memory_space<vmem>>, vector<1x32x49xf32>
    tpu.vector_store %arg12[%c0_122, %c576_123, %c0_124], %187 {strides = array<i32>} : memref<1x768x49xf32, #tpu.memory_space<vmem>>, vector<1x32x49xf32>,
    %c0_125 = arith.constant 0 : index
    %c0_126 = arith.constant 0 : index
    %c0_127 = arith.constant 0 : index
    %189 = vector.load %arg5[%c0_125, %c0_126, %c0_127] : memref<1x32x49xf32, #tpu.memory_space<vmem>>, vector<1x32x49xf32>
    %cst_128 = arith.constant dense<0.000000e+00> : vector<1x32xf32>
    %190 = vector.multi_reduction <add>, %189, %cst_128 [2] : vector<1x32x49xf32> to vector<1x32xf32>
    %191 = vector.shape_cast %190 : vector<1x32xf32> to vector<1x32x1xf32>
    %cst_129 = arith.constant dense<0.000000e+00> : vector<32x1xf32>
    %192 = vector.multi_reduction <add>, %191, %cst_129 [0] : vector<1x32x1xf32> to vector<32x1xf32>
    %193 = vector.shape_cast %192 : vector<32x1xf32> to vector<1x32x1xf32>
    %cst_130 = arith.constant 0.0204081628 : f32
    %194 = vector.broadcast %cst_130 : f32 to vector<1x32x1xf32>
    %195 = arith.mulf %193, %194 : vector<1x32x1xf32>
    %196 = vector.broadcast %195 : vector<1x32x1xf32> to vector<1x32x49xf32>
    %197 = arith.subf %189, %196 : vector<1x32x49xf32>
    %198 = arith.mulf %197, %197 : vector<1x32x49xf32>
    %cst_131 = arith.constant dense<0.000000e+00> : vector<1x32xf32>
    %199 = vector.multi_reduction <add>, %198, %cst_131 [2] : vector<1x32x49xf32> to vector<1x32xf32>
    %200 = vector.shape_cast %199 : vector<1x32xf32> to vector<1x32x1xf32>
    %cst_132 = arith.constant dense<0.000000e+00> : vector<32x1xf32>
    %201 = vector.multi_reduction <add>, %200, %cst_132 [0] : vector<1x32x1xf32> to vector<32x1xf32>
    %202 = vector.shape_cast %201 : vector<32x1xf32> to vector<1x32x1xf32>
    %cst_133 = arith.constant 0.0204081628 : f32
    %203 = vector.broadcast %cst_133 : f32 to vector<1x32x1xf32>
    %204 = arith.mulf %202, %203 : vector<1x32x1xf32>
    %c0_134 = arith.constant 0 : index
    %c608 = arith.constant 608 : index
    %c0_135 = arith.constant 0 : index
    %205 = vector.load %arg10[%c0_134, %c608, %c0_135] : memref<1x768x1xf32, #tpu.memory_space<vmem>>, vector<1x32x1xf32>
    %c0_136 = arith.constant 0 : index
    %c608_137 = arith.constant 608 : index
    %c0_138 = arith.constant 0 : index
    %206 = vector.load %arg11[%c0_136, %c608_137, %c0_138] : memref<1x768x1xf32, #tpu.memory_space<vmem>>, vector<1x32x1xf32>
    %cst_139 = arith.constant 9.99999974E-6 : f32
    %207 = vector.broadcast %cst_139 : f32 to vector<1x32x1xf32>
    %208 = arith.addf %204, %207 : vector<1x32x1xf32>
    %209 = math.rsqrt %208 : vector<1x32x1xf32>
    %210 = arith.mulf %209, %205 : vector<1x32x1xf32>
    %211 = vector.broadcast %210 : vector<1x32x1xf32> to vector<1x32x49xf32>
    %212 = arith.mulf %197, %211 : vector<1x32x49xf32>
    %213 = vector.broadcast %206 : vector<1x32x1xf32> to vector<1x32x49xf32>
    %214 = arith.addf %212, %213 : vector<1x32x49xf32>
    %c0_140 = arith.constant 0 : index
    %c608_141 = arith.constant 608 : index
    %c0_142 = arith.constant 0 : index
    %215 = vector.load %arg12[%c0_140, %c608_141, %c0_142] : memref<1x768x49xf32, #tpu.memory_space<vmem>>, vector<1x32x49xf32>
    tpu.vector_store %arg12[%c0_140, %c608_141, %c0_142], %214 {strides = array<i32>} : memref<1x768x49xf32, #tpu.memory_space<vmem>>, vector<1x32x49xf32>,
    %c0_143 = arith.constant 0 : index
    %c0_144 = arith.constant 0 : index
    %c0_145 = arith.constant 0 : index
    %216 = vector.load %arg6[%c0_143, %c0_144, %c0_145] : memref<1x32x49xf32, #tpu.memory_space<vmem>>, vector<1x32x49xf32>
    %cst_146 = arith.constant dense<0.000000e+00> : vector<1x32xf32>
    %217 = vector.multi_reduction <add>, %216, %cst_146 [2] : vector<1x32x49xf32> to vector<1x32xf32>
    %218 = vector.shape_cast %217 : vector<1x32xf32> to vector<1x32x1xf32>
    %cst_147 = arith.constant dense<0.000000e+00> : vector<32x1xf32>
    %219 = vector.multi_reduction <add>, %218, %cst_147 [0] : vector<1x32x1xf32> to vector<32x1xf32>
    %220 = vector.shape_cast %219 : vector<32x1xf32> to vector<1x32x1xf32>
    %cst_148 = arith.constant 0.0204081628 : f32
    %221 = vector.broadcast %cst_148 : f32 to vector<1x32x1xf32>
    %222 = arith.mulf %220, %221 : vector<1x32x1xf32>
    %223 = vector.broadcast %222 : vector<1x32x1xf32> to vector<1x32x49xf32>
    %224 = arith.subf %216, %223 : vector<1x32x49xf32>
    %225 = arith.mulf %224, %224 : vector<1x32x49xf32>
    %cst_149 = arith.constant dense<0.000000e+00> : vector<1x32xf32>
    %226 = vector.multi_reduction <add>, %225, %cst_149 [2] : vector<1x32x49xf32> to vector<1x32xf32>
    %227 = vector.shape_cast %226 : vector<1x32xf32> to vector<1x32x1xf32>
    %cst_150 = arith.constant dense<0.000000e+00> : vector<32x1xf32>
    %228 = vector.multi_reduction <add>, %227, %cst_150 [0] : vector<1x32x1xf32> to vector<32x1xf32>
    %229 = vector.shape_cast %228 : vector<32x1xf32> to vector<1x32x1xf32>
    %cst_151 = arith.constant 0.0204081628 : f32
    %230 = vector.broadcast %cst_151 : f32 to vector<1x32x1xf32>
    %231 = arith.mulf %229, %230 : vector<1x32x1xf32>
    %c0_152 = arith.constant 0 : index
    %c640 = arith.constant 640 : index
    %c0_153 = arith.constant 0 : index
    %232 = vector.load %arg10[%c0_152, %c640, %c0_153] : memref<1x768x1xf32, #tpu.memory_space<vmem>>, vector<1x32x1xf32>
    %c0_154 = arith.constant 0 : index
    %c640_155 = arith.constant 640 : index
    %c0_156 = arith.constant 0 : index
    %233 = vector.load %arg11[%c0_154, %c640_155, %c0_156] : memref<1x768x1xf32, #tpu.memory_space<vmem>>, vector<1x32x1xf32>
    %cst_157 = arith.constant 9.99999974E-6 : f32
    %234 = vector.broadcast %cst_157 : f32 to vector<1x32x1xf32>
    %235 = arith.addf %231, %234 : vector<1x32x1xf32>
    %236 = math.rsqrt %235 : vector<1x32x1xf32>
    %237 = arith.mulf %236, %232 : vector<1x32x1xf32>
    %238 = vector.broadcast %237 : vector<1x32x1xf32> to vector<1x32x49xf32>
    %239 = arith.mulf %224, %238 : vector<1x32x49xf32>
    %240 = vector.broadcast %233 : vector<1x32x1xf32> to vector<1x32x49xf32>
    %241 = arith.addf %239, %240 : vector<1x32x49xf32>
    %c0_158 = arith.constant 0 : index
    %c640_159 = arith.constant 640 : index
    %c0_160 = arith.constant 0 : index
    %242 = vector.load %arg12[%c0_158, %c640_159, %c0_160] : memref<1x768x49xf32, #tpu.memory_space<vmem>>, vector<1x32x49xf32>
    tpu.vector_store %arg12[%c0_158, %c640_159, %c0_160], %241 {strides = array<i32>} : memref<1x768x49xf32, #tpu.memory_space<vmem>>, vector<1x32x49xf32>,
    %c0_161 = arith.constant 0 : index
    %c0_162 = arith.constant 0 : index
    %c0_163 = arith.constant 0 : index
    %243 = vector.load %arg7[%c0_161, %c0_162, %c0_163] : memref<1x32x49xf32, #tpu.memory_space<vmem>>, vector<1x32x49xf32>
    %cst_164 = arith.constant dense<0.000000e+00> : vector<1x32xf32>
    %244 = vector.multi_reduction <add>, %243, %cst_164 [2] : vector<1x32x49xf32> to vector<1x32xf32>
    %245 = vector.shape_cast %244 : vector<1x32xf32> to vector<1x32x1xf32>
    %cst_165 = arith.constant dense<0.000000e+00> : vector<32x1xf32>
    %246 = vector.multi_reduction <add>, %245, %cst_165 [0] : vector<1x32x1xf32> to vector<32x1xf32>
    %247 = vector.shape_cast %246 : vector<32x1xf32> to vector<1x32x1xf32>
    %cst_166 = arith.constant 0.0204081628 : f32
    %248 = vector.broadcast %cst_166 : f32 to vector<1x32x1xf32>
    %249 = arith.mulf %247, %248 : vector<1x32x1xf32>
    %250 = vector.broadcast %249 : vector<1x32x1xf32> to vector<1x32x49xf32>
    %251 = arith.subf %243, %250 : vector<1x32x49xf32>
    %252 = arith.mulf %251, %251 : vector<1x32x49xf32>
    %cst_167 = arith.constant dense<0.000000e+00> : vector<1x32xf32>
    %253 = vector.multi_reduction <add>, %252, %cst_167 [2] : vector<1x32x49xf32> to vector<1x32xf32>
    %254 = vector.shape_cast %253 : vector<1x32xf32> to vector<1x32x1xf32>
    %cst_168 = arith.constant dense<0.000000e+00> : vector<32x1xf32>
    %255 = vector.multi_reduction <add>, %254, %cst_168 [0] : vector<1x32x1xf32> to vector<32x1xf32>
    %256 = vector.shape_cast %255 : vector<32x1xf32> to vector<1x32x1xf32>
    %cst_169 = arith.constant 0.0204081628 : f32
    %257 = vector.broadcast %cst_169 : f32 to vector<1x32x1xf32>
    %258 = arith.mulf %256, %257 : vector<1x32x1xf32>
    %c0_170 = arith.constant 0 : index
    %c672 = arith.constant 672 : index
    %c0_171 = arith.constant 0 : index
    %259 = vector.load %arg10[%c0_170, %c672, %c0_171] : memref<1x768x1xf32, #tpu.memory_space<vmem>>, vector<1x32x1xf32>
    %c0_172 = arith.constant 0 : index
    %c672_173 = arith.constant 672 : index
    %c0_174 = arith.constant 0 : index
    %260 = vector.load %arg11[%c0_172, %c672_173, %c0_174] : memref<1x768x1xf32, #tpu.memory_space<vmem>>, vector<1x32x1xf32>
    %cst_175 = arith.constant 9.99999974E-6 : f32
    %261 = vector.broadcast %cst_175 : f32 to vector<1x32x1xf32>
    %262 = arith.addf %258, %261 : vector<1x32x1xf32>
    %263 = math.rsqrt %262 : vector<1x32x1xf32>
    %264 = arith.mulf %263, %259 : vector<1x32x1xf32>
    %265 = vector.broadcast %264 : vector<1x32x1xf32> to vector<1x32x49xf32>
    %266 = arith.mulf %251, %265 : vector<1x32x49xf32>
    %267 = vector.broadcast %260 : vector<1x32x1xf32> to vector<1x32x49xf32>
    %268 = arith.addf %266, %267 : vector<1x32x49xf32>
    %c0_176 = arith.constant 0 : index
    %c672_177 = arith.constant 672 : index
    %c0_178 = arith.constant 0 : index
    %269 = vector.load %arg12[%c0_176, %c672_177, %c0_178] : memref<1x768x49xf32, #tpu.memory_space<vmem>>, vector<1x32x49xf32>
    tpu.vector_store %arg12[%c0_176, %c672_177, %c0_178], %268 {strides = array<i32>} : memref<1x768x49xf32, #tpu.memory_space<vmem>>, vector<1x32x49xf32>,
    %c0_179 = arith.constant 0 : index
    %c0_180 = arith.constant 0 : index
    %c0_181 = arith.constant 0 : index
    %270 = vector.load %arg8[%c0_179, %c0_180, %c0_181] : memref<1x32x49xf32, #tpu.memory_space<vmem>>, vector<1x32x49xf32>
    %cst_182 = arith.constant dense<0.000000e+00> : vector<1x32xf32>
    %271 = vector.multi_reduction <add>, %270, %cst_182 [2] : vector<1x32x49xf32> to vector<1x32xf32>
    %272 = vector.shape_cast %271 : vector<1x32xf32> to vector<1x32x1xf32>
    %cst_183 = arith.constant dense<0.000000e+00> : vector<32x1xf32>
    %273 = vector.multi_reduction <add>, %272, %cst_183 [0] : vector<1x32x1xf32> to vector<32x1xf32>
    %274 = vector.shape_cast %273 : vector<32x1xf32> to vector<1x32x1xf32>
    %cst_184 = arith.constant 0.0204081628 : f32
    %275 = vector.broadcast %cst_184 : f32 to vector<1x32x1xf32>
    %276 = arith.mulf %274, %275 : vector<1x32x1xf32>
    %277 = vector.broadcast %276 : vector<1x32x1xf32> to vector<1x32x49xf32>
    %278 = arith.subf %270, %277 : vector<1x32x49xf32>
    %279 = arith.mulf %278, %278 : vector<1x32x49xf32>
    %cst_185 = arith.constant dense<0.000000e+00> : vector<1x32xf32>
    %280 = vector.multi_reduction <add>, %279, %cst_185 [2] : vector<1x32x49xf32> to vector<1x32xf32>
    %281 = vector.shape_cast %280 : vector<1x32xf32> to vector<1x32x1xf32>
    %cst_186 = arith.constant dense<0.000000e+00> : vector<32x1xf32>
    %282 = vector.multi_reduction <add>, %281, %cst_186 [0] : vector<1x32x1xf32> to vector<32x1xf32>
    %283 = vector.shape_cast %282 : vector<32x1xf32> to vector<1x32x1xf32>
    %cst_187 = arith.constant 0.0204081628 : f32
    %284 = vector.broadcast %cst_187 : f32 to vector<1x32x1xf32>
    %285 = arith.mulf %283, %284 : vector<1x32x1xf32>
    %c0_188 = arith.constant 0 : index
    %c704 = arith.constant 704 : index
    %c0_189 = arith.constant 0 : index
    %286 = vector.load %arg10[%c0_188, %c704, %c0_189] : memref<1x768x1xf32, #tpu.memory_space<vmem>>, vector<1x32x1xf32>
    %c0_190 = arith.constant 0 : index
    %c704_191 = arith.constant 704 : index
    %c0_192 = arith.constant 0 : index
    %287 = vector.load %arg11[%c0_190, %c704_191, %c0_192] : memref<1x768x1xf32, #tpu.memory_space<vmem>>, vector<1x32x1xf32>
    %cst_193 = arith.constant 9.99999974E-6 : f32
    %288 = vector.broadcast %cst_193 : f32 to vector<1x32x1xf32>
    %289 = arith.addf %285, %288 : vector<1x32x1xf32>
    %290 = math.rsqrt %289 : vector<1x32x1xf32>
    %291 = arith.mulf %290, %286 : vector<1x32x1xf32>
    %292 = vector.broadcast %291 : vector<1x32x1xf32> to vector<1x32x49xf32>
    %293 = arith.mulf %278, %292 : vector<1x32x49xf32>
    %294 = vector.broadcast %287 : vector<1x32x1xf32> to vector<1x32x49xf32>
    %295 = arith.addf %293, %294 : vector<1x32x49xf32>
    %c0_194 = arith.constant 0 : index
    %c704_195 = arith.constant 704 : index
    %c0_196 = arith.constant 0 : index
    %296 = vector.load %arg12[%c0_194, %c704_195, %c0_196] : memref<1x768x49xf32, #tpu.memory_space<vmem>>, vector<1x32x49xf32>
    tpu.vector_store %arg12[%c0_194, %c704_195, %c0_196], %295 {strides = array<i32>} : memref<1x768x49xf32, #tpu.memory_space<vmem>>, vector<1x32x49xf32>,
    %c0_197 = arith.constant 0 : index
    %c0_198 = arith.constant 0 : index
    %c0_199 = arith.constant 0 : index
    %297 = vector.load %arg9[%c0_197, %c0_198, %c0_199] : memref<1x32x49xf32, #tpu.memory_space<vmem>>, vector<1x32x49xf32>
    %cst_200 = arith.constant dense<0.000000e+00> : vector<1x32xf32>
    %298 = vector.multi_reduction <add>, %297, %cst_200 [2] : vector<1x32x49xf32> to vector<1x32xf32>
    %299 = vector.shape_cast %298 : vector<1x32xf32> to vector<1x32x1xf32>
    %cst_201 = arith.constant dense<0.000000e+00> : vector<32x1xf32>
    %300 = vector.multi_reduction <add>, %299, %cst_201 [0] : vector<1x32x1xf32> to vector<32x1xf32>
    %301 = vector.shape_cast %300 : vector<32x1xf32> to vector<1x32x1xf32>
    %cst_202 = arith.constant 0.0204081628 : f32
    %302 = vector.broadcast %cst_202 : f32 to vector<1x32x1xf32>
    %303 = arith.mulf %301, %302 : vector<1x32x1xf32>
    %304 = vector.broadcast %303 : vector<1x32x1xf32> to vector<1x32x49xf32>
    %305 = arith.subf %297, %304 : vector<1x32x49xf32>
    %306 = arith.mulf %305, %305 : vector<1x32x49xf32>
    %cst_203 = arith.constant dense<0.000000e+00> : vector<1x32xf32>
    %307 = vector.multi_reduction <add>, %306, %cst_203 [2] : vector<1x32x49xf32> to vector<1x32xf32>
    %308 = vector.shape_cast %307 : vector<1x32xf32> to vector<1x32x1xf32>
    %cst_204 = arith.constant dense<0.000000e+00> : vector<32x1xf32>
    %309 = vector.multi_reduction <add>, %308, %cst_204 [0] : vector<1x32x1xf32> to vector<32x1xf32>
    %310 = vector.shape_cast %309 : vector<32x1xf32> to vector<1x32x1xf32>
    %cst_205 = arith.constant 0.0204081628 : f32
    %311 = vector.broadcast %cst_205 : f32 to vector<1x32x1xf32>
    %312 = arith.mulf %310, %311 : vector<1x32x1xf32>
    %c0_206 = arith.constant 0 : index
    %c736 = arith.constant 736 : index
    %c0_207 = arith.constant 0 : index
    %313 = vector.load %arg10[%c0_206, %c736, %c0_207] : memref<1x768x1xf32, #tpu.memory_space<vmem>>, vector<1x32x1xf32>
    %c0_208 = arith.constant 0 : index
    %c736_209 = arith.constant 736 : index
    %c0_210 = arith.constant 0 : index
    %314 = vector.load %arg11[%c0_208, %c736_209, %c0_210] : memref<1x768x1xf32, #tpu.memory_space<vmem>>, vector<1x32x1xf32>
    %cst_211 = arith.constant 9.99999974E-6 : f32
    %315 = vector.broadcast %cst_211 : f32 to vector<1x32x1xf32>
    %316 = arith.addf %312, %315 : vector<1x32x1xf32>
    %317 = math.rsqrt %316 : vector<1x32x1xf32>
    %318 = arith.mulf %317, %313 : vector<1x32x1xf32>
    %319 = vector.broadcast %318 : vector<1x32x1xf32> to vector<1x32x49xf32>
    %320 = arith.mulf %305, %319 : vector<1x32x49xf32>
    %321 = vector.broadcast %314 : vector<1x32x1xf32> to vector<1x32x49xf32>
    %322 = arith.addf %320, %321 : vector<1x32x49xf32>
    %c0_212 = arith.constant 0 : index
    %c736_213 = arith.constant 736 : index
    %c0_214 = arith.constant 0 : index
    %323 = vector.load %arg12[%c0_212, %c736_213, %c0_214] : memref<1x768x49xf32, #tpu.memory_space<vmem>>, vector<1x32x49xf32>
    tpu.vector_store %arg12[%c0_212, %c736_213, %c0_214], %322 {strides = array<i32>} : memref<1x768x49xf32, #tpu.memory_space<vmem>>, vector<1x32x49xf32>,
    return
  }
  func.func @transform_0(%arg0: i32) -> (i32, i32, i32) {
    %c0_i32 = arith.constant 0 : i32
    %c0_i32_0 = arith.constant 0 : i32
    %c0_i32_1 = arith.constant 0 : i32
    %c0_i32_2 = arith.constant 0 : i32
    return %c0_i32, %c0_i32_0, %c0_i32_1 : i32, i32, i32
  }
  func.func @transform_1(%arg0: i32) -> (i32, i32, i32) {
    %c0_i32 = arith.constant 0 : i32
    %c0_i32_0 = arith.constant 0 : i32
    %c0_i32_1 = arith.constant 0 : i32
    %c0_i32_2 = arith.constant 0 : i32
    return %c0_i32, %c0_i32_0, %c0_i32_1 : i32, i32, i32
  }
  func.func @transform_2(%arg0: i32) -> (i32, i32, i32) {
    %c0_i32 = arith.constant 0 : i32
    %c0_i32_0 = arith.constant 0 : i32
    %c0_i32_1 = arith.constant 0 : i32
    %c0_i32_2 = arith.constant 0 : i32
    return %c0_i32, %c0_i32_0, %c0_i32_1 : i32, i32, i32
  }
  func.func @transform_3(%arg0: i32) -> (i32, i32, i32) {
    %c0_i32 = arith.constant 0 : i32
    %c0_i32_0 = arith.constant 0 : i32
    %c0_i32_1 = arith.constant 0 : i32
    %c0_i32_2 = arith.constant 0 : i32
    return %c0_i32, %c0_i32_0, %c0_i32_1 : i32, i32, i32
  }
  func.func @transform_4(%arg0: i32) -> (i32, i32, i32) {
    %c0_i32 = arith.constant 0 : i32
    %c0_i32_0 = arith.constant 0 : i32
    %c0_i32_1 = arith.constant 0 : i32
    %c0_i32_2 = arith.constant 0 : i32
    return %c0_i32, %c0_i32_0, %c0_i32_1 : i32, i32, i32
  }
  func.func @transform_5(%arg0: i32) -> (i32, i32, i32) {
    %c0_i32 = arith.constant 0 : i32
    %c0_i32_0 = arith.constant 0 : i32
    %c0_i32_1 = arith.constant 0 : i32
    %c0_i32_2 = arith.constant 0 : i32
    return %c0_i32, %c0_i32_0, %c0_i32_1 : i32, i32, i32
  }
  func.func @transform_6(%arg0: i32) -> (i32, i32, i32) {
    %c0_i32 = arith.constant 0 : i32
    %c0_i32_0 = arith.constant 0 : i32
    %c0_i32_1 = arith.constant 0 : i32
    %c0_i32_2 = arith.constant 0 : i32
    return %c0_i32, %c0_i32_0, %c0_i32_1 : i32, i32, i32
  }
  func.func @transform_7(%arg0: i32) -> (i32, i32, i32) {
    %c0_i32 = arith.constant 0 : i32
    %c0_i32_0 = arith.constant 0 : i32
    %c0_i32_1 = arith.constant 0 : i32
    %c0_i32_2 = arith.constant 0 : i32
    return %c0_i32, %c0_i32_0, %c0_i32_1 : i32, i32, i32
  }
  func.func @transform_8(%arg0: i32) -> (i32, i32, i32) {
    %c0_i32 = arith.constant 0 : i32
    %c0_i32_0 = arith.constant 0 : i32
    %c0_i32_1 = arith.constant 0 : i32
    %c0_i32_2 = arith.constant 0 : i32
    return %c0_i32, %c0_i32_0, %c0_i32_1 : i32, i32, i32
  }
  func.func @transform_9(%arg0: i32) -> (i32, i32, i32) {
    %c0_i32 = arith.constant 0 : i32
    %c0_i32_0 = arith.constant 0 : i32
    %c0_i32_1 = arith.constant 0 : i32
    %c0_i32_2 = arith.constant 0 : i32
    return %c0_i32, %c0_i32_0, %c0_i32_1 : i32, i32, i32
  }
  func.func @transform_10(%arg0: i32) -> (i32, i32, i32) {
    %c0_i32 = arith.constant 0 : i32
    %c0_i32_0 = arith.constant 0 : i32
    %c0_i32_1 = arith.constant 0 : i32
    %c0_i32_2 = arith.constant 0 : i32
    return %c0_i32, %c0_i32_0, %c0_i32_1 : i32, i32, i32
  }
  func.func @transform_11(%arg0: i32) -> (i32, i32, i32) {
    %c0_i32 = arith.constant 0 : i32
    %c0_i32_0 = arith.constant 0 : i32
    %c0_i32_1 = arith.constant 0 : i32
    %c0_i32_2 = arith.constant 0 : i32
    return %c0_i32, %c0_i32_0, %c0_i32_1 : i32, i32, i32
  }
}

</mosaic_0001>

<llo_original>
// kernel: tpu_custom_call.1
$region0: #{tpu_custom_call.1}
  #allocation0 [shape = 'u32[]', space=smem, size = 0x4, offset = 0x4, fixed_abs, tag = 'smem constant byte address 0x4 - core index']
  #allocation1 [shape = 'u32[144,128]{1,0:T(1,128)}', space=vmem, size = 0x12000, scoped, tag = 'internal scratch']
  %s0 = inlined_call_operand.vmem [shape: f32[1,512,49], index: 0, kind: input, shape index: {}]
  %s1 = inlined_call_operand.vmem [shape: f32[1,32,49], index: 1, kind: input, shape index: {}]
  %s2 = inlined_call_operand.vmem [shape: f32[1,32,49], index: 2, kind: input, shape index: {}]
  %s3 = inlined_call_operand.vmem [shape: f32[1,32,49], index: 3, kind: input, shape index: {}]
  %s4 = inlined_call_operand.vmem [shape: f32[1,32,49], index: 4, kind: input, shape index: {}]
  %s5 = inlined_call_operand.vmem [shape: f32[1,32,49], index: 5, kind: input, shape index: {}]
  %s6 = inlined_call_operand.vmem [shape: f32[1,32,49], index: 6, kind: input, shape index: {}]
  %s7 = inlined_call_operand.vmem [shape: f32[1,32,49], index: 7, kind: input, shape index: {}]
  %s8 = inlined_call_operand.vmem [shape: f32[1,32,49], index: 8, kind: input, shape index: {}]
  %s9 = inlined_call_operand.vmem [shape: f32[1,768,1], index: 9, kind: input, shape index: {}]
  %s10 = inlined_call_operand.vmem [shape: f32[1,768,1], index: 10, kind: input, shape index: {}]
  %s11 = inlined_call_operand.vmem [shape: f32[1,768,49], index: 11, kind: output, shape index: {}]
  %s12 = sld [smem:[#allocation0]]
  $region54: #{tpu_custom_call.1} parent=0
    _
  %s14 = ssub.s32 1, %s12
  %s15 = scalar_select 0, %s14, %s12
  // Predicated region
  $region2: #{tpu_custom_call.1} parent=0 // pred_check
    _
  $region3: #{tpu_custom_call.1} parent=0 // pred_check_branch
    %17 = sbr.rel (0) target = $region5
  $region4: #{tpu_custom_call.1} parent=0 // pred_region
    _
  $region5: #{tpu_custom_call.1} parent=0 // pred_fallthru
    _
  // Predicated region
  $region6: #{tpu_custom_call.1} parent=0 // pred_check
    _
  $region7: #{tpu_custom_call.1} parent=0 // pred_check_branch
    %19 = sbr.rel (0) target = $region9
  $region8: #{tpu_custom_call.1} parent=0 // pred_region
    _
  $region9: #{tpu_custom_call.1} parent=0 // pred_fallthru
    _
  // Predicated region
  $region10: #{tpu_custom_call.1} parent=0 // pred_check
    _
  $region11: #{tpu_custom_call.1} parent=0 // pred_check_branch
    %21 = sbr.rel (0) target = $region13
  $region12: #{tpu_custom_call.1} parent=0 // pred_region
    _
  $region13: #{tpu_custom_call.1} parent=0 // pred_fallthru
    _
  // Predicated region
  $region14: #{tpu_custom_call.1} parent=0 // pred_check
    _
  $region15: #{tpu_custom_call.1} parent=0 // pred_check_branch
    %23 = sbr.rel (0) target = $region17
  $region16: #{tpu_custom_call.1} parent=0 // pred_region
    _
  $region17: #{tpu_custom_call.1} parent=0 // pred_fallthru
    _
  // Predicated region
  $region18: #{tpu_custom_call.1} parent=0 // pred_check
    _
  $region19: #{tpu_custom_call.1} parent=0 // pred_check_branch
    %25 = sbr.rel (0) target = $region21
  $region20: #{tpu_custom_call.1} parent=0 // pred_region
    _
  $region21: #{tpu_custom_call.1} parent=0 // pred_fallthru
    _
  // Predicated region
  $region22: #{tpu_custom_call.1} parent=0 // pred_check
    _
  $region23: #{tpu_custom_call.1} parent=0 // pred_check_branch
    %27 = sbr.rel (0) target = $region25
  $region24: #{tpu_custom_call.1} parent=0 // pred_region
    _
  $region25: #{tpu_custom_call.1} parent=0 // pred_fallthru
    _
  // Predicated region
  $region26: #{tpu_custom_call.1} parent=0 // pred_check
    _
  $region27: #{tpu_custom_call.1} parent=0 // pred_check_branch
    %29 = sbr.rel (0) target = $region29
  $region28: #{tpu_custom_call.1} parent=0 // pred_region
    _
  $region29: #{tpu_custom_call.1} parent=0 // pred_fallthru
    _
  // Predicated region
  $region30: #{tpu_custom_call.1} parent=0 // pred_check
    _
  $region31: #{tpu_custom_call.1} parent=0 // pred_check_branch
    %31 = sbr.rel (0) target = $region33
  $region32: #{tpu_custom_call.1} parent=0 // pred_region
    _
  $region33: #{tpu_custom_call.1} parent=0 // pred_fallthru
    _
  // Predicated region
  $region34: #{tpu_custom_call.1} parent=0 // pred_check
    _
  $region35: #{tpu_custom_call.1} parent=0 // pred_check_branch
    %33 = sbr.rel (0) target = $region37
  $region36: #{tpu_custom_call.1} parent=0 // pred_region
    _
  $region37: #{tpu_custom_call.1} parent=0 // pred_fallthru
    _
  // Predicated region
  $region38: #{tpu_custom_call.1} parent=0 // pred_check
    _
  $region39: #{tpu_custom_call.1} parent=0 // pred_check_branch
    %35 = sbr.rel (0) target = $region41
  $region40: #{tpu_custom_call.1} parent=0 // pred_region
    _
  $region41: #{tpu_custom_call.1} parent=0 // pred_fallthru
    _
  // Predicated region
  $region42: #{tpu_custom_call.1} parent=0 // pred_check
    _
  $region43: #{tpu_custom_call.1} parent=0 // pred_check_branch
    %37 = sbr.rel (0) target = $region45
  $region44: #{tpu_custom_call.1} parent=0 // pred_region
    _
  $region45: #{tpu_custom_call.1} parent=0 // pred_fallthru
    _
  %v38 = vld [vmem:[%s0] sm:$0xff]
  %v39 = vld [vmem:[%s0 + $0x8] sm:$0xff]
  %v40 = vld [vmem:[%s0 + $0x10] sm:$0xff]
  %v41 = vld [vmem:[%s0 + $0x18] sm:$0xff]
  %v42 = vld [vmem:[%s0 + $0x20] sm:$0xff]
  %v43 = vld [vmem:[%s0 + $0x28] sm:$0xff]
  %v44 = vld [vmem:[%s0 + $0x30] sm:$0xff]
  %v45 = vld [vmem:[%s0 + $0x38] sm:$0xff]
  %v46 = vld [vmem:[%s0 + $0x40] sm:$0xff]
  %v47 = vld [vmem:[%s0 + $0x48] sm:$0xff]
  %v48 = vld [vmem:[%s0 + $0x50] sm:$0xff]
  %v49 = vld [vmem:[%s0 + $0x58] sm:$0xff]
  %v50 = vld [vmem:[%s0 + $0x60] sm:$0xff]
  %v51 = vld [vmem:[%s0 + $0x68] sm:$0xff]
  %v52 = vld [vmem:[%s0 + $0x70] sm:$0xff]
  %v53 = vld [vmem:[%s0 + $0x78] sm:$0xff]
  %vm54 = vcmask 400384
  %v55 = vsel %vm54, %v38, 0.0
  %56 = vadd.xlane.f32.xlu0 %v55
  %v57 = vpop.xlane.xlu0 %56
  %v58 = vsel %vm54, %v39, 0.0
  %59 = vadd.xlane.f32.xlu0 %v58
  %v60 = vpop.xlane.xlu0 %59
  %v61 = vsel %vm54, %v40, 0.0
  %62 = vadd.xlane.f32.xlu0 %v61
  %v63 = vpop.xlane.xlu0 %62
  %v64 = vsel %vm54, %v41, 0.0
  %65 = vadd.xlane.f32.xlu0 %v64
  %v66 = vpop.xlane.xlu0 %65
  %v67 = vsel %vm54, %v42, 0.0
  %68 = vadd.xlane.f32.xlu0 %v67
  %v69 = vpop.xlane.xlu0 %68
  %v70 = vsel %vm54, %v43, 0.0
  %71 = vadd.xlane.f32.xlu0 %v70
  %v72 = vpop.xlane.xlu0 %71
  %v73 = vsel %vm54, %v44, 0.0
  %74 = vadd.xlane.f32.xlu0 %v73
  %v75 = vpop.xlane.xlu0 %74
  %v76 = vsel %vm54, %v45, 0.0
  %77 = vadd.xlane.f32.xlu0 %v76
  %v78 = vpop.xlane.xlu0 %77
  %v79 = vsel %vm54, %v46, 0.0
  %80 = vadd.xlane.f32.xlu0 %v79
  %v81 = vpop.xlane.xlu0 %80
  %v82 = vsel %vm54, %v47, 0.0
  %83 = vadd.xlane.f32.xlu0 %v82
  %v84 = vpop.xlane.xlu0 %83
  %v85 = vsel %vm54, %v48, 0.0
  %86 = vadd.xlane.f32.xlu0 %v85
  %v87 = vpop.xlane.xlu0 %86
  %v88 = vsel %vm54, %v49, 0.0
  %89 = vadd.xlane.f32.xlu0 %v88
  %v90 = vpop.xlane.xlu0 %89
  %v91 = vsel %vm54, %v50, 0.0
  %92 = vadd.xlane.f32.xlu0 %v91
  %v93 = vpop.xlane.xlu0 %92
  %v94 = vsel %vm54, %v51, 0.0
  %95 = vadd.xlane.f32.xlu0 %v94
  %v96 = vpop.xlane.xlu0 %95
  %v97 = vsel %vm54, %v52, 0.0
  %98 = vadd.xlane.f32.xlu0 %v97
  %v99 = vpop.xlane.xlu0 %98
  %v100 = vsel %vm54, %v53, 0.0
  %101 = vadd.xlane.f32.xlu0 %v100
  %v102 = vpop.xlane.xlu0 %101
  %v103 = vadd.f32 %v57, 0.0
  %v104 = vadd.f32 %v60, 0.0
  %v105 = vadd.f32 %v63, 0.0
  %v106 = vadd.f32 %v66, 0.0
  %v107 = vadd.f32 %v69, 0.0
  %v108 = vadd.f32 %v72, 0.0
  %v109 = vadd.f32 %v75, 0.0
  %v110 = vadd.f32 %v78, 0.0
  %v111 = vadd.f32 %v81, 0.0
  %v112 = vadd.f32 %v84, 0.0
  %v113 = vadd.f32 %v87, 0.0
  %v114 = vadd.f32 %v90, 0.0
  %v115 = vadd.f32 %v93, 0.0
  %v116 = vadd.f32 %v96, 0.0
  %v117 = vadd.f32 %v99, 0.0
  %v118 = vadd.f32 %v102, 0.0
  %v119 = vmul.f32 %v103, 0.020408163
  %v120 = vmul.f32 %v104, 0.020408163
  %v121 = vmul.f32 %v105, 0.020408163
  %v122 = vmul.f32 %v106, 0.020408163
  %v123 = vmul.f32 %v107, 0.020408163
  %v124 = vmul.f32 %v108, 0.020408163
  %v125 = vmul.f32 %v109, 0.020408163
  %v126 = vmul.f32 %v110, 0.020408163
  %v127 = vmul.f32 %v111, 0.020408163
  %v128 = vmul.f32 %v112, 0.020408163
  %v129 = vmul.f32 %v113, 0.020408163
  %v130 = vmul.f32 %v114, 0.020408163
  %v131 = vmul.f32 %v115, 0.020408163
  %v132 = vmul.f32 %v116, 0.020408163
  %v133 = vmul.f32 %v117, 0.020408163
  %v134 = vmul.f32 %v118, 0.020408163
  %v135 = vsub.f32 %v38, %v119
  %v136 = vsub.f32 %v39, %v120
  %v137 = vsub.f32 %v40, %v121
  %v138 = vsub.f32 %v41, %v122
  %v139 = vsub.f32 %v42, %v123
  %v140 = vsub.f32 %v43, %v124
  %v141 = vsub.f32 %v44, %v125
  %v142 = vsub.f32 %v45, %v126
  %v143 = vsub.f32 %v46, %v127
  %v144 = vsub.f32 %v47, %v128
  %v145 = vsub.f32 %v48, %v129
  %v146 = vsub.f32 %v49, %v130
  %v147 = vsub.f32 %v50, %v131
  %v148 = vsub.f32 %v51, %v132
  %v149 = vsub.f32 %v52, %v133
  %v150 = vsub.f32 %v53, %v134
  %v151 = vmul.f32 %v135, %v135
  %v152 = vmul.f32 %v136, %v136
  %v153 = vmul.f32 %v137, %v137
  %v154 = vmul.f32 %v138, %v138
  %v155 = vmul.f32 %v139, %v139
  %v156 = vmul.f32 %v140, %v140
  %v157 = vmul.f32 %v141, %v141
  %v158 = vmul.f32 %v142, %v142
  %v159 = vmul.f32 %v143, %v143
  %v160 = vmul.f32 %v144, %v144
  %v161 = vmul.f32 %v145, %v145
  %v162 = vmul.f32 %v146, %v146
  %v163 = vmul.f32 %v147, %v147
  %v164 = vmul.f32 %v148, %v148
  %v165 = vmul.f32 %v149, %v149
  %v166 = vmul.f32 %v150, %v150
  %v167 = vsel %vm54, %v151, 0.0
  %168 = vadd.xlane.f32.xlu0 %v167
  %v169 = vpop.xlane.xlu0 %168
  %v170 = vsel %vm54, %v152, 0.0
  %171 = vadd.xlane.f32.xlu0 %v170
  %v172 = vpop.xlane.xlu0 %171
  %v173 = vsel %vm54, %v153, 0.0
  %174 = vadd.xlane.f32.xlu0 %v173
  %v175 = vpop.xlane.xlu0 %174
  %v176 = vsel %vm54, %v154, 0.0
  %177 = vadd.xlane.f32.xlu0 %v176
  %v178 = vpop.xlane.xlu0 %177
  %v179 = vsel %vm54, %v155, 0.0
  %180 = vadd.xlane.f32.xlu0 %v179
  %v181 = vpop.xlane.xlu0 %180
  %v182 = vsel %vm54, %v156, 0.0
  %183 = vadd.xlane.f32.xlu0 %v182
  %v184 = vpop.xlane.xlu0 %183
  %v185 = vsel %vm54, %v157, 0.0
  %186 = vadd.xlane.f32.xlu0 %v185
  %v187 = vpop.xlane.xlu0 %186
  %v188 = vsel %vm54, %v158, 0.0
  %189 = vadd.xlane.f32.xlu0 %v188
  %v190 = vpop.xlane.xlu0 %189
  %v191 = vsel %vm54, %v159, 0.0
  %192 = vadd.xlane.f32.xlu0 %v191
  %v193 = vpop.xlane.xlu0 %192
  %v194 = vsel %vm54, %v160, 0.0
  %195 = vadd.xlane.f32.xlu0 %v194
  %v196 = vpop.xlane.xlu0 %195
  %v197 = vsel %vm54, %v161, 0.0
  %198 = vadd.xlane.f32.xlu0 %v197
  %v199 = vpop.xlane.xlu0 %198
  %v200 = vsel %vm54, %v162, 0.0
  %201 = vadd.xlane.f32.xlu0 %v200
  %v202 = vpop.xlane.xlu0 %201
  %v203 = vsel %vm54, %v163, 0.0
  %204 = vadd.xlane.f32.xlu0 %v203
  %v205 = vpop.xlane.xlu0 %204
  %v206 = vsel %vm54, %v164, 0.0
  %207 = vadd.xlane.f32.xlu0 %v206
  %v208 = vpop.xlane.xlu0 %207
  %v209 = vsel %vm54, %v165, 0.0
  %210 = vadd.xlane.f32.xlu0 %v209
  %v211 = vpop.xlane.xlu0 %210
  %v212 = vsel %vm54, %v166, 0.0
  %213 = vadd.xlane.f32.xlu0 %v212
  %v214 = vpop.xlane.xlu0 %213
  %v215 = vadd.f32 %v169, 0.0
  %v216 = vadd.f32 %v172, 0.0
  %v217 = vadd.f32 %v175, 0.0
  %v218 = vadd.f32 %v178, 0.0
  %v219 = vadd.f32 %v181, 0.0
  %v220 = vadd.f32 %v184, 0.0
  %v221 = vadd.f32 %v187, 0.0
  %v222 = vadd.f32 %v190, 0.0
  %v223 = vadd.f32 %v193, 0.0
  %v224 = vadd.f32 %v196, 0.0
  %v225 = vadd.f32 %v199, 0.0
  %v226 = vadd.f32 %v202, 0.0
  %v227 = vadd.f32 %v205, 0.0
  %v228 = vadd.f32 %v208, 0.0
  %v229 = vadd.f32 %v211, 0.0
  %v230 = vadd.f32 %v214, 0.0
  %v231 = vmul.f32 %v215, 0.020408163
  %v232 = vmul.f32 %v216, 0.020408163
  %v233 = vmul.f32 %v217, 0.020408163
  %v234 = vmul.f32 %v218, 0.020408163
  %v235 = vmul.f32 %v219, 0.020408163
  %v236 = vmul.f32 %v220, 0.020408163
  %v237 = vmul.f32 %v221, 0.020408163
  %v238 = vmul.f32 %v222, 0.020408163
  %v239 = vmul.f32 %v223, 0.020408163
  %v240 = vmul.f32 %v224, 0.020408163
  %v241 = vmul.f32 %v225, 0.020408163
  %v242 = vmul.f32 %v226, 0.020408163
  %v243 = vmul.f32 %v227, 0.020408163
  %v244 = vmul.f32 %v228, 0.020408163
  %v245 = vmul.f32 %v229, 0.020408163
  %v246 = vmul.f32 %v230, 0.020408163
  %v247 = vld [vmem:[%s9] sm:$0xff]
  %v248 = vld [vmem:[%s9 + $0x8] sm:$0xff]
  %v249 = vld [vmem:[%s9 + $0x10] sm:$0xff]
  %v250 = vld [vmem:[%s9 + $0x18] sm:$0xff]
  %v251 = vld [vmem:[%s9 + $0x20] sm:$0xff]
  %v252 = vld [vmem:[%s9 + $0x28] sm:$0xff]
  %v253 = vld [vmem:[%s9 + $0x30] sm:$0xff]
  %v254 = vld [vmem:[%s9 + $0x38] sm:$0xff]
  %v255 = vld [vmem:[%s9 + $0x40] sm:$0xff]
  %v256 = vld [vmem:[%s9 + $0x48] sm:$0xff]
  %v257 = vld [vmem:[%s9 + $0x50] sm:$0xff]
  %v258 = vld [vmem:[%s9 + $0x58] sm:$0xff]
  %v259 = vld [vmem:[%s9 + $0x60] sm:$0xff]
  %v260 = vld [vmem:[%s9 + $0x68] sm:$0xff]
  %v261 = vld [vmem:[%s9 + $0x70] sm:$0xff]
  %v262 = vld [vmem:[%s9 + $0x78] sm:$0xff]
  %v263 = vld [vmem:[%s10] sm:$0xff]
  %v264 = vld [vmem:[%s10 + $0x8] sm:$0xff]
  %v265 = vld [vmem:[%s10 + $0x10] sm:$0xff]
  %v266 = vld [vmem:[%s10 + $0x18] sm:$0xff]
  %v267 = vld [vmem:[%s10 + $0x20] sm:$0xff]
  %v268 = vld [vmem:[%s10 + $0x28] sm:$0xff]
  %v269 = vld [vmem:[%s10 + $0x30] sm:$0xff]
  %v270 = vld [vmem:[%s10 + $0x38] sm:$0xff]
  %v271 = vld [vmem:[%s10 + $0x40] sm:$0xff]
  %v272 = vld [vmem:[%s10 + $0x48] sm:$0xff]
  %v273 = vld [vmem:[%s10 + $0x50] sm:$0xff]
  %v274 = vld [vmem:[%s10 + $0x58] sm:$0xff]
  %v275 = vld [vmem:[%s10 + $0x60] sm:$0xff]
  %v276 = vld [vmem:[%s10 + $0x68] sm:$0xff]
  %v277 = vld [vmem:[%s10 + $0x70] sm:$0xff]
  %v278 = vld [vmem:[%s10 + $0x78] sm:$0xff]
  %v279 = vadd.f32 %v231, 1e-05
  %v280 = vadd.f32 %v232, 1e-05
  %v281 = vadd.f32 %v233, 1e-05
  %v282 = vadd.f32 %v234, 1e-05
  %v283 = vadd.f32 %v235, 1e-05
  %v284 = vadd.f32 %v236, 1e-05
  %v285 = vadd.f32 %v237, 1e-05
  %v286 = vadd.f32 %v238, 1e-05
  %v287 = vadd.f32 %v239, 1e-05
  %v288 = vadd.f32 %v240, 1e-05
  %v289 = vadd.f32 %v241, 1e-05
  %v290 = vadd.f32 %v242, 1e-05
  %v291 = vadd.f32 %v243, 1e-05
  %v292 = vadd.f32 %v244, 1e-05
  %v293 = vadd.f32 %v245, 1e-05
  %v294 = vadd.f32 %v246, 1e-05
  %v295 = vrsqrt.pop %v279
  %v296 = vrsqrt.pop %v280
  %v297 = vrsqrt.pop %v281
  %v298 = vrsqrt.pop %v282
  %v299 = vrsqrt.pop %v283
  %v300 = vrsqrt.pop %v284
  %v301 = vrsqrt.pop %v285
  %v302 = vrsqrt.pop %v286
  %v303 = vrsqrt.pop %v287
  %v304 = vrsqrt.pop %v288
  %v305 = vrsqrt.pop %v289
  %v306 = vrsqrt.pop %v290
  %v307 = vrsqrt.pop %v291
  %v308 = vrsqrt.pop %v292
  %v309 = vrsqrt.pop %v293
  %v310 = vrsqrt.pop %v294
  %v311 = vmul.f32 %v295, %v247
  %v312 = vmul.f32 %v296, %v248
  %v313 = vmul.f32 %v297, %v249
  %v314 = vmul.f32 %v298, %v250
  %v315 = vmul.f32 %v299, %v251
  %v316 = vmul.f32 %v300, %v252
  %v317 = vmul.f32 %v301, %v253
  %v318 = vmul.f32 %v302, %v254
  %v319 = vmul.f32 %v303, %v255
  %v320 = vmul.f32 %v304, %v256
  %v321 = vmul.f32 %v305, %v257
  %v322 = vmul.f32 %v306, %v258
  %v323 = vmul.f32 %v307, %v259
  %v324 = vmul.f32 %v308, %v260
  %v325 = vmul.f32 %v309, %v261
  %v326 = vmul.f32 %v310, %v262
  %328 = vset.pattern.permute.xlu0 0
  %329 = vperm.xlu0 %328, %v311
  %v330 = vpop.permute.xlu0 %329
  %333 = vset.pattern.permute.xlu0 0
  %334 = vperm.xlu0 %333, %v312
  %v335 = vpop.permute.xlu0 %334
  %338 = vset.pattern.permute.xlu0 0
  %339 = vperm.xlu0 %338, %v313
  %v340 = vpop.permute.xlu0 %339
  %343 = vset.pattern.permute.xlu0 0
  %344 = vperm.xlu0 %343, %v314
  %v345 = vpop.permute.xlu0 %344
  %348 = vset.pattern.permute.xlu0 0
  %349 = vperm.xlu0 %348, %v315
  %v350 = vpop.permute.xlu0 %349
  %353 = vset.pattern.permute.xlu0 0
  %354 = vperm.xlu0 %353, %v316
  %v355 = vpop.permute.xlu0 %354
  %358 = vset.pattern.permute.xlu0 0
  %359 = vperm.xlu0 %358, %v317
  %v360 = vpop.permute.xlu0 %359
  %363 = vset.pattern.permute.xlu0 0
  %364 = vperm.xlu0 %363, %v318
  %v365 = vpop.permute.xlu0 %364
  %368 = vset.pattern.permute.xlu0 0
  %369 = vperm.xlu0 %368, %v319
  %v370 = vpop.permute.xlu0 %369
  %373 = vset.pattern.permute.xlu0 0
  %374 = vperm.xlu0 %373, %v320
  %v375 = vpop.permute.xlu0 %374
  %378 = vset.pattern.permute.xlu0 0
  %379 = vperm.xlu0 %378, %v321
  %v380 = vpop.permute.xlu0 %379
  %383 = vset.pattern.permute.xlu0 0
  %384 = vperm.xlu0 %383, %v322
  %v385 = vpop.permute.xlu0 %384
  %388 = vset.pattern.permute.xlu0 0
  %389 = vperm.xlu0 %388, %v323
  %v390 = vpop.permute.xlu0 %389
  %393 = vset.pattern.permute.xlu0 0
  %394 = vperm.xlu0 %393, %v324
  %v395 = vpop.permute.xlu0 %394
  %398 = vset.pattern.permute.xlu0 0
  %399 = vperm.xlu0 %398, %v325
  %v400 = vpop.permute.xlu0 %399
  %403 = vset.pattern.permute.xlu0 0
  %404 = vperm.xlu0 %403, %v326
  %v405 = vpop.permute.xlu0 %404
  %v407 = vmul.f32 %v135, %v330
  %v408 = vmul.f32 %v136, %v335
  %v409 = vmul.f32 %v137, %v340
  %v410 = vmul.f32 %v138, %v345
  %v411 = vmul.f32 %v139, %v350
  %v412 = vmul.f32 %v140, %v355
  %v413 = vmul.f32 %v141, %v360
  %v414 = vmul.f32 %v142, %v365
  %v415 = vmul.f32 %v143, %v370
  %v416 = vmul.f32 %v144, %v375
  %v417 = vmul.f32 %v145, %v380
  %v418 = vmul.f32 %v146, %v385
  %v419 = vmul.f32 %v147, %v390
  %v420 = vmul.f32 %v148, %v395
  %v421 = vmul.f32 %v149, %v400
  %v422 = vmul.f32 %v150, %v405
  %424 = vset.pattern.permute.xlu0 0
  %425 = vperm.xlu0 %424, %v263
  %v426 = vpop.permute.xlu0 %425
  %429 = vset.pattern.permute.xlu0 0
  %430 = vperm.xlu0 %429, %v264
  %v431 = vpop.permute.xlu0 %430
  %434 = vset.pattern.permute.xlu0 0
  %435 = vperm.xlu0 %434, %v265
  %v436 = vpop.permute.xlu0 %435
  %439 = vset.pattern.permute.xlu0 0
  %440 = vperm.xlu0 %439, %v266
  %v441 = vpop.permute.xlu0 %440
  %444 = vset.pattern.permute.xlu0 0
  %445 = vperm.xlu0 %444, %v267
  %v446 = vpop.permute.xlu0 %445
  %449 = vset.pattern.permute.xlu0 0
  %450 = vperm.xlu0 %449, %v268
  %v451 = vpop.permute.xlu0 %450
  %454 = vset.pattern.permute.xlu0 0
  %455 = vperm.xlu0 %454, %v269
  %v456 = vpop.permute.xlu0 %455
  %459 = vset.pattern.permute.xlu0 0
  %460 = vperm.xlu0 %459, %v270
  %v461 = vpop.permute.xlu0 %460
  %464 = vset.pattern.permute.xlu0 0
  %465 = vperm.xlu0 %464, %v271
  %v466 = vpop.permute.xlu0 %465
  %469 = vset.pattern.permute.xlu0 0
  %470 = vperm.xlu0 %469, %v272
  %v471 = vpop.permute.xlu0 %470
  %474 = vset.pattern.permute.xlu0 0
  %475 = vperm.xlu0 %474, %v273
  %v476 = vpop.permute.xlu0 %475
  %479 = vset.pattern.permute.xlu0 0
  %480 = vperm.xlu0 %479, %v274
  %v481 = vpop.permute.xlu0 %480
  %484 = vset.pattern.permute.xlu0 0
  %485 = vperm.xlu0 %484, %v275
  %v486 = vpop.permute.xlu0 %485
  %489 = vset.pattern.permute.xlu0 0
  %490 = vperm.xlu0 %489, %v276
  %v491 = vpop.permute.xlu0 %490
  %494 = vset.pattern.permute.xlu0 0
  %495 = vperm.xlu0 %494, %v277
  %v496 = vpop.permute.xlu0 %495
  %499 = vset.pattern.permute.xlu0 0
  %500 = vperm.xlu0 %499, %v278
  %v501 = vpop.permute.xlu0 %500
  %v503 = vadd.f32 %v407, %v426
  %v504 = vadd.f32 %v408, %v431
  %v505 = vadd.f32 %v409, %v436
  %v506 = vadd.f32 %v410, %v441
  %v507 = vadd.f32 %v411, %v446
  %v508 = vadd.f32 %v412, %v451
  %v509 = vadd.f32 %v413, %v456
  %v510 = vadd.f32 %v414, %v461
  %v511 = vadd.f32 %v415, %v466
  %v512 = vadd.f32 %v416, %v471
  %v513 = vadd.f32 %v417, %v476
  %v514 = vadd.f32 %v418, %v481
  %v515 = vadd.f32 %v419, %v486
  %v516 = vadd.f32 %v420, %v491
  %v517 = vadd.f32 %v421, %v496
  %v518 = vadd.f32 %v422, %v501
  %519 = vst.msk [vmem:[%s11] sm:$0xff] %vm54, %v503
  %520 = vst.msk [vmem:[%s11 + $0x8] sm:$0xff] %vm54, %v504
  %521 = vst.msk [vmem:[%s11 + $0x10] sm:$0xff] %vm54, %v505
  %522 = vst.msk [vmem:[%s11 + $0x18] sm:$0xff] %vm54, %v506
  %523 = vst.msk [vmem:[%s11 + $0x20] sm:$0xff] %vm54, %v507
  %524 = vst.msk [vmem:[%s11 + $0x28] sm:$0xff] %vm54, %v508
  %525 = vst.msk [vmem:[%s11 + $0x30] sm:$0xff] %vm54, %v509
  %526 = vst.msk [vmem:[%s11 + $0x38] sm:$0xff] %vm54, %v510
  %527 = vst.msk [vmem:[%s11 + $0x40] sm:$0xff] %vm54, %v511
  %528 = vst.msk [vmem:[%s11 + $0x48] sm:$0xff] %vm54, %v512
  %529 = vst.msk [vmem:[%s11 + $0x50] sm:$0xff] %vm54, %v513
  %530 = vst.msk [vmem:[%s11 + $0x58] sm:$0xff] %vm54, %v514
  %531 = vst.msk [vmem:[%s11 + $0x60] sm:$0xff] %vm54, %v515
  %532 = vst.msk [vmem:[%s11 + $0x68] sm:$0xff] %vm54, %v516
  %533 = vst.msk [vmem:[%s11 + $0x70] sm:$0xff] %vm54, %v517
  %534 = vst.msk [vmem:[%s11 + $0x78] sm:$0xff] %vm54, %v518
  %v535 = vld [vmem:[%s0 + $0x80] sm:$0xff]
  %v536 = vld [vmem:[%s0 + $0x88] sm:$0xff]
  %v537 = vld [vmem:[%s0 + $0x90] sm:$0xff]
  %v538 = vld [vmem:[%s0 + $0x98] sm:$0xff]
  %v539 = vld [vmem:[%s0 + $0xa0] sm:$0xff]
  %v540 = vld [vmem:[%s0 + $0xa8] sm:$0xff]
  %v541 = vld [vmem:[%s0 + $0xb0] sm:$0xff]
  %v542 = vld [vmem:[%s0 + $0xb8] sm:$0xff]
  %v543 = vld [vmem:[%s0 + $0xc0] sm:$0xff]
  %v544 = vld [vmem:[%s0 + $0xc8] sm:$0xff]
  %v545 = vld [vmem:[%s0 + $0xd0] sm:$0xff]
  %v546 = vld [vmem:[%s0 + $0xd8] sm:$0xff]
  %v547 = vld [vmem:[%s0 + $0xe0] sm:$0xff]
  %v548 = vld [vmem:[%s0 + $0xe8] sm:$0xff]
  %v549 = vld [vmem:[%s0 + $0xf0] sm:$0xff]
  %v550 = vld [vmem:[%s0 + $0xf8] sm:$0xff]
  %v551 = vsel %vm54, %v535, 0.0
  %552 = vadd.xlane.f32.xlu0 %v551
  %v553 = vpop.xlane.xlu0 %552
  %v554 = vsel %vm54, %v536, 0.0
  %555 = vadd.xlane.f32.xlu0 %v554
  %v556 = vpop.xlane.xlu0 %555
  %v557 = vsel %vm54, %v537, 0.0
  %558 = vadd.xlane.f32.xlu0 %v557
  %v559 = vpop.xlane.xlu0 %558
  %v560 = vsel %vm54, %v538, 0.0
  %561 = vadd.xlane.f32.xlu0 %v560
  %v562 = vpop.xlane.xlu0 %561
  %v563 = vsel %vm54, %v539, 0.0
  %564 = vadd.xlane.f32.xlu0 %v563
  %v565 = vpop.xlane.xlu0 %564
  %v566 = vsel %vm54, %v540, 0.0
  %567 = vadd.xlane.f32.xlu0 %v566
  %v568 = vpop.xlane.xlu0 %567
  %v569 = vsel %vm54, %v541, 0.0
  %570 = vadd.xlane.f32.xlu0 %v569
  %v571 = vpop.xlane.xlu0 %570
  %v572 = vsel %vm54, %v542, 0.0
  %573 = vadd.xlane.f32.xlu0 %v572
  %v574 = vpop.xlane.xlu0 %573
  %v575 = vsel %vm54, %v543, 0.0
  %576 = vadd.xlane.f32.xlu0 %v575
  %v577 = vpop.xlane.xlu0 %576
  %v578 = vsel %vm54, %v544, 0.0
  %579 = vadd.xlane.f32.xlu0 %v578
  %v580 = vpop.xlane.xlu0 %579
  %v581 = vsel %vm54, %v545, 0.0
  %582 = vadd.xlane.f32.xlu0 %v581
  %v583 = vpop.xlane.xlu0 %582
  %v584 = vsel %vm54, %v546, 0.0
  %585 = vadd.xlane.f32.xlu0 %v584
  %v586 = vpop.xlane.xlu0 %585
  %v587 = vsel %vm54, %v547, 0.0
  %588 = vadd.xlane.f32.xlu0 %v587
  %v589 = vpop.xlane.xlu0 %588
  %v590 = vsel %vm54, %v548, 0.0
  %591 = vadd.xlane.f32.xlu0 %v590
  %v592 = vpop.xlane.xlu0 %591
  %v593 = vsel %vm54, %v549, 0.0
  %594 = vadd.xlane.f32.xlu0 %v593
  %v595 = vpop.xlane.xlu0 %594
  %v596 = vsel %vm54, %v550, 0.0
  %597 = vadd.xlane.f32.xlu0 %v596
  %v598 = vpop.xlane.xlu0 %597
  %v599 = vadd.f32 %v553, 0.0
  %v600 = vadd.f32 %v556, 0.0
  %v601 = vadd.f32 %v559, 0.0
  %v602 = vadd.f32 %v562, 0.0
  %v603 = vadd.f32 %v565, 0.0
  %v604 = vadd.f32 %v568, 0.0
  %v605 = vadd.f32 %v571, 0.0
  %v606 = vadd.f32 %v574, 0.0
  %v607 = vadd.f32 %v577, 0.0
  %v608 = vadd.f32 %v580, 0.0
  %v609 = vadd.f32 %v583, 0.0
  %v610 = vadd.f32 %v586, 0.0
  %v611 = vadd.f32 %v589, 0.0
  %v612 = vadd.f32 %v592, 0.0
  %v613 = vadd.f32 %v595, 0.0
  %v614 = vadd.f32 %v598, 0.0
  %v615 = vmul.f32 %v599, 0.020408163
  %v616 = vmul.f32 %v600, 0.020408163
  %v617 = vmul.f32 %v601, 0.020408163
  %v618 = vmul.f32 %v602, 0.020408163
  %v619 = vmul.f32 %v603, 0.020408163
  %v620 = vmul.f32 %v604, 0.020408163
  %v621 = vmul.f32 %v605, 0.020408163
  %v622 = vmul.f32 %v606, 0.020408163
  %v623 = vmul.f32 %v607, 0.020408163
  %v624 = vmul.f32 %v608, 0.020408163
  %v625 = vmul.f32 %v609, 0.020408163
  %v626 = vmul.f32 %v610, 0.020408163
  %v627 = vmul.f32 %v611, 0.020408163
  %v628 = vmul.f32 %v612, 0.020408163
  %v629 = vmul.f32 %v613, 0.020408163
  %v630 = vmul.f32 %v614, 0.020408163
  %v631 = vsub.f32 %v535, %v615
  %v632 = vsub.f32 %v536, %v616
  %v633 = vsub.f32 %v537, %v617
  %v634 = vsub.f32 %v538, %v618
  %v635 = vsub.f32 %v539, %v619
  %v636 = vsub.f32 %v540, %v620
  %v637 = vsub.f32 %v541, %v621
  %v638 = vsub.f32 %v542, %v622
  %v639 = vsub.f32 %v543, %v623
  %v640 = vsub.f32 %v544, %v624
  %v641 = vsub.f32 %v545, %v625
  %v642 = vsub.f32 %v546, %v626
  %v643 = vsub.f32 %v547, %v627
  %v644 = vsub.f32 %v548, %v628
  %v645 = vsub.f32 %v549, %v629
  %v646 = vsub.f32 %v550, %v630
  %v647 = vmul.f32 %v631, %v631
  %v648 = vmul.f32 %v632, %v632
  %v649 = vmul.f32 %v633, %v633
  %v650 = vmul.f32 %v634, %v634
  %v651 = vmul.f32 %v635, %v635
  %v652 = vmul.f32 %v636, %v636
  %v653 = vmul.f32 %v637, %v637
  %v654 = vmul.f32 %v638, %v638
  %v655 = vmul.f32 %v639, %v639
  %v656 = vmul.f32 %v640, %v640
  %v657 = vmul.f32 %v641, %v641
  %v658 = vmul.f32 %v642, %v642
  %v659 = vmul.f32 %v643, %v643
  %v660 = vmul.f32 %v644, %v644
  %v661 = vmul.f32 %v645, %v645
  %v662 = vmul.f32 %v646, %v646
  %v663 = vsel %vm54, %v647, 0.0
  %664 = vadd.xlane.f32.xlu0 %v663
  %v665 = vpop.xlane.xlu0 %664
  %v666 = vsel %vm54, %v648, 0.0
  %667 = vadd.xlane.f32.xlu0 %v666
  %v668 = vpop.xlane.xlu0 %667
  %v669 = vsel %vm54, %v649, 0.0
  %670 = vadd.xlane.f32.xlu0 %v669
  %v671 = vpop.xlane.xlu0 %670
  %v672 = vsel %vm54, %v650, 0.0
  %673 = vadd.xlane.f32.xlu0 %v672
  %v674 = vpop.xlane.xlu0 %673
  %v675 = vsel %vm54, %v651, 0.0
  %676 = vadd.xlane.f32.xlu0 %v675
  %v677 = vpop.xlane.xlu0 %676
  %v678 = vsel %vm54, %v652, 0.0
  %679 = vadd.xlane.f32.xlu0 %v678
  %v680 = vpop.xlane.xlu0 %679
  %v681 = vsel %vm54, %v653, 0.0
  %682 = vadd.xlane.f32.xlu0 %v681
  %v683 = vpop.xlane.xlu0 %682
  %v684 = vsel %vm54, %v654, 0.0
  %685 = vadd.xlane.f32.xlu0 %v684
  %v686 = vpop.xlane.xlu0 %685
  %v687 = vsel %vm54, %v655, 0.0
  %688 = vadd.xlane.f32.xlu0 %v687
  %v689 = vpop.xlane.xlu0 %688
  %v690 = vsel %vm54, %v656, 0.0
  %691 = vadd.xlane.f32.xlu0 %v690
  %v692 = vpop.xlane.xlu0 %691
  %v693 = vsel %vm54, %v657, 0.0
  %694 = vadd.xlane.f32.xlu0 %v693
  %v695 = vpop.xlane.xlu0 %694
  %v696 = vsel %vm54, %v658, 0.0
  %697 = vadd.xlane.f32.xlu0 %v696
  %v698 = vpop.xlane.xlu0 %697
  %v699 = vsel %vm54, %v659, 0.0
  %700 = vadd.xlane.f32.xlu0 %v699
  %v701 = vpop.xlane.xlu0 %700
  %v702 = vsel %vm54, %v660, 0.0
  %703 = vadd.xlane.f32.xlu0 %v702
  %v704 = vpop.xlane.xlu0 %703
  %v705 = vsel %vm54, %v661, 0.0
  %706 = vadd.xlane.f32.xlu0 %v705
  %v707 = vpop.xlane.xlu0 %706
  %v708 = vsel %vm54, %v662, 0.0
  %709 = vadd.xlane.f32.xlu0 %v708
  %v710 = vpop.xlane.xlu0 %709
  %v711 = vadd.f32 %v665, 0.0
  %v712 = vadd.f32 %v668, 0.0
  %v713 = vadd.f32 %v671, 0.0
  %v714 = vadd.f32 %v674, 0.0
  %v715 = vadd.f32 %v677, 0.0
  %v716 = vadd.f32 %v680, 0.0
  %v717 = vadd.f32 %v683, 0.0
  %v718 = vadd.f32 %v686, 0.0
  %v719 = vadd.f32 %v689, 0.0
  %v720 = vadd.f32 %v692, 0.0
  %v721 = vadd.f32 %v695, 0.0
  %v722 = vadd.f32 %v698, 0.0
  %v723 = vadd.f32 %v701, 0.0
  %v724 = vadd.f32 %v704, 0.0
  %v725 = vadd.f32 %v707, 0.0
  %v726 = vadd.f32 %v710, 0.0
  %v727 = vmul.f32 %v711, 0.020408163
  %v728 = vmul.f32 %v712, 0.020408163
  %v729 = vmul.f32 %v713, 0.020408163
  %v730 = vmul.f32 %v714, 0.020408163
  %v731 = vmul.f32 %v715, 0.020408163
  %v732 = vmul.f32 %v716, 0.020408163
  %v733 = vmul.f32 %v717, 0.020408163
  %v734 = vmul.f32 %v718, 0.020408163
  %v735 = vmul.f32 %v719, 0.020408163
  %v736 = vmul.f32 %v720, 0.020408163
  %v737 = vmul.f32 %v721, 0.020408163
  %v738 = vmul.f32 %v722, 0.020408163
  %v739 = vmul.f32 %v723, 0.020408163
  %v740 = vmul.f32 %v724, 0.020408163
  %v741 = vmul.f32 %v725, 0.020408163
  %v742 = vmul.f32 %v726, 0.020408163
  %v743 = vld [vmem:[%s9 + $0x80] sm:$0xff]
  %v744 = vld [vmem:[%s9 + $0x88] sm:$0xff]
  %v745 = vld [vmem:[%s9 + $0x90] sm:$0xff]
  %v746 = vld [vmem:[%s9 + $0x98] sm:$0xff]
  %v747 = vld [vmem:[%s9 + $0xa0] sm:$0xff]
  %v748 = vld [vmem:[%s9 + $0xa8] sm:$0xff]
  %v749 = vld [vmem:[%s9 + $0xb0] sm:$0xff]
  %v750 = vld [vmem:[%s9 + $0xb8] sm:$0xff]
  %v751 = vld [vmem:[%s9 + $0xc0] sm:$0xff]
  %v752 = vld [vmem:[%s9 + $0xc8] sm:$0xff]
  %v753 = vld [vmem:[%s9 + $0xd0] sm:$0xff]
  %v754 = vld [vmem:[%s9 + $0xd8] sm:$0xff]
  %v755 = vld [vmem:[%s9 + $0xe0] sm:$0xff]
  %v756 = vld [vmem:[%s9 + $0xe8] sm:$0xff]
  %v757 = vld [vmem:[%s9 + $0xf0] sm:$0xff]
  %v758 = vld [vmem:[%s9 + $0xf8] sm:$0xff]
  %v759 = vld [vmem:[%s10 + $0x80] sm:$0xff]
  %v760 = vld [vmem:[%s10 + $0x88] sm:$0xff]
  %v761 = vld [vmem:[%s10 + $0x90] sm:$0xff]
  %v762 = vld [vmem:[%s10 + $0x98] sm:$0xff]
  %v763 = vld [vmem:[%s10 + $0xa0] sm:$0xff]
  %v764 = vld [vmem:[%s10 + $0xa8] sm:$0xff]
  %v765 = vld [vmem:[%s10 + $0xb0] sm:$0xff]
  %v766 = vld [vmem:[%s10 + $0xb8] sm:$0xff]
  %v767 = vld [vmem:[%s10 + $0xc0] sm:$0xff]
  %v768 = vld [vmem:[%s10 + $0xc8] sm:$0xff]
  %v769 = vld [vmem:[%s10 + $0xd0] sm:$0xff]
  %v770 = vld [vmem:[%s10 + $0xd8] sm:$0xff]
  %v771 = vld [vmem:[%s10 + $0xe0] sm:$0xff]
  %v772 = vld [vmem:[%s10 + $0xe8] sm:$0xff]
  %v773 = vld [vmem:[%s10 + $0xf0] sm:$0xff]
  %v774 = vld [vmem:[%s10 + $0xf8] sm:$0xff]
  %v775 = vadd.f32 %v727, 1e-05
  %v776 = vadd.f32 %v728, 1e-05
  %v777 = vadd.f32 %v729, 1e-05
  %v778 = vadd.f32 %v730, 1e-05
  %v779 = vadd.f32 %v731, 1e-05
  %v780 = vadd.f32 %v732, 1e-05
  %v781 = vadd.f32 %v733, 1e-05
  %v782 = vadd.f32 %v734, 1e-05
  %v783 = vadd.f32 %v735, 1e-05
  %v784 = vadd.f32 %v736, 1e-05
  %v785 = vadd.f32 %v737, 1e-05
  %v786 = vadd.f32 %v738, 1e-05
  %v787 = vadd.f32 %v739, 1e-05
  %v788 = vadd.f32 %v740, 1e-05
  %v789 = vadd.f32 %v741, 1e-05
  %v790 = vadd.f32 %v742, 1e-05
  %v791 = vrsqrt.pop %v775
  %v792 = vrsqrt.pop %v776
  %v793 = vrsqrt.pop %v777
  %v794 = vrsqrt.pop %v778
  %v795 = vrsqrt.pop %v779
  %v796 = vrsqrt.pop %v780
  %v797 = vrsqrt.pop %v781
  %v798 = vrsqrt.pop %v782
  %v799 = vrsqrt.pop %v783
  %v800 = vrsqrt.pop %v784
  %v801 = vrsqrt.pop %v785
  %v802 = vrsqrt.pop %v786
  %v803 = vrsqrt.pop %v787
  %v804 = vrsqrt.pop %v788
  %v805 = vrsqrt.pop %v789
  %v806 = vrsqrt.pop %v790
  %v807 = vmul.f32 %v791, %v743
  %v808 = vmul.f32 %v792, %v744
  %v809 = vmul.f32 %v793, %v745
  %v810 = vmul.f32 %v794, %v746
  %v811 = vmul.f32 %v795, %v747
  %v812 = vmul.f32 %v796, %v748
  %v813 = vmul.f32 %v797, %v749
  %v814 = vmul.f32 %v798, %v750
  %v815 = vmul.f32 %v799, %v751
  %v816 = vmul.f32 %v800, %v752
  %v817 = vmul.f32 %v801, %v753
  %v818 = vmul.f32 %v802, %v754
  %v819 = vmul.f32 %v803, %v755
  %v820 = vmul.f32 %v804, %v756
  %v821 = vmul.f32 %v805, %v757
  %v822 = vmul.f32 %v806, %v758
  %824 = vset.pattern.permute.xlu0 0
  %825 = vperm.xlu0 %824, %v807
  %v826 = vpop.permute.xlu0 %825
  %829 = vset.pattern.permute.xlu0 0
  %830 = vperm.xlu0 %829, %v808
  %v831 = vpop.permute.xlu0 %830
  %834 = vset.pattern.permute.xlu0 0
  %835 = vperm.xlu0 %834, %v809
  %v836 = vpop.permute.xlu0 %835
  %839 = vset.pattern.permute.xlu0 0
  %840 = vperm.xlu0 %839, %v810
  %v841 = vpop.permute.xlu0 %840
  %844 = vset.pattern.permute.xlu0 0
  %845 = vperm.xlu0 %844, %v811
  %v846 = vpop.permute.xlu0 %845
  %849 = vset.pattern.permute.xlu0 0
  %850 = vperm.xlu0 %849, %v812
  %v851 = vpop.permute.xlu0 %850
  %854 = vset.pattern.permute.xlu0 0
  %855 = vperm.xlu0 %854, %v813
  %v856 = vpop.permute.xlu0 %855
  %859 = vset.pattern.permute.xlu0 0
  %860 = vperm.xlu0 %859, %v814
  %v861 = vpop.permute.xlu0 %860
  %864 = vset.pattern.permute.xlu0 0
  %865 = vperm.xlu0 %864, %v815
  %v866 = vpop.permute.xlu0 %865
  %869 = vset.pattern.permute.xlu0 0
  %870 = vperm.xlu0 %869, %v816
  %v871 = vpop.permute.xlu0 %870
  %874 = vset.pattern.permute.xlu0 0
  %875 = vperm.xlu0 %874, %v817
  %v876 = vpop.permute.xlu0 %875
  %879 = vset.pattern.permute.xlu0 0
  %880 = vperm.xlu0 %879, %v818
  %v881 = vpop.permute.xlu0 %880
  %884 = vset.pattern.permute.xlu0 0
  %885 = vperm.xlu0 %884, %v819
  %v886 = vpop.permute.xlu0 %885
  %889 = vset.pattern.permute.xlu0 0
  %890 = vperm.xlu0 %889, %v820
  %v891 = vpop.permute.xlu0 %890
  %894 = vset.pattern.permute.xlu0 0
  %895 = vperm.xlu0 %894, %v821
  %v896 = vpop.permute.xlu0 %895
  %899 = vset.pattern.permute.xlu0 0
  %900 = vperm.xlu0 %899, %v822
  %v901 = vpop.permute.xlu0 %900
  %v903 = vmul.f32 %v631, %v826
  %v904 = vmul.f32 %v632, %v831
  %v905 = vmul.f32 %v633, %v836
  %v906 = vmul.f32 %v634, %v841
  %v907 = vmul.f32 %v635, %v846
  %v908 = vmul.f32 %v636, %v851
  %v909 = vmul.f32 %v637, %v856
  %v910 = vmul.f32 %v638, %v861
  %v911 = vmul.f32 %v639, %v866
  %v912 = vmul.f32 %v640, %v871
  %v913 = vmul.f32 %v641, %v876
  %v914 = vmul.f32 %v642, %v881
  %v915 = vmul.f32 %v643, %v886
  %v916 = vmul.f32 %v644, %v891
  %v917 = vmul.f32 %v645, %v896
  %v918 = vmul.f32 %v646, %v901
  %920 = vset.pattern.permute.xlu0 0
  %921 = vperm.xlu0 %920, %v759
  %v922 = vpop.permute.xlu0 %921
  %925 = vset.pattern.permute.xlu0 0
  %926 = vperm.xlu0 %925, %v760
  %v927 = vpop.permute.xlu0 %926
  %930 = vset.pattern.permute.xlu0 0
  %931 = vperm.xlu0 %930, %v761
  %v932 = vpop.permute.xlu0 %931
  %935 = vset.pattern.permute.xlu0 0
  %936 = vperm.xlu0 %935, %v762
  %v937 = vpop.permute.xlu0 %936
  %940 = vset.pattern.permute.xlu0 0
  %941 = vperm.xlu0 %940, %v763
  %v942 = vpop.permute.xlu0 %941
  %945 = vset.pattern.permute.xlu0 0
  %946 = vperm.xlu0 %945, %v764
  %v947 = vpop.permute.xlu0 %946
  %950 = vset.pattern.permute.xlu0 0
  %951 = vperm.xlu0 %950, %v765
  %v952 = vpop.permute.xlu0 %951
  %955 = vset.pattern.permute.xlu0 0
  %956 = vperm.xlu0 %955, %v766
  %v957 = vpop.permute.xlu0 %956
  %960 = vset.pattern.permute.xlu0 0
  %961 = vperm.xlu0 %960, %v767
  %v962 = vpop.permute.xlu0 %961
  %965 = vset.pattern.permute.xlu0 0
  %966 = vperm.xlu0 %965, %v768
  %v967 = vpop.permute.xlu0 %966
  %970 = vset.pattern.permute.xlu0 0
  %971 = vperm.xlu0 %970, %v769
  %v972 = vpop.permute.xlu0 %971
  %975 = vset.pattern.permute.xlu0 0
  %976 = vperm.xlu0 %975, %v770
  %v977 = vpop.permute.xlu0 %976
  %980 = vset.pattern.permute.xlu0 0
  %981 = vperm.xlu0 %980, %v771
  %v982 = vpop.permute.xlu0 %981
  %985 = vset.pattern.permute.xlu0 0
  %986 = vperm.xlu0 %985, %v772
  %v987 = vpop.permute.xlu0 %986
  %990 = vset.pattern.permute.xlu0 0
  %991 = vperm.xlu0 %990, %v773
  %v992 = vpop.permute.xlu0 %991
  %995 = vset.pattern.permute.xlu0 0
  %996 = vperm.xlu0 %995, %v774
  %v997 = vpop.permute.xlu0 %996
  %v999 = vadd.f32 %v903, %v922
  %v1000 = vadd.f32 %v904, %v927
  %v1001 = vadd.f32 %v905, %v932
  %v1002 = vadd.f32 %v906, %v937
  %v1003 = vadd.f32 %v907, %v942
  %v1004 = vadd.f32 %v908, %v947
  %v1005 = vadd.f32 %v909, %v952
  %v1006 = vadd.f32 %v910, %v957
  %v1007 = vadd.f32 %v911, %v962
  %v1008 = vadd.f32 %v912, %v967
  %v1009 = vadd.f32 %v913, %v972
  %v1010 = vadd.f32 %v914, %v977
  %v1011 = vadd.f32 %v915, %v982
  %v1012 = vadd.f32 %v916, %v987
  %v1013 = vadd.f32 %v917, %v992
  %v1014 = vadd.f32 %v918, %v997
  %1015 = vst.msk [vmem:[%s11 + $0x80] sm:$0xff] %vm54, %v999
  %1016 = vst.msk [vmem:[%s11 + $0x88] sm:$0xff] %vm54, %v1000
  %1017 = vst.msk [vmem:[%s11 + $0x90] sm:$0xff] %vm54, %v1001
  %1018 = vst.msk [vmem:[%s11 + $0x98] sm:$0xff] %vm54, %v1002
  %1019 = vst.msk [vmem:[%s11 + $0xa0] sm:$0xff] %vm54, %v1003
  %1020 = vst.msk [vmem:[%s11 + $0xa8] sm:$0xff] %vm54, %v1004
  %1021 = vst.msk [vmem:[%s11 + $0xb0] sm:$0xff] %vm54, %v1005
  %1022 = vst.msk [vmem:[%s11 + $0xb8] sm:$0xff] %vm54, %v1006
  %1023 = vst.msk [vmem:[%s11 + $0xc0] sm:$0xff] %vm54, %v1007
  %1024 = vst.msk [vmem:[%s11 + $0xc8] sm:$0xff] %vm54, %v1008
  %1025 = vst.msk [vmem:[%s11 + $0xd0] sm:$0xff] %vm54, %v1009
  %1026 = vst.msk [vmem:[%s11 + $0xd8] sm:$0xff] %vm54, %v1010
  %1027 = vst.msk [vmem:[%s11 + $0xe0] sm:$0xff] %vm54, %v1011
  %1028 = vst.msk [vmem:[%s11 + $0xe8] sm:$0xff] %vm54, %v1012
  %1029 = vst.msk [vmem:[%s11 + $0xf0] sm:$0xff] %vm54, %v1013
  %1030 = vst.msk [vmem:[%s11 + $0xf8] sm:$0xff] %vm54, %v1014
  %v1031 = vld [vmem:[%s0 + $0x100] sm:$0xff]
  %v1032 = vld [vmem:[%s0 + $0x108] sm:$0xff]
  %v1033 = vld [vmem:[%s0 + $0x110] sm:$0xff]
  %v1034 = vld [vmem:[%s0 + $0x118] sm:$0xff]
  %v1035 = vld [vmem:[%s0 + $0x120] sm:$0xff]
  %v1036 = vld [vmem:[%s0 + $0x128] sm:$0xff]
  %v1037 = vld [vmem:[%s0 + $0x130] sm:$0xff]
  %v1038 = vld [vmem:[%s0 + $0x138] sm:$0xff]
  %v1039 = vld [vmem:[%s0 + $0x140] sm:$0xff]
  %v1040 = vld [vmem:[%s0 + $0x148] sm:$0xff]
  %v1041 = vld [vmem:[%s0 + $0x150] sm:$0xff]
  %v1042 = vld [vmem:[%s0 + $0x158] sm:$0xff]
  %v1043 = vld [vmem:[%s0 + $0x160] sm:$0xff]
  %v1044 = vld [vmem:[%s0 + $0x168] sm:$0xff]
  %v1045 = vld [vmem:[%s0 + $0x170] sm:$0xff]
  %v1046 = vld [vmem:[%s0 + $0x178] sm:$0xff]
  %v1047 = vsel %vm54, %v1031, 0.0
  %1048 = vadd.xlane.f32.xlu0 %v1047
  %v1049 = vpop.xlane.xlu0 %1048
  %v1050 = vsel %vm54, %v1032, 0.0
  %1051 = vadd.xlane.f32.xlu0 %v1050
  %v1052 = vpop.xlane.xlu0 %1051
  %v1053 = vsel %vm54, %v1033, 0.0
  %1054 = vadd.xlane.f32.xlu0 %v1053
  %v1055 = vpop.xlane.xlu0 %1054
  %v1056 = vsel %vm54, %v1034, 0.0
  %1057 = vadd.xlane.f32.xlu0 %v1056
  %v1058 = vpop.xlane.xlu0 %1057
  %v1059 = vsel %vm54, %v1035, 0.0
  %1060 = vadd.xlane.f32.xlu0 %v1059
  %v1061 = vpop.xlane.xlu0 %1060
  %v1062 = vsel %vm54, %v1036, 0.0
  %1063 = vadd.xlane.f32.xlu0 %v1062
  %v1064 = vpop.xlane.xlu0 %1063
  %v1065 = vsel %vm54, %v1037, 0.0
  %1066 = vadd.xlane.f32.xlu0 %v1065
  %v1067 = vpop.xlane.xlu0 %1066
  %v1068 = vsel %vm54, %v1038, 0.0
  %1069 = vadd.xlane.f32.xlu0 %v1068
  %v1070 = vpop.xlane.xlu0 %1069
  %v1071 = vsel %vm54, %v1039, 0.0
  %1072 = vadd.xlane.f32.xlu0 %v1071
  %v1073 = vpop.xlane.xlu0 %1072
  %v1074 = vsel %vm54, %v1040, 0.0
  %1075 = vadd.xlane.f32.xlu0 %v1074
  %v1076 = vpop.xlane.xlu0 %1075
  %v1077 = vsel %vm54, %v1041, 0.0
  %1078 = vadd.xlane.f32.xlu0 %v1077
  %v1079 = vpop.xlane.xlu0 %1078
  %v1080 = vsel %vm54, %v1042, 0.0
  %1081 = vadd.xlane.f32.xlu0 %v1080
  %v1082 = vpop.xlane.xlu0 %1081
  %v1083 = vsel %vm54, %v1043, 0.0
  %1084 = vadd.xlane.f32.xlu0 %v1083
  %v1085 = vpop.xlane.xlu0 %1084
  %v1086 = vsel %vm54, %v1044, 0.0
  %1087 = vadd.xlane.f32.xlu0 %v1086
  %v1088 = vpop.xlane.xlu0 %1087
  %v1089 = vsel %vm54, %v1045, 0.0
  %1090 = vadd.xlane.f32.xlu0 %v1089
  %v1091 = vpop.xlane.xlu0 %1090
  %v1092 = vsel %vm54, %v1046, 0.0
  %1093 = vadd.xlane.f32.xlu0 %v1092
  %v1094 = vpop.xlane.xlu0 %1093
  %v1095 = vadd.f32 %v1049, 0.0
  %v1096 = vadd.f32 %v1052, 0.0
  %v1097 = vadd.f32 %v1055, 0.0
  %v1098 = vadd.f32 %v1058, 0.0
  %v1099 = vadd.f32 %v1061, 0.0
  %v1100 = vadd.f32 %v1064, 0.0
  %v1101 = vadd.f32 %v1067, 0.0
  %v1102 = vadd.f32 %v1070, 0.0
  %v1103 = vadd.f32 %v1073, 0.0
  %v1104 = vadd.f32 %v1076, 0.0
  %v1105 = vadd.f32 %v1079, 0.0
  %v1106 = vadd.f32 %v1082, 0.0
  %v1107 = vadd.f32 %v1085, 0.0
  %v1108 = vadd.f32 %v1088, 0.0
  %v1109 = vadd.f32 %v1091, 0.0
  %v1110 = vadd.f32 %v1094, 0.0
  %v1111 = vmul.f32 %v1095, 0.020408163
  %v1112 = vmul.f32 %v1096, 0.020408163
  %v1113 = vmul.f32 %v1097, 0.020408163
  %v1114 = vmul.f32 %v1098, 0.020408163
  %v1115 = vmul.f32 %v1099, 0.020408163
  %v1116 = vmul.f32 %v1100, 0.020408163
  %v1117 = vmul.f32 %v1101, 0.020408163
  %v1118 = vmul.f32 %v1102, 0.020408163
  %v1119 = vmul.f32 %v1103, 0.020408163
  %v1120 = vmul.f32 %v1104, 0.020408163
  %v1121 = vmul.f32 %v1105, 0.020408163
  %v1122 = vmul.f32 %v1106, 0.020408163
  %v1123 = vmul.f32 %v1107, 0.020408163
  %v1124 = vmul.f32 %v1108, 0.020408163
  %v1125 = vmul.f32 %v1109, 0.020408163
  %v1126 = vmul.f32 %v1110, 0.020408163
  %v1127 = vsub.f32 %v1031, %v1111
  %v1128 = vsub.f32 %v1032, %v1112
  %v1129 = vsub.f32 %v1033, %v1113
  %v1130 = vsub.f32 %v1034, %v1114
  %v1131 = vsub.f32 %v1035, %v1115
  %v1132 = vsub.f32 %v1036, %v1116
  %v1133 = vsub.f32 %v1037, %v1117
  %v1134 = vsub.f32 %v1038, %v1118
  %v1135 = vsub.f32 %v1039, %v1119
  %v1136 = vsub.f32 %v1040, %v1120
  %v1137 = vsub.f32 %v1041, %v1121
  %v1138 = vsub.f32 %v1042, %v1122
  %v1139 = vsub.f32 %v1043, %v1123
  %v1140 = vsub.f32 %v1044, %v1124
  %v1141 = vsub.f32 %v1045, %v1125
  %v1142 = vsub.f32 %v1046, %v1126
  %v1143 = vmul.f32 %v1127, %v1127
  %v1144 = vmul.f32 %v1128, %v1128
  %v1145 = vmul.f32 %v1129, %v1129
  %v1146 = vmul.f32 %v1130, %v1130
  %v1147 = vmul.f32 %v1131, %v1131
  %v1148 = vmul.f32 %v1132, %v1132
  %v1149 = vmul.f32 %v1133, %v1133
  %v1150 = vmul.f32 %v1134, %v1134
  %v1151 = vmul.f32 %v1135, %v1135
  %v1152 = vmul.f32 %v1136, %v1136
  %v1153 = vmul.f32 %v1137, %v1137
  %v1154 = vmul.f32 %v1138, %v1138
  %v1155 = vmul.f32 %v1139, %v1139
  %v1156 = vmul.f32 %v1140, %v1140
  %v1157 = vmul.f32 %v1141, %v1141
  %v1158 = vmul.f32 %v1142, %v1142
  %v1159 = vsel %vm54, %v1143, 0.0
  %1160 = vadd.xlane.f32.xlu0 %v1159
  %v1161 = vpop.xlane.xlu0 %1160
  %v1162 = vsel %vm54, %v1144, 0.0
  %1163 = vadd.xlane.f32.xlu0 %v1162
  %v1164 = vpop.xlane.xlu0 %1163
  %v1165 = vsel %vm54, %v1145, 0.0
  %1166 = vadd.xlane.f32.xlu0 %v1165
  %v1167 = vpop.xlane.xlu0 %1166
  %v1168 = vsel %vm54, %v1146, 0.0
  %1169 = vadd.xlane.f32.xlu0 %v1168
  %v1170 = vpop.xlane.xlu0 %1169
  %v1171 = vsel %vm54, %v1147, 0.0
  %1172 = vadd.xlane.f32.xlu0 %v1171
  %v1173 = vpop.xlane.xlu0 %1172
  %v1174 = vsel %vm54, %v1148, 0.0
  %1175 = vadd.xlane.f32.xlu0 %v1174
  %v1176 = vpop.xlane.xlu0 %1175
  %v1177 = vsel %vm54, %v1149, 0.0
  %1178 = vadd.xlane.f32.xlu0 %v1177
  %v1179 = vpop.xlane.xlu0 %1178
  %v1180 = vsel %vm54, %v1150, 0.0
  %1181 = vadd.xlane.f32.xlu0 %v1180
  %v1182 = vpop.xlane.xlu0 %1181
  %v1183 = vsel %vm54, %v1151, 0.0
  %1184 = vadd.xlane.f32.xlu0 %v1183
  %v1185 = vpop.xlane.xlu0 %1184
  %v1186 = vsel %vm54, %v1152, 0.0
  %1187 = vadd.xlane.f32.xlu0 %v1186
  %v1188 = vpop.xlane.xlu0 %1187
  %v1189 = vsel %vm54, %v1153, 0.0
  %1190 = vadd.xlane.f32.xlu0 %v1189
  %v1191 = vpop.xlane.xlu0 %1190
  %v1192 = vsel %vm54, %v1154, 0.0
  %1193 = vadd.xlane.f32.xlu0 %v1192
  %v1194 = vpop.xlane.xlu0 %1193
  %v1195 = vsel %vm54, %v1155, 0.0
  %1196 = vadd.xlane.f32.xlu0 %v1195
  %v1197 = vpop.xlane.xlu0 %1196
  %v1198 = vsel %vm54, %v1156, 0.0
  %1199 = vadd.xlane.f32.xlu0 %v1198
  %v1200 = vpop.xlane.xlu0 %1199
  %v1201 = vsel %vm54, %v1157, 0.0
  %1202 = vadd.xlane.f32.xlu0 %v1201
  %v1203 = vpop.xlane.xlu0 %1202
  %v1204 = vsel %vm54, %v1158, 0.0
  %1205 = vadd.xlane.f32.xlu0 %v1204
  %v1206 = vpop.xlane.xlu0 %1205
  %v1207 = vadd.f32 %v1161, 0.0
  %v1208 = vadd.f32 %v1164, 0.0
  %v1209 = vadd.f32 %v1167, 0.0
  %v1210 = vadd.f32 %v1170, 0.0
  %v1211 = vadd.f32 %v1173, 0.0
  %v1212 = vadd.f32 %v1176, 0.0
  %v1213 = vadd.f32 %v1179, 0.0
  %v1214 = vadd.f32 %v1182, 0.0
  %v1215 = vadd.f32 %v1185, 0.0
  %v1216 = vadd.f32 %v1188, 0.0
  %v1217 = vadd.f32 %v1191, 0.0
  %v1218 = vadd.f32 %v1194, 0.0
  %v1219 = vadd.f32 %v1197, 0.0
  %v1220 = vadd.f32 %v1200, 0.0
  %v1221 = vadd.f32 %v1203, 0.0
  %v1222 = vadd.f32 %v1206, 0.0
  %v1223 = vmul.f32 %v1207, 0.020408163
  %v1224 = vmul.f32 %v1208, 0.020408163
  %v1225 = vmul.f32 %v1209, 0.020408163
  %v1226 = vmul.f32 %v1210, 0.020408163
  %v1227 = vmul.f32 %v1211, 0.020408163
  %v1228 = vmul.f32 %v1212, 0.020408163
  %v1229 = vmul.f32 %v1213, 0.020408163
  %v1230 = vmul.f32 %v1214, 0.020408163
  %v1231 = vmul.f32 %v1215, 0.020408163
  %v1232 = vmul.f32 %v1216, 0.020408163
  %v1233 = vmul.f32 %v1217, 0.020408163
  %v1234 = vmul.f32 %v1218, 0.020408163
  %v1235 = vmul.f32 %v1219, 0.020408163
  %v1236 = vmul.f32 %v1220, 0.020408163
  %v1237 = vmul.f32 %v1221, 0.020408163
  %v1238 = vmul.f32 %v1222, 0.020408163
  %v1239 = vld [vmem:[%s9 + $0x100] sm:$0xff]
  %v1240 = vld [vmem:[%s9 + $0x108] sm:$0xff]
  %v1241 = vld [vmem:[%s9 + $0x110] sm:$0xff]
  %v1242 = vld [vmem:[%s9 + $0x118] sm:$0xff]
  %v1243 = vld [vmem:[%s9 + $0x120] sm:$0xff]
  %v1244 = vld [vmem:[%s9 + $0x128] sm:$0xff]
  %v1245 = vld [vmem:[%s9 + $0x130] sm:$0xff]
  %v1246 = vld [vmem:[%s9 + $0x138] sm:$0xff]
  %v1247 = vld [vmem:[%s9 + $0x140] sm:$0xff]
  %v1248 = vld [vmem:[%s9 + $0x148] sm:$0xff]
  %v1249 = vld [vmem:[%s9 + $0x150] sm:$0xff]
  %v1250 = vld [vmem:[%s9 + $0x158] sm:$0xff]
  %v1251 = vld [vmem:[%s9 + $0x160] sm:$0xff]
  %v1252 = vld [vmem:[%s9 + $0x168] sm:$0xff]
  %v1253 = vld [vmem:[%s9 + $0x170] sm:$0xff]
  %v1254 = vld [vmem:[%s9 + $0x178] sm:$0xff]
  %v1255 = vld [vmem:[%s10 + $0x100] sm:$0xff]
  %v1256 = vld [vmem:[%s10 + $0x108] sm:$0xff]
  %v1257 = vld [vmem:[%s10 + $0x110] sm:$0xff]
  %v1258 = vld [vmem:[%s10 + $0x118] sm:$0xff]
  %v1259 = vld [vmem:[%s10 + $0x120] sm:$0xff]
  %v1260 = vld [vmem:[%s10 + $0x128] sm:$0xff]
  %v1261 = vld [vmem:[%s10 + $0x130] sm:$0xff]
  %v1262 = vld [vmem:[%s10 + $0x138] sm:$0xff]
  %v1263 = vld [vmem:[%s10 + $0x140] sm:$0xff]
  %v1264 = vld [vmem:[%s10 + $0x148] sm:$0xff]
  %v1265 = vld [vmem:[%s10 + $0x150] sm:$0xff]
  %v1266 = vld [vmem:[%s10 + $0x158] sm:$0xff]
  %v1267 = vld [vmem:[%s10 + $0x160] sm:$0xff]
  %v1268 = vld [vmem:[%s10 + $0x168] sm:$0xff]
  %v1269 = vld [vmem:[%s10 + $0x170] sm:$0xff]
  %v1270 = vld [vmem:[%s10 + $0x178] sm:$0xff]
  %v1271 = vadd.f32 %v1223, 1e-05
  %v1272 = vadd.f32 %v1224, 1e-05
  %v1273 = vadd.f32 %v1225, 1e-05
  %v1274 = vadd.f32 %v1226, 1e-05
  %v1275 = vadd.f32 %v1227, 1e-05
  %v1276 = vadd.f32 %v1228, 1e-05
  %v1277 = vadd.f32 %v1229, 1e-05
  %v1278 = vadd.f32 %v1230, 1e-05
  %v1279 = vadd.f32 %v1231, 1e-05
  %v1280 = vadd.f32 %v1232, 1e-05
  %v1281 = vadd.f32 %v1233, 1e-05
  %v1282 = vadd.f32 %v1234, 1e-05
  %v1283 = vadd.f32 %v1235, 1e-05
  %v1284 = vadd.f32 %v1236, 1e-05
  %v1285 = vadd.f32 %v1237, 1e-05
  %v1286 = vadd.f32 %v1238, 1e-05
  %v1287 = vrsqrt.pop %v1271
  %v1288 = vrsqrt.pop %v1272
  %v1289 = vrsqrt.pop %v1273
  %v1290 = vrsqrt.pop %v1274
  %v1291 = vrsqrt.pop %v1275
  %v1292 = vrsqrt.pop %v1276
  %v1293 = vrsqrt.pop %v1277
  %v1294 = vrsqrt.pop %v1278
  %v1295 = vrsqrt.pop %v1279
  %v1296 = vrsqrt.pop %v1280
  %v1297 = vrsqrt.pop %v1281
  %v1298 = vrsqrt.pop %v1282
  %v1299 = vrsqrt.pop %v1283
  %v1300 = vrsqrt.pop %v1284
  %v1301 = vrsqrt.pop %v1285
  %v1302 = vrsqrt.pop %v1286
  %v1303 = vmul.f32 %v1287, %v1239
  %v1304 = vmul.f32 %v1288, %v1240
  %v1305 = vmul.f32 %v1289, %v1241
  %v1306 = vmul.f32 %v1290, %v1242
  %v1307 = vmul.f32 %v1291, %v1243
  %v1308 = vmul.f32 %v1292, %v1244
  %v1309 = vmul.f32 %v1293, %v1245
  %v1310 = vmul.f32 %v1294, %v1246
  %v1311 = vmul.f32 %v1295, %v1247
  %v1312 = vmul.f32 %v1296, %v1248
  %v1313 = vmul.f32 %v1297, %v1249
  %v1314 = vmul.f32 %v1298, %v1250
  %v1315 = vmul.f32 %v1299, %v1251
  %v1316 = vmul.f32 %v1300, %v1252
  %v1317 = vmul.f32 %v1301, %v1253
  %v1318 = vmul.f32 %v1302, %v1254
  %1320 = vset.pattern.permute.xlu0 0
  %1321 = vperm.xlu0 %1320, %v1303
  %v1322 = vpop.permute.xlu0 %1321
  %1325 = vset.pattern.permute.xlu0 0
  %1326 = vperm.xlu0 %1325, %v1304
  %v1327 = vpop.permute.xlu0 %1326
  %1330 = vset.pattern.permute.xlu0 0
  %1331 = vperm.xlu0 %1330, %v1305
  %v1332 = vpop.permute.xlu0 %1331
  %1335 = vset.pattern.permute.xlu0 0
  %1336 = vperm.xlu0 %1335, %v1306
  %v1337 = vpop.permute.xlu0 %1336
  %1340 = vset.pattern.permute.xlu0 0
  %1341 = vperm.xlu0 %1340, %v1307
  %v1342 = vpop.permute.xlu0 %1341
  %1345 = vset.pattern.permute.xlu0 0
  %1346 = vperm.xlu0 %1345, %v1308
  %v1347 = vpop.permute.xlu0 %1346
  %1350 = vset.pattern.permute.xlu0 0
  %1351 = vperm.xlu0 %1350, %v1309
  %v1352 = vpop.permute.xlu0 %1351
  %1355 = vset.pattern.permute.xlu0 0
  %1356 = vperm.xlu0 %1355, %v1310
  %v1357 = vpop.permute.xlu0 %1356
  %1360 = vset.pattern.permute.xlu0 0
  %1361 = vperm.xlu0 %1360, %v1311
  %v1362 = vpop.permute.xlu0 %1361
  %1365 = vset.pattern.permute.xlu0 0
  %1366 = vperm.xlu0 %1365, %v1312
  %v1367 = vpop.permute.xlu0 %1366
  %1370 = vset.pattern.permute.xlu0 0
  %1371 = vperm.xlu0 %1370, %v1313
  %v1372 = vpop.permute.xlu0 %1371
  %1375 = vset.pattern.permute.xlu0 0
  %1376 = vperm.xlu0 %1375, %v1314
  %v1377 = vpop.permute.xlu0 %1376
  %1380 = vset.pattern.permute.xlu0 0
  %1381 = vperm.xlu0 %1380, %v1315
  %v1382 = vpop.permute.xlu0 %1381
  %1385 = vset.pattern.permute.xlu0 0
  %1386 = vperm.xlu0 %1385, %v1316
  %v1387 = vpop.permute.xlu0 %1386
  %1390 = vset.pattern.permute.xlu0 0
  %1391 = vperm.xlu0 %1390, %v1317
  %v1392 = vpop.permute.xlu0 %1391
  %1395 = vset.pattern.permute.xlu0 0
  %1396 = vperm.xlu0 %1395, %v1318
  %v1397 = vpop.permute.xlu0 %1396
  %v1399 = vmul.f32 %v1127, %v1322
  %v1400 = vmul.f32 %v1128, %v1327
  %v1401 = vmul.f32 %v1129, %v1332
  %v1402 = vmul.f32 %v1130, %v1337
  %v1403 = vmul.f32 %v1131, %v1342
  %v1404 = vmul.f32 %v1132, %v1347
  %v1405 = vmul.f32 %v1133, %v1352
  %v1406 = vmul.f32 %v1134, %v1357
  %v1407 = vmul.f32 %v1135, %v1362
  %v1408 = vmul.f32 %v1136, %v1367
  %v1409 = vmul.f32 %v1137, %v1372
  %v1410 = vmul.f32 %v1138, %v1377
  %v1411 = vmul.f32 %v1139, %v1382
  %v1412 = vmul.f32 %v1140, %v1387
  %v1413 = vmul.f32 %v1141, %v1392
  %v1414 = vmul.f32 %v1142, %v1397
  %1416 = vset.pattern.permute.xlu0 0
  %1417 = vperm.xlu0 %1416, %v1255
  %v1418 = vpop.permute.xlu0 %1417
  %1421 = vset.pattern.permute.xlu0 0
  %1422 = vperm.xlu0 %1421, %v1256
  %v1423 = vpop.permute.xlu0 %1422
  %1426 = vset.pattern.permute.xlu0 0
  %1427 = vperm.xlu0 %1426, %v1257
  %v1428 = vpop.permute.xlu0 %1427
  %1431 = vset.pattern.permute.xlu0 0
  %1432 = vperm.xlu0 %1431, %v1258
  %v1433 = vpop.permute.xlu0 %1432
  %1436 = vset.pattern.permute.xlu0 0
  %1437 = vperm.xlu0 %1436, %v1259
  %v1438 = vpop.permute.xlu0 %1437
  %1441 = vset.pattern.permute.xlu0 0
  %1442 = vperm.xlu0 %1441, %v1260
  %v1443 = vpop.permute.xlu0 %1442
  %1446 = vset.pattern.permute.xlu0 0
  %1447 = vperm.xlu0 %1446, %v1261
  %v1448 = vpop.permute.xlu0 %1447
  %1451 = vset.pattern.permute.xlu0 0
  %1452 = vperm.xlu0 %1451, %v1262
  %v1453 = vpop.permute.xlu0 %1452
  %1456 = vset.pattern.permute.xlu0 0
  %1457 = vperm.xlu0 %1456, %v1263
  %v1458 = vpop.permute.xlu0 %1457
  %1461 = vset.pattern.permute.xlu0 0
  %1462 = vperm.xlu0 %1461, %v1264
  %v1463 = vpop.permute.xlu0 %1462
  %1466 = vset.pattern.permute.xlu0 0
  %1467 = vperm.xlu0 %1466, %v1265
  %v1468 = vpop.permute.xlu0 %1467
  %1471 = vset.pattern.permute.xlu0 0
  %1472 = vperm.xlu0 %1471, %v1266
  %v1473 = vpop.permute.xlu0 %1472
  %1476 = vset.pattern.permute.xlu0 0
  %1477 = vperm.xlu0 %1476, %v1267
  %v1478 = vpop.permute.xlu0 %1477
  %1481 = vset.pattern.permute.xlu0 0
  %1482 = vperm.xlu0 %1481, %v1268
  %v1483 = vpop.permute.xlu0 %1482
  %1486 = vset.pattern.permute.xlu0 0
  %1487 = vperm.xlu0 %1486, %v1269
  %v1488 = vpop.permute.xlu0 %1487
  %1491 = vset.pattern.permute.xlu0 0
  %1492 = vperm.xlu0 %1491, %v1270
  %v1493 = vpop.permute.xlu0 %1492
  %v1495 = vadd.f32 %v1399, %v1418
  %v1496 = vadd.f32 %v1400, %v1423
  %v1497 = vadd.f32 %v1401, %v1428
  %v1498 = vadd.f32 %v1402, %v1433
  %v1499 = vadd.f32 %v1403, %v1438
  %v1500 = vadd.f32 %v1404, %v1443
  %v1501 = vadd.f32 %v1405, %v1448
  %v1502 = vadd.f32 %v1406, %v1453
  %v1503 = vadd.f32 %v1407, %v1458
  %v1504 = vadd.f32 %v1408, %v1463
  %v1505 = vadd.f32 %v1409, %v1468
  %v1506 = vadd.f32 %v1410, %v1473
  %v1507 = vadd.f32 %v1411, %v1478
  %v1508 = vadd.f32 %v1412, %v1483
  %v1509 = vadd.f32 %v1413, %v1488
  %v1510 = vadd.f32 %v1414, %v1493
  %1511 = vst.msk [vmem:[%s11 + $0x100] sm:$0xff] %vm54, %v1495
  %1512 = vst.msk [vmem:[%s11 + $0x108] sm:$0xff] %vm54, %v1496
  %1513 = vst.msk [vmem:[%s11 + $0x110] sm:$0xff] %vm54, %v1497
  %1514 = vst.msk [vmem:[%s11 + $0x118] sm:$0xff] %vm54, %v1498
  %1515 = vst.msk [vmem:[%s11 + $0x120] sm:$0xff] %vm54, %v1499
  %1516 = vst.msk [vmem:[%s11 + $0x128] sm:$0xff] %vm54, %v1500
  %1517 = vst.msk [vmem:[%s11 + $0x130] sm:$0xff] %vm54, %v1501
  %1518 = vst.msk [vmem:[%s11 + $0x138] sm:$0xff] %vm54, %v1502
  %1519 = vst.msk [vmem:[%s11 + $0x140] sm:$0xff] %vm54, %v1503
  %1520 = vst.msk [vmem:[%s11 + $0x148] sm:$0xff] %vm54, %v1504
  %1521 = vst.msk [vmem:[%s11 + $0x150] sm:$0xff] %vm54, %v1505
  %1522 = vst.msk [vmem:[%s11 + $0x158] sm:$0xff] %vm54, %v1506
  %1523 = vst.msk [vmem:[%s11 + $0x160] sm:$0xff] %vm54, %v1507
  %1524 = vst.msk [vmem:[%s11 + $0x168] sm:$0xff] %vm54, %v1508
  %1525 = vst.msk [vmem:[%s11 + $0x170] sm:$0xff] %vm54, %v1509
  %1526 = vst.msk [vmem:[%s11 + $0x178] sm:$0xff] %vm54, %v1510
  %v1527 = vld [vmem:[%s0 + $0x180] sm:$0xff]
  %v1528 = vld [vmem:[%s0 + $0x188] sm:$0xff]
  %v1529 = vld [vmem:[%s0 + $0x190] sm:$0xff]
  %v1530 = vld [vmem:[%s0 + $0x198] sm:$0xff]
  %v1531 = vld [vmem:[%s0 + $0x1a0] sm:$0xff]
  %v1532 = vld [vmem:[%s0 + $0x1a8] sm:$0xff]
  %v1533 = vld [vmem:[%s0 + $0x1b0] sm:$0xff]
  %v1534 = vld [vmem:[%s0 + $0x1b8] sm:$0xff]
  %v1535 = vld [vmem:[%s0 + $0x1c0] sm:$0xff]
  %v1536 = vld [vmem:[%s0 + $0x1c8] sm:$0xff]
  %v1537 = vld [vmem:[%s0 + $0x1d0] sm:$0xff]
  %v1538 = vld [vmem:[%s0 + $0x1d8] sm:$0xff]
  %v1539 = vld [vmem:[%s0 + $0x1e0] sm:$0xff]
  %v1540 = vld [vmem:[%s0 + $0x1e8] sm:$0xff]
  %v1541 = vld [vmem:[%s0 + $0x1f0] sm:$0xff]
  %v1542 = vld [vmem:[%s0 + $0x1f8] sm:$0xff]
  %v1543 = vsel %vm54, %v1527, 0.0
  %1544 = vadd.xlane.f32.xlu0 %v1543
  %v1545 = vpop.xlane.xlu0 %1544
  %v1546 = vsel %vm54, %v1528, 0.0
  %1547 = vadd.xlane.f32.xlu0 %v1546
  %v1548 = vpop.xlane.xlu0 %1547
  %v1549 = vsel %vm54, %v1529, 0.0
  %1550 = vadd.xlane.f32.xlu0 %v1549
  %v1551 = vpop.xlane.xlu0 %1550
  %v1552 = vsel %vm54, %v1530, 0.0
  %1553 = vadd.xlane.f32.xlu0 %v1552
  %v1554 = vpop.xlane.xlu0 %1553
  %v1555 = vsel %vm54, %v1531, 0.0
  %1556 = vadd.xlane.f32.xlu0 %v1555
  %v1557 = vpop.xlane.xlu0 %1556
  %v1558 = vsel %vm54, %v1532, 0.0
  %1559 = vadd.xlane.f32.xlu0 %v1558
  %v1560 = vpop.xlane.xlu0 %1559
  %v1561 = vsel %vm54, %v1533, 0.0
  %1562 = vadd.xlane.f32.xlu0 %v1561
  %v1563 = vpop.xlane.xlu0 %1562
  %v1564 = vsel %vm54, %v1534, 0.0
  %1565 = vadd.xlane.f32.xlu0 %v1564
  %v1566 = vpop.xlane.xlu0 %1565
  %v1567 = vsel %vm54, %v1535, 0.0
  %1568 = vadd.xlane.f32.xlu0 %v1567
  %v1569 = vpop.xlane.xlu0 %1568
  %v1570 = vsel %vm54, %v1536, 0.0
  %1571 = vadd.xlane.f32.xlu0 %v1570
  %v1572 = vpop.xlane.xlu0 %1571
  %v1573 = vsel %vm54, %v1537, 0.0
  %1574 = vadd.xlane.f32.xlu0 %v1573
  %v1575 = vpop.xlane.xlu0 %1574
  %v1576 = vsel %vm54, %v1538, 0.0
  %1577 = vadd.xlane.f32.xlu0 %v1576
  %v1578 = vpop.xlane.xlu0 %1577
  %v1579 = vsel %vm54, %v1539, 0.0
  %1580 = vadd.xlane.f32.xlu0 %v1579
  %v1581 = vpop.xlane.xlu0 %1580
  %v1582 = vsel %vm54, %v1540, 0.0
  %1583 = vadd.xlane.f32.xlu0 %v1582
  %v1584 = vpop.xlane.xlu0 %1583
  %v1585 = vsel %vm54, %v1541, 0.0
  %1586 = vadd.xlane.f32.xlu0 %v1585
  %v1587 = vpop.xlane.xlu0 %1586
  %v1588 = vsel %vm54, %v1542, 0.0
  %1589 = vadd.xlane.f32.xlu0 %v1588
  %v1590 = vpop.xlane.xlu0 %1589
  %v1591 = vadd.f32 %v1545, 0.0
  %v1592 = vadd.f32 %v1548, 0.0
  %v1593 = vadd.f32 %v1551, 0.0
  %v1594 = vadd.f32 %v1554, 0.0
  %v1595 = vadd.f32 %v1557, 0.0
  %v1596 = vadd.f32 %v1560, 0.0
  %v1597 = vadd.f32 %v1563, 0.0
  %v1598 = vadd.f32 %v1566, 0.0
  %v1599 = vadd.f32 %v1569, 0.0
  %v1600 = vadd.f32 %v1572, 0.0
  %v1601 = vadd.f32 %v1575, 0.0
  %v1602 = vadd.f32 %v1578, 0.0
  %v1603 = vadd.f32 %v1581, 0.0
  %v1604 = vadd.f32 %v1584, 0.0
  %v1605 = vadd.f32 %v1587, 0.0
  %v1606 = vadd.f32 %v1590, 0.0
  %v1607 = vmul.f32 %v1591, 0.020408163
  %v1608 = vmul.f32 %v1592, 0.020408163
  %v1609 = vmul.f32 %v1593, 0.020408163
  %v1610 = vmul.f32 %v1594, 0.020408163
  %v1611 = vmul.f32 %v1595, 0.020408163
  %v1612 = vmul.f32 %v1596, 0.020408163
  %v1613 = vmul.f32 %v1597, 0.020408163
  %v1614 = vmul.f32 %v1598, 0.020408163
  %v1615 = vmul.f32 %v1599, 0.020408163
  %v1616 = vmul.f32 %v1600, 0.020408163
  %v1617 = vmul.f32 %v1601, 0.020408163
  %v1618 = vmul.f32 %v1602, 0.020408163
  %v1619 = vmul.f32 %v1603, 0.020408163
  %v1620 = vmul.f32 %v1604, 0.020408163
  %v1621 = vmul.f32 %v1605, 0.020408163
  %v1622 = vmul.f32 %v1606, 0.020408163
  %v1623 = vsub.f32 %v1527, %v1607
  %v1624 = vsub.f32 %v1528, %v1608
  %v1625 = vsub.f32 %v1529, %v1609
  %v1626 = vsub.f32 %v1530, %v1610
  %v1627 = vsub.f32 %v1531, %v1611
  %v1628 = vsub.f32 %v1532, %v1612
  %v1629 = vsub.f32 %v1533, %v1613
  %v1630 = vsub.f32 %v1534, %v1614
  %v1631 = vsub.f32 %v1535, %v1615
  %v1632 = vsub.f32 %v1536, %v1616
  %v1633 = vsub.f32 %v1537, %v1617
  %v1634 = vsub.f32 %v1538, %v1618
  %v1635 = vsub.f32 %v1539, %v1619
  %v1636 = vsub.f32 %v1540, %v1620
  %v1637 = vsub.f32 %v1541, %v1621
  %v1638 = vsub.f32 %v1542, %v1622
  %v1639 = vmul.f32 %v1623, %v1623
  %v1640 = vmul.f32 %v1624, %v1624
  %v1641 = vmul.f32 %v1625, %v1625
  %v1642 = vmul.f32 %v1626, %v1626
  %v1643 = vmul.f32 %v1627, %v1627
  %v1644 = vmul.f32 %v1628, %v1628
  %v1645 = vmul.f32 %v1629, %v1629
  %v1646 = vmul.f32 %v1630, %v1630
  %v1647 = vmul.f32 %v1631, %v1631
  %v1648 = vmul.f32 %v1632, %v1632
  %v1649 = vmul.f32 %v1633, %v1633
  %v1650 = vmul.f32 %v1634, %v1634
  %v1651 = vmul.f32 %v1635, %v1635
  %v1652 = vmul.f32 %v1636, %v1636
  %v1653 = vmul.f32 %v1637, %v1637
  %v1654 = vmul.f32 %v1638, %v1638
  %v1655 = vsel %vm54, %v1639, 0.0
  %1656 = vadd.xlane.f32.xlu0 %v1655
  %v1657 = vpop.xlane.xlu0 %1656
  %v1658 = vsel %vm54, %v1640, 0.0
  %1659 = vadd.xlane.f32.xlu0 %v1658
  %v1660 = vpop.xlane.xlu0 %1659
  %v1661 = vsel %vm54, %v1641, 0.0
  %1662 = vadd.xlane.f32.xlu0 %v1661
  %v1663 = vpop.xlane.xlu0 %1662
  %v1664 = vsel %vm54, %v1642, 0.0
  %1665 = vadd.xlane.f32.xlu0 %v1664
  %v1666 = vpop.xlane.xlu0 %1665
  %v1667 = vsel %vm54, %v1643, 0.0
  %1668 = vadd.xlane.f32.xlu0 %v1667
  %v1669 = vpop.xlane.xlu0 %1668
  %v1670 = vsel %vm54, %v1644, 0.0
  %1671 = vadd.xlane.f32.xlu0 %v1670
  %v1672 = vpop.xlane.xlu0 %1671
  %v1673 = vsel %vm54, %v1645, 0.0
  %1674 = vadd.xlane.f32.xlu0 %v1673
  %v1675 = vpop.xlane.xlu0 %1674
  %v1676 = vsel %vm54, %v1646, 0.0
  %1677 = vadd.xlane.f32.xlu0 %v1676
  %v1678 = vpop.xlane.xlu0 %1677
  %v1679 = vsel %vm54, %v1647, 0.0
  %1680 = vadd.xlane.f32.xlu0 %v1679
  %v1681 = vpop.xlane.xlu0 %1680
  %v1682 = vsel %vm54, %v1648, 0.0
  %1683 = vadd.xlane.f32.xlu0 %v1682
  %v1684 = vpop.xlane.xlu0 %1683
  %v1685 = vsel %vm54, %v1649, 0.0
  %1686 = vadd.xlane.f32.xlu0 %v1685
  %v1687 = vpop.xlane.xlu0 %1686
  %v1688 = vsel %vm54, %v1650, 0.0
  %1689 = vadd.xlane.f32.xlu0 %v1688
  %v1690 = vpop.xlane.xlu0 %1689
  %v1691 = vsel %vm54, %v1651, 0.0
  %1692 = vadd.xlane.f32.xlu0 %v1691
  %v1693 = vpop.xlane.xlu0 %1692
  %v1694 = vsel %vm54, %v1652, 0.0
  %1695 = vadd.xlane.f32.xlu0 %v1694
  %v1696 = vpop.xlane.xlu0 %1695
  %v1697 = vsel %vm54, %v1653, 0.0
  %1698 = vadd.xlane.f32.xlu0 %v1697
  %v1699 = vpop.xlane.xlu0 %1698
  %v1700 = vsel %vm54, %v1654, 0.0
  %1701 = vadd.xlane.f32.xlu0 %v1700
  %v1702 = vpop.xlane.xlu0 %1701
  %v1703 = vadd.f32 %v1657, 0.0
  %v1704 = vadd.f32 %v1660, 0.0
  %v1705 = vadd.f32 %v1663, 0.0
  %v1706 = vadd.f32 %v1666, 0.0
  %v1707 = vadd.f32 %v1669, 0.0
  %v1708 = vadd.f32 %v1672, 0.0
  %v1709 = vadd.f32 %v1675, 0.0
  %v1710 = vadd.f32 %v1678, 0.0
  %v1711 = vadd.f32 %v1681, 0.0
  %v1712 = vadd.f32 %v1684, 0.0
  %v1713 = vadd.f32 %v1687, 0.0
  %v1714 = vadd.f32 %v1690, 0.0
  %v1715 = vadd.f32 %v1693, 0.0
  %v1716 = vadd.f32 %v1696, 0.0
  %v1717 = vadd.f32 %v1699, 0.0
  %v1718 = vadd.f32 %v1702, 0.0
  %v1719 = vmul.f32 %v1703, 0.020408163
  %v1720 = vmul.f32 %v1704, 0.020408163
  %v1721 = vmul.f32 %v1705, 0.020408163
  %v1722 = vmul.f32 %v1706, 0.020408163
  %v1723 = vmul.f32 %v1707, 0.020408163
  %v1724 = vmul.f32 %v1708, 0.020408163
  %v1725 = vmul.f32 %v1709, 0.020408163
  %v1726 = vmul.f32 %v1710, 0.020408163
  %v1727 = vmul.f32 %v1711, 0.020408163
  %v1728 = vmul.f32 %v1712, 0.020408163
  %v1729 = vmul.f32 %v1713, 0.020408163
  %v1730 = vmul.f32 %v1714, 0.020408163
  %v1731 = vmul.f32 %v1715, 0.020408163
  %v1732 = vmul.f32 %v1716, 0.020408163
  %v1733 = vmul.f32 %v1717, 0.020408163
  %v1734 = vmul.f32 %v1718, 0.020408163
  %v1735 = vld [vmem:[%s9 + $0x180] sm:$0xff]
  %v1736 = vld [vmem:[%s9 + $0x188] sm:$0xff]
  %v1737 = vld [vmem:[%s9 + $0x190] sm:$0xff]
  %v1738 = vld [vmem:[%s9 + $0x198] sm:$0xff]
  %v1739 = vld [vmem:[%s9 + $0x1a0] sm:$0xff]
  %v1740 = vld [vmem:[%s9 + $0x1a8] sm:$0xff]
  %v1741 = vld [vmem:[%s9 + $0x1b0] sm:$0xff]
  %v1742 = vld [vmem:[%s9 + $0x1b8] sm:$0xff]
  %v1743 = vld [vmem:[%s9 + $0x1c0] sm:$0xff]
  %v1744 = vld [vmem:[%s9 + $0x1c8] sm:$0xff]
  %v1745 = vld [vmem:[%s9 + $0x1d0] sm:$0xff]
  %v1746 = vld [vmem:[%s9 + $0x1d8] sm:$0xff]
  %v1747 = vld [vmem:[%s9 + $0x1e0] sm:$0xff]
  %v1748 = vld [vmem:[%s9 + $0x1e8] sm:$0xff]
  %v1749 = vld [vmem:[%s9 + $0x1f0] sm:$0xff]
  %v1750 = vld [vmem:[%s9 + $0x1f8] sm:$0xff]
  %v1751 = vld [vmem:[%s10 + $0x180] sm:$0xff]
  %v1752 = vld [vmem:[%s10 + $0x188] sm:$0xff]
  %v1753 = vld [vmem:[%s10 + $0x190] sm:$0xff]
  %v1754 = vld [vmem:[%s10 + $0x198] sm:$0xff]
  %v1755 = vld [vmem:[%s10 + $0x1a0] sm:$0xff]
  %v1756 = vld [vmem:[%s10 + $0x1a8] sm:$0xff]
  %v1757 = vld [vmem:[%s10 + $0x1b0] sm:$0xff]
  %v1758 = vld [vmem:[%s10 + $0x1b8] sm:$0xff]
  %v1759 = vld [vmem:[%s10 + $0x1c0] sm:$0xff]
  %v1760 = vld [vmem:[%s10 + $0x1c8] sm:$0xff]
  %v1761 = vld [vmem:[%s10 + $0x1d0] sm:$0xff]
  %v1762 = vld [vmem:[%s10 + $0x1d8] sm:$0xff]
  %v1763 = vld [vmem:[%s10 + $0x1e0] sm:$0xff]
  %v1764 = vld [vmem:[%s10 + $0x1e8] sm:$0xff]
  %v1765 = vld [vmem:[%s10 + $0x1f0] sm:$0xff]
  %v1766 = vld [vmem:[%s10 + $0x1f8] sm:$0xff]
  %v1767 = vadd.f32 %v1719, 1e-05
  %v1768 = vadd.f32 %v1720, 1e-05
  %v1769 = vadd.f32 %v1721, 1e-05
  %v1770 = vadd.f32 %v1722, 1e-05
  %v1771 = vadd.f32 %v1723, 1e-05
  %v1772 = vadd.f32 %v1724, 1e-05
  %v1773 = vadd.f32 %v1725, 1e-05
  %v1774 = vadd.f32 %v1726, 1e-05
  %v1775 = vadd.f32 %v1727, 1e-05
  %v1776 = vadd.f32 %v1728, 1e-05
  %v1777 = vadd.f32 %v1729, 1e-05
  %v1778 = vadd.f32 %v1730, 1e-05
  %v1779 = vadd.f32 %v1731, 1e-05
  %v1780 = vadd.f32 %v1732, 1e-05
  %v1781 = vadd.f32 %v1733, 1e-05
  %v1782 = vadd.f32 %v1734, 1e-05
  %v1783 = vrsqrt.pop %v1767
  %v1784 = vrsqrt.pop %v1768
  %v1785 = vrsqrt.pop %v1769
  %v1786 = vrsqrt.pop %v1770
  %v1787 = vrsqrt.pop %v1771
  %v1788 = vrsqrt.pop %v1772
  %v1789 = vrsqrt.pop %v1773
  %v1790 = vrsqrt.pop %v1774
  %v1791 = vrsqrt.pop %v1775
  %v1792 = vrsqrt.pop %v1776
  %v1793 = vrsqrt.pop %v1777
  %v1794 = vrsqrt.pop %v1778
  %v1795 = vrsqrt.pop %v1779
  %v1796 = vrsqrt.pop %v1780
  %v1797 = vrsqrt.pop %v1781
  %v1798 = vrsqrt.pop %v1782
  %v1799 = vmul.f32 %v1783, %v1735
  %v1800 = vmul.f32 %v1784, %v1736
  %v1801 = vmul.f32 %v1785, %v1737
  %v1802 = vmul.f32 %v1786, %v1738
  %v1803 = vmul.f32 %v1787, %v1739
  %v1804 = vmul.f32 %v1788, %v1740
  %v1805 = vmul.f32 %v1789, %v1741
  %v1806 = vmul.f32 %v1790, %v1742
  %v1807 = vmul.f32 %v1791, %v1743
  %v1808 = vmul.f32 %v1792, %v1744
  %v1809 = vmul.f32 %v1793, %v1745
  %v1810 = vmul.f32 %v1794, %v1746
  %v1811 = vmul.f32 %v1795, %v1747
  %v1812 = vmul.f32 %v1796, %v1748
  %v1813 = vmul.f32 %v1797, %v1749
  %v1814 = vmul.f32 %v1798, %v1750
  %1816 = vset.pattern.permute.xlu0 0
  %1817 = vperm.xlu0 %1816, %v1799
  %v1818 = vpop.permute.xlu0 %1817
  %1821 = vset.pattern.permute.xlu0 0
  %1822 = vperm.xlu0 %1821, %v1800
  %v1823 = vpop.permute.xlu0 %1822
  %1826 = vset.pattern.permute.xlu0 0
  %1827 = vperm.xlu0 %1826, %v1801
  %v1828 = vpop.permute.xlu0 %1827
  %1831 = vset.pattern.permute.xlu0 0
  %1832 = vperm.xlu0 %1831, %v1802
  %v1833 = vpop.permute.xlu0 %1832
  %1836 = vset.pattern.permute.xlu0 0
  %1837 = vperm.xlu0 %1836, %v1803
  %v1838 = vpop.permute.xlu0 %1837
  %1841 = vset.pattern.permute.xlu0 0
  %1842 = vperm.xlu0 %1841, %v1804
  %v1843 = vpop.permute.xlu0 %1842
  %1846 = vset.pattern.permute.xlu0 0
  %1847 = vperm.xlu0 %1846, %v1805
  %v1848 = vpop.permute.xlu0 %1847
  %1851 = vset.pattern.permute.xlu0 0
  %1852 = vperm.xlu0 %1851, %v1806
  %v1853 = vpop.permute.xlu0 %1852
  %1856 = vset.pattern.permute.xlu0 0
  %1857 = vperm.xlu0 %1856, %v1807
  %v1858 = vpop.permute.xlu0 %1857
  %1861 = vset.pattern.permute.xlu0 0
  %1862 = vperm.xlu0 %1861, %v1808
  %v1863 = vpop.permute.xlu0 %1862
  %1866 = vset.pattern.permute.xlu0 0
  %1867 = vperm.xlu0 %1866, %v1809
  %v1868 = vpop.permute.xlu0 %1867
  %1871 = vset.pattern.permute.xlu0 0
  %1872 = vperm.xlu0 %1871, %v1810
  %v1873 = vpop.permute.xlu0 %1872
  %1876 = vset.pattern.permute.xlu0 0
  %1877 = vperm.xlu0 %1876, %v1811
  %v1878 = vpop.permute.xlu0 %1877
  %1881 = vset.pattern.permute.xlu0 0
  %1882 = vperm.xlu0 %1881, %v1812
  %v1883 = vpop.permute.xlu0 %1882
  %1886 = vset.pattern.permute.xlu0 0
  %1887 = vperm.xlu0 %1886, %v1813
  %v1888 = vpop.permute.xlu0 %1887
  %1891 = vset.pattern.permute.xlu0 0
  %1892 = vperm.xlu0 %1891, %v1814
  %v1893 = vpop.permute.xlu0 %1892
  %v1895 = vmul.f32 %v1623, %v1818
  %v1896 = vmul.f32 %v1624, %v1823
  %v1897 = vmul.f32 %v1625, %v1828
  %v1898 = vmul.f32 %v1626, %v1833
  %v1899 = vmul.f32 %v1627, %v1838
  %v1900 = vmul.f32 %v1628, %v1843
  %v1901 = vmul.f32 %v1629, %v1848
  %v1902 = vmul.f32 %v1630, %v1853
  %v1903 = vmul.f32 %v1631, %v1858
  %v1904 = vmul.f32 %v1632, %v1863
  %v1905 = vmul.f32 %v1633, %v1868
  %v1906 = vmul.f32 %v1634, %v1873
  %v1907 = vmul.f32 %v1635, %v1878
  %v1908 = vmul.f32 %v1636, %v1883
  %v1909 = vmul.f32 %v1637, %v1888
  %v1910 = vmul.f32 %v1638, %v1893
  %1912 = vset.pattern.permute.xlu0 0
  %1913 = vperm.xlu0 %1912, %v1751
  %v1914 = vpop.permute.xlu0 %1913
  %1917 = vset.pattern.permute.xlu0 0
  %1918 = vperm.xlu0 %1917, %v1752
  %v1919 = vpop.permute.xlu0 %1918
  %1922 = vset.pattern.permute.xlu0 0
  %1923 = vperm.xlu0 %1922, %v1753
  %v1924 = vpop.permute.xlu0 %1923
  %1927 = vset.pattern.permute.xlu0 0
  %1928 = vperm.xlu0 %1927, %v1754
  %v1929 = vpop.permute.xlu0 %1928
  %1932 = vset.pattern.permute.xlu0 0
  %1933 = vperm.xlu0 %1932, %v1755
  %v1934 = vpop.permute.xlu0 %1933
  %1937 = vset.pattern.permute.xlu0 0
  %1938 = vperm.xlu0 %1937, %v1756
  %v1939 = vpop.permute.xlu0 %1938
  %1942 = vset.pattern.permute.xlu0 0
  %1943 = vperm.xlu0 %1942, %v1757
  %v1944 = vpop.permute.xlu0 %1943
  %1947 = vset.pattern.permute.xlu0 0
  %1948 = vperm.xlu0 %1947, %v1758
  %v1949 = vpop.permute.xlu0 %1948
  %1952 = vset.pattern.permute.xlu0 0
  %1953 = vperm.xlu0 %1952, %v1759
  %v1954 = vpop.permute.xlu0 %1953
  %1957 = vset.pattern.permute.xlu0 0
  %1958 = vperm.xlu0 %1957, %v1760
  %v1959 = vpop.permute.xlu0 %1958
  %1962 = vset.pattern.permute.xlu0 0
  %1963 = vperm.xlu0 %1962, %v1761
  %v1964 = vpop.permute.xlu0 %1963
  %1967 = vset.pattern.permute.xlu0 0
  %1968 = vperm.xlu0 %1967, %v1762
  %v1969 = vpop.permute.xlu0 %1968
  %1972 = vset.pattern.permute.xlu0 0
  %1973 = vperm.xlu0 %1972, %v1763
  %v1974 = vpop.permute.xlu0 %1973
  %1977 = vset.pattern.permute.xlu0 0
  %1978 = vperm.xlu0 %1977, %v1764
  %v1979 = vpop.permute.xlu0 %1978
  %1982 = vset.pattern.permute.xlu0 0
  %1983 = vperm.xlu0 %1982, %v1765
  %v1984 = vpop.permute.xlu0 %1983
  %1987 = vset.pattern.permute.xlu0 0
  %1988 = vperm.xlu0 %1987, %v1766
  %v1989 = vpop.permute.xlu0 %1988
  %v1991 = vadd.f32 %v1895, %v1914
  %v1992 = vadd.f32 %v1896, %v1919
  %v1993 = vadd.f32 %v1897, %v1924
  %v1994 = vadd.f32 %v1898, %v1929
  %v1995 = vadd.f32 %v1899, %v1934
  %v1996 = vadd.f32 %v1900, %v1939
  %v1997 = vadd.f32 %v1901, %v1944
  %v1998 = vadd.f32 %v1902, %v1949
  %v1999 = vadd.f32 %v1903, %v1954
  %v2000 = vadd.f32 %v1904, %v1959
  %v2001 = vadd.f32 %v1905, %v1964
  %v2002 = vadd.f32 %v1906, %v1969
  %v2003 = vadd.f32 %v1907, %v1974
  %v2004 = vadd.f32 %v1908, %v1979
  %v2005 = vadd.f32 %v1909, %v1984
  %v2006 = vadd.f32 %v1910, %v1989
  %2007 = vst.msk [vmem:[%s11 + $0x180] sm:$0xff] %vm54, %v1991
  %2008 = vst.msk [vmem:[%s11 + $0x188] sm:$0xff] %vm54, %v1992
  %2009 = vst.msk [vmem:[%s11 + $0x190] sm:$0xff] %vm54, %v1993
  %2010 = vst.msk [vmem:[%s11 + $0x198] sm:$0xff] %vm54, %v1994
  %2011 = vst.msk [vmem:[%s11 + $0x1a0] sm:$0xff] %vm54, %v1995
  %2012 = vst.msk [vmem:[%s11 + $0x1a8] sm:$0xff] %vm54, %v1996
  %2013 = vst.msk [vmem:[%s11 + $0x1b0] sm:$0xff] %vm54, %v1997
  %2014 = vst.msk [vmem:[%s11 + $0x1b8] sm:$0xff] %vm54, %v1998
  %2015 = vst.msk [vmem:[%s11 + $0x1c0] sm:$0xff] %vm54, %v1999
  %2016 = vst.msk [vmem:[%s11 + $0x1c8] sm:$0xff] %vm54, %v2000
  %2017 = vst.msk [vmem:[%s11 + $0x1d0] sm:$0xff] %vm54, %v2001
  %2018 = vst.msk [vmem:[%s11 + $0x1d8] sm:$0xff] %vm54, %v2002
  %2019 = vst.msk [vmem:[%s11 + $0x1e0] sm:$0xff] %vm54, %v2003
  %2020 = vst.msk [vmem:[%s11 + $0x1e8] sm:$0xff] %vm54, %v2004
  %2021 = vst.msk [vmem:[%s11 + $0x1f0] sm:$0xff] %vm54, %v2005
  %2022 = vst.msk [vmem:[%s11 + $0x1f8] sm:$0xff] %vm54, %v2006
  %v2023 = vld [vmem:[%s1] sm:$0xff]
  %v2024 = vld [vmem:[%s1 + $0x8] sm:$0xff]
  %v2025 = vld [vmem:[%s1 + $0x10] sm:$0xff]
  %v2026 = vld [vmem:[%s1 + $0x18] sm:$0xff]
  %v2027 = vsel %vm54, %v2023, 0.0
  %2028 = vadd.xlane.f32.xlu0 %v2027
  %v2029 = vpop.xlane.xlu0 %2028
  %v2030 = vsel %vm54, %v2024, 0.0
  %2031 = vadd.xlane.f32.xlu0 %v2030
  %v2032 = vpop.xlane.xlu0 %2031
  %v2033 = vsel %vm54, %v2025, 0.0
  %2034 = vadd.xlane.f32.xlu0 %v2033
  %v2035 = vpop.xlane.xlu0 %2034
  %v2036 = vsel %vm54, %v2026, 0.0
  %2037 = vadd.xlane.f32.xlu0 %v2036
  %v2038 = vpop.xlane.xlu0 %2037
  %v2039 = vadd.f32 %v2029, 0.0
  %v2040 = vadd.f32 %v2032, 0.0
  %v2041 = vadd.f32 %v2035, 0.0
  %v2042 = vadd.f32 %v2038, 0.0
  %v2043 = vmul.f32 %v2039, 0.020408163
  %v2044 = vmul.f32 %v2040, 0.020408163
  %v2045 = vmul.f32 %v2041, 0.020408163
  %v2046 = vmul.f32 %v2042, 0.020408163
  %v2047 = vsub.f32 %v2023, %v2043
  %v2048 = vsub.f32 %v2024, %v2044
  %v2049 = vsub.f32 %v2025, %v2045
  %v2050 = vsub.f32 %v2026, %v2046
  %v2051 = vmul.f32 %v2047, %v2047
  %v2052 = vmul.f32 %v2048, %v2048
  %v2053 = vmul.f32 %v2049, %v2049
  %v2054 = vmul.f32 %v2050, %v2050
  %v2055 = vsel %vm54, %v2051, 0.0
  %2056 = vadd.xlane.f32.xlu0 %v2055
  %v2057 = vpop.xlane.xlu0 %2056
  %v2058 = vsel %vm54, %v2052, 0.0
  %2059 = vadd.xlane.f32.xlu0 %v2058
  %v2060 = vpop.xlane.xlu0 %2059
  %v2061 = vsel %vm54, %v2053, 0.0
  %2062 = vadd.xlane.f32.xlu0 %v2061
  %v2063 = vpop.xlane.xlu0 %2062
  %v2064 = vsel %vm54, %v2054, 0.0
  %2065 = vadd.xlane.f32.xlu0 %v2064
  %v2066 = vpop.xlane.xlu0 %2065
  %v2067 = vadd.f32 %v2057, 0.0
  %v2068 = vadd.f32 %v2060, 0.0
  %v2069 = vadd.f32 %v2063, 0.0
  %v2070 = vadd.f32 %v2066, 0.0
  %v2071 = vmul.f32 %v2067, 0.020408163
  %v2072 = vmul.f32 %v2068, 0.020408163
  %v2073 = vmul.f32 %v2069, 0.020408163
  %v2074 = vmul.f32 %v2070, 0.020408163
  %v2075 = vld [vmem:[%s9 + $0x200] sm:$0xff]
  %v2076 = vld [vmem:[%s9 + $0x208] sm:$0xff]
  %v2077 = vld [vmem:[%s9 + $0x210] sm:$0xff]
  %v2078 = vld [vmem:[%s9 + $0x218] sm:$0xff]
  %v2079 = vld [vmem:[%s10 + $0x200] sm:$0xff]
  %v2080 = vld [vmem:[%s10 + $0x208] sm:$0xff]
  %v2081 = vld [vmem:[%s10 + $0x210] sm:$0xff]
  %v2082 = vld [vmem:[%s10 + $0x218] sm:$0xff]
  %v2083 = vadd.f32 %v2071, 1e-05
  %v2084 = vadd.f32 %v2072, 1e-05
  %v2085 = vadd.f32 %v2073, 1e-05
  %v2086 = vadd.f32 %v2074, 1e-05
  %v2087 = vrsqrt.pop %v2083
  %v2088 = vrsqrt.pop %v2084
  %v2089 = vrsqrt.pop %v2085
  %v2090 = vrsqrt.pop %v2086
  %v2091 = vmul.f32 %v2087, %v2075
  %v2092 = vmul.f32 %v2088, %v2076
  %v2093 = vmul.f32 %v2089, %v2077
  %v2094 = vmul.f32 %v2090, %v2078
  %2096 = vset.pattern.permute.xlu0 0
  %2097 = vperm.xlu0 %2096, %v2091
  %v2098 = vpop.permute.xlu0 %2097
  %2101 = vset.pattern.permute.xlu0 0
  %2102 = vperm.xlu0 %2101, %v2092
  %v2103 = vpop.permute.xlu0 %2102
  %2106 = vset.pattern.permute.xlu0 0
  %2107 = vperm.xlu0 %2106, %v2093
  %v2108 = vpop.permute.xlu0 %2107
  %2111 = vset.pattern.permute.xlu0 0
  %2112 = vperm.xlu0 %2111, %v2094
  %v2113 = vpop.permute.xlu0 %2112
  %v2115 = vmul.f32 %v2047, %v2098
  %v2116 = vmul.f32 %v2048, %v2103
  %v2117 = vmul.f32 %v2049, %v2108
  %v2118 = vmul.f32 %v2050, %v2113
  %2120 = vset.pattern.permute.xlu0 0
  %2121 = vperm.xlu0 %2120, %v2079
  %v2122 = vpop.permute.xlu0 %2121
  %2125 = vset.pattern.permute.xlu0 0
  %2126 = vperm.xlu0 %2125, %v2080
  %v2127 = vpop.permute.xlu0 %2126
  %2130 = vset.pattern.permute.xlu0 0
  %2131 = vperm.xlu0 %2130, %v2081
  %v2132 = vpop.permute.xlu0 %2131
  %2135 = vset.pattern.permute.xlu0 0
  %2136 = vperm.xlu0 %2135, %v2082
  %v2137 = vpop.permute.xlu0 %2136
  %v2139 = vadd.f32 %v2115, %v2122
  %v2140 = vadd.f32 %v2116, %v2127
  %v2141 = vadd.f32 %v2117, %v2132
  %v2142 = vadd.f32 %v2118, %v2137
  %2143 = vst.msk [vmem:[%s11 + $0x200] sm:$0xff] %vm54, %v2139
  %2144 = vst.msk [vmem:[%s11 + $0x208] sm:$0xff] %vm54, %v2140
  %2145 = vst.msk [vmem:[%s11 + $0x210] sm:$0xff] %vm54, %v2141
  %2146 = vst.msk [vmem:[%s11 + $0x218] sm:$0xff] %vm54, %v2142
  %v2147 = vld [vmem:[%s2] sm:$0xff]
  %v2148 = vld [vmem:[%s2 + $0x8] sm:$0xff]
  %v2149 = vld [vmem:[%s2 + $0x10] sm:$0xff]
  %v2150 = vld [vmem:[%s2 + $0x18] sm:$0xff]
  %v2151 = vsel %vm54, %v2147, 0.0
  %2152 = vadd.xlane.f32.xlu0 %v2151
  %v2153 = vpop.xlane.xlu0 %2152
  %v2154 = vsel %vm54, %v2148, 0.0
  %2155 = vadd.xlane.f32.xlu0 %v2154
  %v2156 = vpop.xlane.xlu0 %2155
  %v2157 = vsel %vm54, %v2149, 0.0
  %2158 = vadd.xlane.f32.xlu0 %v2157
  %v2159 = vpop.xlane.xlu0 %2158
  %v2160 = vsel %vm54, %v2150, 0.0
  %2161 = vadd.xlane.f32.xlu0 %v2160
  %v2162 = vpop.xlane.xlu0 %2161
  %v2163 = vadd.f32 %v2153, 0.0
  %v2164 = vadd.f32 %v2156, 0.0
  %v2165 = vadd.f32 %v2159, 0.0
  %v2166 = vadd.f32 %v2162, 0.0
  %v2167 = vmul.f32 %v2163, 0.020408163
  %v2168 = vmul.f32 %v2164, 0.020408163
  %v2169 = vmul.f32 %v2165, 0.020408163
  %v2170 = vmul.f32 %v2166, 0.020408163
  %v2171 = vsub.f32 %v2147, %v2167
  %v2172 = vsub.f32 %v2148, %v2168
  %v2173 = vsub.f32 %v2149, %v2169
  %v2174 = vsub.f32 %v2150, %v2170
  %v2175 = vmul.f32 %v2171, %v2171
  %v2176 = vmul.f32 %v2172, %v2172
  %v2177 = vmul.f32 %v2173, %v2173
  %v2178 = vmul.f32 %v2174, %v2174
  %v2179 = vsel %vm54, %v2175, 0.0
  %2180 = vadd.xlane.f32.xlu0 %v2179
  %v2181 = vpop.xlane.xlu0 %2180
  %v2182 = vsel %vm54, %v2176, 0.0
  %2183 = vadd.xlane.f32.xlu0 %v2182
  %v2184 = vpop.xlane.xlu0 %2183
  %v2185 = vsel %vm54, %v2177, 0.0
  %2186 = vadd.xlane.f32.xlu0 %v2185
  %v2187 = vpop.xlane.xlu0 %2186
  %v2188 = vsel %vm54, %v2178, 0.0
  %2189 = vadd.xlane.f32.xlu0 %v2188
  %v2190 = vpop.xlane.xlu0 %2189
  %v2191 = vadd.f32 %v2181, 0.0
  %v2192 = vadd.f32 %v2184, 0.0
  %v2193 = vadd.f32 %v2187, 0.0
  %v2194 = vadd.f32 %v2190, 0.0
  %v2195 = vmul.f32 %v2191, 0.020408163
  %v2196 = vmul.f32 %v2192, 0.020408163
  %v2197 = vmul.f32 %v2193, 0.020408163
  %v2198 = vmul.f32 %v2194, 0.020408163
  %v2199 = vld [vmem:[%s9 + $0x220] sm:$0xff]
  %v2200 = vld [vmem:[%s9 + $0x228] sm:$0xff]
  %v2201 = vld [vmem:[%s9 + $0x230] sm:$0xff]
  %v2202 = vld [vmem:[%s9 + $0x238] sm:$0xff]
  %v2203 = vld [vmem:[%s10 + $0x220] sm:$0xff]
  %v2204 = vld [vmem:[%s10 + $0x228] sm:$0xff]
  %v2205 = vld [vmem:[%s10 + $0x230] sm:$0xff]
  %v2206 = vld [vmem:[%s10 + $0x238] sm:$0xff]
  %v2207 = vadd.f32 %v2195, 1e-05
  %v2208 = vadd.f32 %v2196, 1e-05
  %v2209 = vadd.f32 %v2197, 1e-05
  %v2210 = vadd.f32 %v2198, 1e-05
  %v2211 = vrsqrt.pop %v2207
  %v2212 = vrsqrt.pop %v2208
  %v2213 = vrsqrt.pop %v2209
  %v2214 = vrsqrt.pop %v2210
  %v2215 = vmul.f32 %v2211, %v2199
  %v2216 = vmul.f32 %v2212, %v2200
  %v2217 = vmul.f32 %v2213, %v2201
  %v2218 = vmul.f32 %v2214, %v2202
  %2220 = vset.pattern.permute.xlu0 0
  %2221 = vperm.xlu0 %2220, %v2215
  %v2222 = vpop.permute.xlu0 %2221
  %2225 = vset.pattern.permute.xlu0 0
  %2226 = vperm.xlu0 %2225, %v2216
  %v2227 = vpop.permute.xlu0 %2226
  %2230 = vset.pattern.permute.xlu0 0
  %2231 = vperm.xlu0 %2230, %v2217
  %v2232 = vpop.permute.xlu0 %2231
  %2235 = vset.pattern.permute.xlu0 0
  %2236 = vperm.xlu0 %2235, %v2218
  %v2237 = vpop.permute.xlu0 %2236
  %v2239 = vmul.f32 %v2171, %v2222
  %v2240 = vmul.f32 %v2172, %v2227
  %v2241 = vmul.f32 %v2173, %v2232
  %v2242 = vmul.f32 %v2174, %v2237
  %2244 = vset.pattern.permute.xlu0 0
  %2245 = vperm.xlu0 %2244, %v2203
  %v2246 = vpop.permute.xlu0 %2245
  %2249 = vset.pattern.permute.xlu0 0
  %2250 = vperm.xlu0 %2249, %v2204
  %v2251 = vpop.permute.xlu0 %2250
  %2254 = vset.pattern.permute.xlu0 0
  %2255 = vperm.xlu0 %2254, %v2205
  %v2256 = vpop.permute.xlu0 %2255
  %2259 = vset.pattern.permute.xlu0 0
  %2260 = vperm.xlu0 %2259, %v2206
  %v2261 = vpop.permute.xlu0 %2260
  %v2263 = vadd.f32 %v2239, %v2246
  %v2264 = vadd.f32 %v2240, %v2251
  %v2265 = vadd.f32 %v2241, %v2256
  %v2266 = vadd.f32 %v2242, %v2261
  %2267 = vst.msk [vmem:[%s11 + $0x220] sm:$0xff] %vm54, %v2263
  %2268 = vst.msk [vmem:[%s11 + $0x228] sm:$0xff] %vm54, %v2264
  %2269 = vst.msk [vmem:[%s11 + $0x230] sm:$0xff] %vm54, %v2265
  %2270 = vst.msk [vmem:[%s11 + $0x238] sm:$0xff] %vm54, %v2266
  %v2271 = vld [vmem:[%s3] sm:$0xff]
  %v2272 = vld [vmem:[%s3 + $0x8] sm:$0xff]
  %v2273 = vld [vmem:[%s3 + $0x10] sm:$0xff]
  %v2274 = vld [vmem:[%s3 + $0x18] sm:$0xff]
  %v2275 = vsel %vm54, %v2271, 0.0
  %2276 = vadd.xlane.f32.xlu0 %v2275
  %v2277 = vpop.xlane.xlu0 %2276
  %v2278 = vsel %vm54, %v2272, 0.0
  %2279 = vadd.xlane.f32.xlu0 %v2278
  %v2280 = vpop.xlane.xlu0 %2279
  %v2281 = vsel %vm54, %v2273, 0.0
  %2282 = vadd.xlane.f32.xlu0 %v2281
  %v2283 = vpop.xlane.xlu0 %2282
  %v2284 = vsel %vm54, %v2274, 0.0
  %2285 = vadd.xlane.f32.xlu0 %v2284
  %v2286 = vpop.xlane.xlu0 %2285
  %v2287 = vadd.f32 %v2277, 0.0
  %v2288 = vadd.f32 %v2280, 0.0
  %v2289 = vadd.f32 %v2283, 0.0
  %v2290 = vadd.f32 %v2286, 0.0
  %v2291 = vmul.f32 %v2287, 0.020408163
  %v2292 = vmul.f32 %v2288, 0.020408163
  %v2293 = vmul.f32 %v2289, 0.020408163
  %v2294 = vmul.f32 %v2290, 0.020408163
  %v2295 = vsub.f32 %v2271, %v2291
  %v2296 = vsub.f32 %v2272, %v2292
  %v2297 = vsub.f32 %v2273, %v2293
  %v2298 = vsub.f32 %v2274, %v2294
  %v2299 = vmul.f32 %v2295, %v2295
  %v2300 = vmul.f32 %v2296, %v2296
  %v2301 = vmul.f32 %v2297, %v2297
  %v2302 = vmul.f32 %v2298, %v2298
  %v2303 = vsel %vm54, %v2299, 0.0
  %2304 = vadd.xlane.f32.xlu0 %v2303
  %v2305 = vpop.xlane.xlu0 %2304
  %v2306 = vsel %vm54, %v2300, 0.0
  %2307 = vadd.xlane.f32.xlu0 %v2306
  %v2308 = vpop.xlane.xlu0 %2307
  %v2309 = vsel %vm54, %v2301, 0.0
  %2310 = vadd.xlane.f32.xlu0 %v2309
  %v2311 = vpop.xlane.xlu0 %2310
  %v2312 = vsel %vm54, %v2302, 0.0
  %2313 = vadd.xlane.f32.xlu0 %v2312
  %v2314 = vpop.xlane.xlu0 %2313
  %v2315 = vadd.f32 %v2305, 0.0
  %v2316 = vadd.f32 %v2308, 0.0
  %v2317 = vadd.f32 %v2311, 0.0
  %v2318 = vadd.f32 %v2314, 0.0
  %v2319 = vmul.f32 %v2315, 0.020408163
  %v2320 = vmul.f32 %v2316, 0.020408163
  %v2321 = vmul.f32 %v2317, 0.020408163
  %v2322 = vmul.f32 %v2318, 0.020408163
  %v2323 = vld [vmem:[%s9 + $0x240] sm:$0xff]
  %v2324 = vld [vmem:[%s9 + $0x248] sm:$0xff]
  %v2325 = vld [vmem:[%s9 + $0x250] sm:$0xff]
  %v2326 = vld [vmem:[%s9 + $0x258] sm:$0xff]
  %v2327 = vld [vmem:[%s10 + $0x240] sm:$0xff]
  %v2328 = vld [vmem:[%s10 + $0x248] sm:$0xff]
  %v2329 = vld [vmem:[%s10 + $0x250] sm:$0xff]
  %v2330 = vld [vmem:[%s10 + $0x258] sm:$0xff]
  %v2331 = vadd.f32 %v2319, 1e-05
  %v2332 = vadd.f32 %v2320, 1e-05
  %v2333 = vadd.f32 %v2321, 1e-05
  %v2334 = vadd.f32 %v2322, 1e-05
  %v2335 = vrsqrt.pop %v2331
  %v2336 = vrsqrt.pop %v2332
  %v2337 = vrsqrt.pop %v2333
  %v2338 = vrsqrt.pop %v2334
  %v2339 = vmul.f32 %v2335, %v2323
  %v2340 = vmul.f32 %v2336, %v2324
  %v2341 = vmul.f32 %v2337, %v2325
  %v2342 = vmul.f32 %v2338, %v2326
  %2344 = vset.pattern.permute.xlu0 0
  %2345 = vperm.xlu0 %2344, %v2339
  %v2346 = vpop.permute.xlu0 %2345
  %2349 = vset.pattern.permute.xlu0 0
  %2350 = vperm.xlu0 %2349, %v2340
  %v2351 = vpop.permute.xlu0 %2350
  %2354 = vset.pattern.permute.xlu0 0
  %2355 = vperm.xlu0 %2354, %v2341
  %v2356 = vpop.permute.xlu0 %2355
  %2359 = vset.pattern.permute.xlu0 0
  %2360 = vperm.xlu0 %2359, %v2342
  %v2361 = vpop.permute.xlu0 %2360
  %v2363 = vmul.f32 %v2295, %v2346
  %v2364 = vmul.f32 %v2296, %v2351
  %v2365 = vmul.f32 %v2297, %v2356
  %v2366 = vmul.f32 %v2298, %v2361
  %2368 = vset.pattern.permute.xlu0 0
  %2369 = vperm.xlu0 %2368, %v2327
  %v2370 = vpop.permute.xlu0 %2369
  %2373 = vset.pattern.permute.xlu0 0
  %2374 = vperm.xlu0 %2373, %v2328
  %v2375 = vpop.permute.xlu0 %2374
  %2378 = vset.pattern.permute.xlu0 0
  %2379 = vperm.xlu0 %2378, %v2329
  %v2380 = vpop.permute.xlu0 %2379
  %2383 = vset.pattern.permute.xlu0 0
  %2384 = vperm.xlu0 %2383, %v2330
  %v2385 = vpop.permute.xlu0 %2384
  %v2387 = vadd.f32 %v2363, %v2370
  %v2388 = vadd.f32 %v2364, %v2375
  %v2389 = vadd.f32 %v2365, %v2380
  %v2390 = vadd.f32 %v2366, %v2385
  %2391 = vst.msk [vmem:[%s11 + $0x240] sm:$0xff] %vm54, %v2387
  %2392 = vst.msk [vmem:[%s11 + $0x248] sm:$0xff] %vm54, %v2388
  %2393 = vst.msk [vmem:[%s11 + $0x250] sm:$0xff] %vm54, %v2389
  %2394 = vst.msk [vmem:[%s11 + $0x258] sm:$0xff] %vm54, %v2390
  %v2395 = vld [vmem:[%s4] sm:$0xff]
  %v2396 = vld [vmem:[%s4 + $0x8] sm:$0xff]
  %v2397 = vld [vmem:[%s4 + $0x10] sm:$0xff]
  %v2398 = vld [vmem:[%s4 + $0x18] sm:$0xff]
  %v2399 = vsel %vm54, %v2395, 0.0
  %2400 = vadd.xlane.f32.xlu0 %v2399
  %v2401 = vpop.xlane.xlu0 %2400
  %v2402 = vsel %vm54, %v2396, 0.0
  %2403 = vadd.xlane.f32.xlu0 %v2402
  %v2404 = vpop.xlane.xlu0 %2403
  %v2405 = vsel %vm54, %v2397, 0.0
  %2406 = vadd.xlane.f32.xlu0 %v2405
  %v2407 = vpop.xlane.xlu0 %2406
  %v2408 = vsel %vm54, %v2398, 0.0
  %2409 = vadd.xlane.f32.xlu0 %v2408
  %v2410 = vpop.xlane.xlu0 %2409
  %v2411 = vadd.f32 %v2401, 0.0
  %v2412 = vadd.f32 %v2404, 0.0
  %v2413 = vadd.f32 %v2407, 0.0
  %v2414 = vadd.f32 %v2410, 0.0
  %v2415 = vmul.f32 %v2411, 0.020408163
  %v2416 = vmul.f32 %v2412, 0.020408163
  %v2417 = vmul.f32 %v2413, 0.020408163
  %v2418 = vmul.f32 %v2414, 0.020408163
  %v2419 = vsub.f32 %v2395, %v2415
  %v2420 = vsub.f32 %v2396, %v2416
  %v2421 = vsub.f32 %v2397, %v2417
  %v2422 = vsub.f32 %v2398, %v2418
  %v2423 = vmul.f32 %v2419, %v2419
  %v2424 = vmul.f32 %v2420, %v2420
  %v2425 = vmul.f32 %v2421, %v2421
  %v2426 = vmul.f32 %v2422, %v2422
  %v2427 = vsel %vm54, %v2423, 0.0
  %2428 = vadd.xlane.f32.xlu0 %v2427
  %v2429 = vpop.xlane.xlu0 %2428
  %v2430 = vsel %vm54, %v2424, 0.0
  %2431 = vadd.xlane.f32.xlu0 %v2430
  %v2432 = vpop.xlane.xlu0 %2431
  %v2433 = vsel %vm54, %v2425, 0.0
  %2434 = vadd.xlane.f32.xlu0 %v2433
  %v2435 = vpop.xlane.xlu0 %2434
  %v2436 = vsel %vm54, %v2426, 0.0
  %2437 = vadd.xlane.f32.xlu0 %v2436
  %v2438 = vpop.xlane.xlu0 %2437
  %v2439 = vadd.f32 %v2429, 0.0
  %v2440 = vadd.f32 %v2432, 0.0
  %v2441 = vadd.f32 %v2435, 0.0
  %v2442 = vadd.f32 %v2438, 0.0
  %v2443 = vmul.f32 %v2439, 0.020408163
  %v2444 = vmul.f32 %v2440, 0.020408163
  %v2445 = vmul.f32 %v2441, 0.020408163
  %v2446 = vmul.f32 %v2442, 0.020408163
  %v2447 = vld [vmem:[%s9 + $0x260] sm:$0xff]
  %v2448 = vld [vmem:[%s9 + $0x268] sm:$0xff]
  %v2449 = vld [vmem:[%s9 + $0x270] sm:$0xff]
  %v2450 = vld [vmem:[%s9 + $0x278] sm:$0xff]
  %v2451 = vld [vmem:[%s10 + $0x260] sm:$0xff]
  %v2452 = vld [vmem:[%s10 + $0x268] sm:$0xff]
  %v2453 = vld [vmem:[%s10 + $0x270] sm:$0xff]
  %v2454 = vld [vmem:[%s10 + $0x278] sm:$0xff]
  %v2455 = vadd.f32 %v2443, 1e-05
  %v2456 = vadd.f32 %v2444, 1e-05
  %v2457 = vadd.f32 %v2445, 1e-05
  %v2458 = vadd.f32 %v2446, 1e-05
  %v2459 = vrsqrt.pop %v2455
  %v2460 = vrsqrt.pop %v2456
  %v2461 = vrsqrt.pop %v2457
  %v2462 = vrsqrt.pop %v2458
  %v2463 = vmul.f32 %v2459, %v2447
  %v2464 = vmul.f32 %v2460, %v2448
  %v2465 = vmul.f32 %v2461, %v2449
  %v2466 = vmul.f32 %v2462, %v2450
  %2468 = vset.pattern.permute.xlu0 0
  %2469 = vperm.xlu0 %2468, %v2463
  %v2470 = vpop.permute.xlu0 %2469
  %2473 = vset.pattern.permute.xlu0 0
  %2474 = vperm.xlu0 %2473, %v2464
  %v2475 = vpop.permute.xlu0 %2474
  %2478 = vset.pattern.permute.xlu0 0
  %2479 = vperm.xlu0 %2478, %v2465
  %v2480 = vpop.permute.xlu0 %2479
  %2483 = vset.pattern.permute.xlu0 0
  %2484 = vperm.xlu0 %2483, %v2466
  %v2485 = vpop.permute.xlu0 %2484
  %v2487 = vmul.f32 %v2419, %v2470
  %v2488 = vmul.f32 %v2420, %v2475
  %v2489 = vmul.f32 %v2421, %v2480
  %v2490 = vmul.f32 %v2422, %v2485
  %2492 = vset.pattern.permute.xlu0 0
  %2493 = vperm.xlu0 %2492, %v2451
  %v2494 = vpop.permute.xlu0 %2493
  %2497 = vset.pattern.permute.xlu0 0
  %2498 = vperm.xlu0 %2497, %v2452
  %v2499 = vpop.permute.xlu0 %2498
  %2502 = vset.pattern.permute.xlu0 0
  %2503 = vperm.xlu0 %2502, %v2453
  %v2504 = vpop.permute.xlu0 %2503
  %2507 = vset.pattern.permute.xlu0 0
  %2508 = vperm.xlu0 %2507, %v2454
  %v2509 = vpop.permute.xlu0 %2508
  %v2511 = vadd.f32 %v2487, %v2494
  %v2512 = vadd.f32 %v2488, %v2499
  %v2513 = vadd.f32 %v2489, %v2504
  %v2514 = vadd.f32 %v2490, %v2509
  %2515 = vst.msk [vmem:[%s11 + $0x260] sm:$0xff] %vm54, %v2511
  %2516 = vst.msk [vmem:[%s11 + $0x268] sm:$0xff] %vm54, %v2512
  %2517 = vst.msk [vmem:[%s11 + $0x270] sm:$0xff] %vm54, %v2513
  %2518 = vst.msk [vmem:[%s11 + $0x278] sm:$0xff] %vm54, %v2514
  %v2519 = vld [vmem:[%s5] sm:$0xff]
  %v2520 = vld [vmem:[%s5 + $0x8] sm:$0xff]
  %v2521 = vld [vmem:[%s5 + $0x10] sm:$0xff]
  %v2522 = vld [vmem:[%s5 + $0x18] sm:$0xff]
  %v2523 = vsel %vm54, %v2519, 0.0
  %2524 = vadd.xlane.f32.xlu0 %v2523
  %v2525 = vpop.xlane.xlu0 %2524
  %v2526 = vsel %vm54, %v2520, 0.0
  %2527 = vadd.xlane.f32.xlu0 %v2526
  %v2528 = vpop.xlane.xlu0 %2527
  %v2529 = vsel %vm54, %v2521, 0.0
  %2530 = vadd.xlane.f32.xlu0 %v2529
  %v2531 = vpop.xlane.xlu0 %2530
  %v2532 = vsel %vm54, %v2522, 0.0
  %2533 = vadd.xlane.f32.xlu0 %v2532
  %v2534 = vpop.xlane.xlu0 %2533
  %v2535 = vadd.f32 %v2525, 0.0
  %v2536 = vadd.f32 %v2528, 0.0
  %v2537 = vadd.f32 %v2531, 0.0
  %v2538 = vadd.f32 %v2534, 0.0
  %v2539 = vmul.f32 %v2535, 0.020408163
  %v2540 = vmul.f32 %v2536, 0.020408163
  %v2541 = vmul.f32 %v2537, 0.020408163
  %v2542 = vmul.f32 %v2538, 0.020408163
  %v2543 = vsub.f32 %v2519, %v2539
  %v2544 = vsub.f32 %v2520, %v2540
  %v2545 = vsub.f32 %v2521, %v2541
  %v2546 = vsub.f32 %v2522, %v2542
  %v2547 = vmul.f32 %v2543, %v2543
  %v2548 = vmul.f32 %v2544, %v2544
  %v2549 = vmul.f32 %v2545, %v2545
  %v2550 = vmul.f32 %v2546, %v2546
  %v2551 = vsel %vm54, %v2547, 0.0
  %2552 = vadd.xlane.f32.xlu0 %v2551
  %v2553 = vpop.xlane.xlu0 %2552
  %v2554 = vsel %vm54, %v2548, 0.0
  %2555 = vadd.xlane.f32.xlu0 %v2554
  %v2556 = vpop.xlane.xlu0 %2555
  %v2557 = vsel %vm54, %v2549, 0.0
  %2558 = vadd.xlane.f32.xlu0 %v2557
  %v2559 = vpop.xlane.xlu0 %2558
  %v2560 = vsel %vm54, %v2550, 0.0
  %2561 = vadd.xlane.f32.xlu0 %v2560
  %v2562 = vpop.xlane.xlu0 %2561
  %v2563 = vadd.f32 %v2553, 0.0
  %v2564 = vadd.f32 %v2556, 0.0
  %v2565 = vadd.f32 %v2559, 0.0
  %v2566 = vadd.f32 %v2562, 0.0
  %v2567 = vmul.f32 %v2563, 0.020408163
  %v2568 = vmul.f32 %v2564, 0.020408163
  %v2569 = vmul.f32 %v2565, 0.020408163
  %v2570 = vmul.f32 %v2566, 0.020408163
  %v2571 = vld [vmem:[%s9 + $0x280] sm:$0xff]
  %v2572 = vld [vmem:[%s9 + $0x288] sm:$0xff]
  %v2573 = vld [vmem:[%s9 + $0x290] sm:$0xff]
  %v2574 = vld [vmem:[%s9 + $0x298] sm:$0xff]
  %v2575 = vld [vmem:[%s10 + $0x280] sm:$0xff]
  %v2576 = vld [vmem:[%s10 + $0x288] sm:$0xff]
  %v2577 = vld [vmem:[%s10 + $0x290] sm:$0xff]
  %v2578 = vld [vmem:[%s10 + $0x298] sm:$0xff]
  %v2579 = vadd.f32 %v2567, 1e-05
  %v2580 = vadd.f32 %v2568, 1e-05
  %v2581 = vadd.f32 %v2569, 1e-05
  %v2582 = vadd.f32 %v2570, 1e-05
  %v2583 = vrsqrt.pop %v2579
  %v2584 = vrsqrt.pop %v2580
  %v2585 = vrsqrt.pop %v2581
  %v2586 = vrsqrt.pop %v2582
  %v2587 = vmul.f32 %v2583, %v2571
  %v2588 = vmul.f32 %v2584, %v2572
  %v2589 = vmul.f32 %v2585, %v2573
  %v2590 = vmul.f32 %v2586, %v2574
  %2592 = vset.pattern.permute.xlu0 0
  %2593 = vperm.xlu0 %2592, %v2587
  %v2594 = vpop.permute.xlu0 %2593
  %2597 = vset.pattern.permute.xlu0 0
  %2598 = vperm.xlu0 %2597, %v2588
  %v2599 = vpop.permute.xlu0 %2598
  %2602 = vset.pattern.permute.xlu0 0
  %2603 = vperm.xlu0 %2602, %v2589
  %v2604 = vpop.permute.xlu0 %2603
  %2607 = vset.pattern.permute.xlu0 0
  %2608 = vperm.xlu0 %2607, %v2590
  %v2609 = vpop.permute.xlu0 %2608
  %v2611 = vmul.f32 %v2543, %v2594
  %v2612 = vmul.f32 %v2544, %v2599
  %v2613 = vmul.f32 %v2545, %v2604
  %v2614 = vmul.f32 %v2546, %v2609
  %2616 = vset.pattern.permute.xlu0 0
  %2617 = vperm.xlu0 %2616, %v2575
  %v2618 = vpop.permute.xlu0 %2617
  %2621 = vset.pattern.permute.xlu0 0
  %2622 = vperm.xlu0 %2621, %v2576
  %v2623 = vpop.permute.xlu0 %2622
  %2626 = vset.pattern.permute.xlu0 0
  %2627 = vperm.xlu0 %2626, %v2577
  %v2628 = vpop.permute.xlu0 %2627
  %2631 = vset.pattern.permute.xlu0 0
  %2632 = vperm.xlu0 %2631, %v2578
  %v2633 = vpop.permute.xlu0 %2632
  %v2635 = vadd.f32 %v2611, %v2618
  %v2636 = vadd.f32 %v2612, %v2623
  %v2637 = vadd.f32 %v2613, %v2628
  %v2638 = vadd.f32 %v2614, %v2633
  %2639 = vst.msk [vmem:[%s11 + $0x280] sm:$0xff] %vm54, %v2635
  %2640 = vst.msk [vmem:[%s11 + $0x288] sm:$0xff] %vm54, %v2636
  %2641 = vst.msk [vmem:[%s11 + $0x290] sm:$0xff] %vm54, %v2637
  %2642 = vst.msk [vmem:[%s11 + $0x298] sm:$0xff] %vm54, %v2638
  %v2643 = vld [vmem:[%s6] sm:$0xff]
  %v2644 = vld [vmem:[%s6 + $0x8] sm:$0xff]
  %v2645 = vld [vmem:[%s6 + $0x10] sm:$0xff]
  %v2646 = vld [vmem:[%s6 + $0x18] sm:$0xff]
  %v2647 = vsel %vm54, %v2643, 0.0
  %2648 = vadd.xlane.f32.xlu0 %v2647
  %v2649 = vpop.xlane.xlu0 %2648
  %v2650 = vsel %vm54, %v2644, 0.0
  %2651 = vadd.xlane.f32.xlu0 %v2650
  %v2652 = vpop.xlane.xlu0 %2651
  %v2653 = vsel %vm54, %v2645, 0.0
  %2654 = vadd.xlane.f32.xlu0 %v2653
  %v2655 = vpop.xlane.xlu0 %2654
  %v2656 = vsel %vm54, %v2646, 0.0
  %2657 = vadd.xlane.f32.xlu0 %v2656
  %v2658 = vpop.xlane.xlu0 %2657
  %v2659 = vadd.f32 %v2649, 0.0
  %v2660 = vadd.f32 %v2652, 0.0
  %v2661 = vadd.f32 %v2655, 0.0
  %v2662 = vadd.f32 %v2658, 0.0
  %v2663 = vmul.f32 %v2659, 0.020408163
  %v2664 = vmul.f32 %v2660, 0.020408163
  %v2665 = vmul.f32 %v2661, 0.020408163
  %v2666 = vmul.f32 %v2662, 0.020408163
  %v2667 = vsub.f32 %v2643, %v2663
  %v2668 = vsub.f32 %v2644, %v2664
  %v2669 = vsub.f32 %v2645, %v2665
  %v2670 = vsub.f32 %v2646, %v2666
  %v2671 = vmul.f32 %v2667, %v2667
  %v2672 = vmul.f32 %v2668, %v2668
  %v2673 = vmul.f32 %v2669, %v2669
  %v2674 = vmul.f32 %v2670, %v2670
  %v2675 = vsel %vm54, %v2671, 0.0
  %2676 = vadd.xlane.f32.xlu0 %v2675
  %v2677 = vpop.xlane.xlu0 %2676
  %v2678 = vsel %vm54, %v2672, 0.0
  %2679 = vadd.xlane.f32.xlu0 %v2678
  %v2680 = vpop.xlane.xlu0 %2679
  %v2681 = vsel %vm54, %v2673, 0.0
  %2682 = vadd.xlane.f32.xlu0 %v2681
  %v2683 = vpop.xlane.xlu0 %2682
  %v2684 = vsel %vm54, %v2674, 0.0
  %2685 = vadd.xlane.f32.xlu0 %v2684
  %v2686 = vpop.xlane.xlu0 %2685
  %v2687 = vadd.f32 %v2677, 0.0
  %v2688 = vadd.f32 %v2680, 0.0
  %v2689 = vadd.f32 %v2683, 0.0
  %v2690 = vadd.f32 %v2686, 0.0
  %v2691 = vmul.f32 %v2687, 0.020408163
  %v2692 = vmul.f32 %v2688, 0.020408163
  %v2693 = vmul.f32 %v2689, 0.020408163
  %v2694 = vmul.f32 %v2690, 0.020408163
  %v2695 = vld [vmem:[%s9 + $0x2a0] sm:$0xff]
  %v2696 = vld [vmem:[%s9 + $0x2a8] sm:$0xff]
  %v2697 = vld [vmem:[%s9 + $0x2b0] sm:$0xff]
  %v2698 = vld [vmem:[%s9 + $0x2b8] sm:$0xff]
  %v2699 = vld [vmem:[%s10 + $0x2a0] sm:$0xff]
  %v2700 = vld [vmem:[%s10 + $0x2a8] sm:$0xff]
  %v2701 = vld [vmem:[%s10 + $0x2b0] sm:$0xff]
  %v2702 = vld [vmem:[%s10 + $0x2b8] sm:$0xff]
  %v2703 = vadd.f32 %v2691, 1e-05
  %v2704 = vadd.f32 %v2692, 1e-05
  %v2705 = vadd.f32 %v2693, 1e-05
  %v2706 = vadd.f32 %v2694, 1e-05
  %v2707 = vrsqrt.pop %v2703
  %v2708 = vrsqrt.pop %v2704
  %v2709 = vrsqrt.pop %v2705
  %v2710 = vrsqrt.pop %v2706
  %v2711 = vmul.f32 %v2707, %v2695
  %v2712 = vmul.f32 %v2708, %v2696
  %v2713 = vmul.f32 %v2709, %v2697
  %v2714 = vmul.f32 %v2710, %v2698
  %2716 = vset.pattern.permute.xlu0 0
  %2717 = vperm.xlu0 %2716, %v2711
  %v2718 = vpop.permute.xlu0 %2717
  %2721 = vset.pattern.permute.xlu0 0
  %2722 = vperm.xlu0 %2721, %v2712
  %v2723 = vpop.permute.xlu0 %2722
  %2726 = vset.pattern.permute.xlu0 0
  %2727 = vperm.xlu0 %2726, %v2713
  %v2728 = vpop.permute.xlu0 %2727
  %2731 = vset.pattern.permute.xlu0 0
  %2732 = vperm.xlu0 %2731, %v2714
  %v2733 = vpop.permute.xlu0 %2732
  %v2735 = vmul.f32 %v2667, %v2718
  %v2736 = vmul.f32 %v2668, %v2723
  %v2737 = vmul.f32 %v2669, %v2728
  %v2738 = vmul.f32 %v2670, %v2733
  %2740 = vset.pattern.permute.xlu0 0
  %2741 = vperm.xlu0 %2740, %v2699
  %v2742 = vpop.permute.xlu0 %2741
  %2745 = vset.pattern.permute.xlu0 0
  %2746 = vperm.xlu0 %2745, %v2700
  %v2747 = vpop.permute.xlu0 %2746
  %2750 = vset.pattern.permute.xlu0 0
  %2751 = vperm.xlu0 %2750, %v2701
  %v2752 = vpop.permute.xlu0 %2751
  %2755 = vset.pattern.permute.xlu0 0
  %2756 = vperm.xlu0 %2755, %v2702
  %v2757 = vpop.permute.xlu0 %2756
  %v2759 = vadd.f32 %v2735, %v2742
  %v2760 = vadd.f32 %v2736, %v2747
  %v2761 = vadd.f32 %v2737, %v2752
  %v2762 = vadd.f32 %v2738, %v2757
  %2763 = vst.msk [vmem:[%s11 + $0x2a0] sm:$0xff] %vm54, %v2759
  %2764 = vst.msk [vmem:[%s11 + $0x2a8] sm:$0xff] %vm54, %v2760
  %2765 = vst.msk [vmem:[%s11 + $0x2b0] sm:$0xff] %vm54, %v2761
  %2766 = vst.msk [vmem:[%s11 + $0x2b8] sm:$0xff] %vm54, %v2762
  %v2767 = vld [vmem:[%s7] sm:$0xff]
  %v2768 = vld [vmem:[%s7 + $0x8] sm:$0xff]
  %v2769 = vld [vmem:[%s7 + $0x10] sm:$0xff]
  %v2770 = vld [vmem:[%s7 + $0x18] sm:$0xff]
  %v2771 = vsel %vm54, %v2767, 0.0
  %2772 = vadd.xlane.f32.xlu0 %v2771
  %v2773 = vpop.xlane.xlu0 %2772
  %v2774 = vsel %vm54, %v2768, 0.0
  %2775 = vadd.xlane.f32.xlu0 %v2774
  %v2776 = vpop.xlane.xlu0 %2775
  %v2777 = vsel %vm54, %v2769, 0.0
  %2778 = vadd.xlane.f32.xlu0 %v2777
  %v2779 = vpop.xlane.xlu0 %2778
  %v2780 = vsel %vm54, %v2770, 0.0
  %2781 = vadd.xlane.f32.xlu0 %v2780
  %v2782 = vpop.xlane.xlu0 %2781
  %v2783 = vadd.f32 %v2773, 0.0
  %v2784 = vadd.f32 %v2776, 0.0
  %v2785 = vadd.f32 %v2779, 0.0
  %v2786 = vadd.f32 %v2782, 0.0
  %v2787 = vmul.f32 %v2783, 0.020408163
  %v2788 = vmul.f32 %v2784, 0.020408163
  %v2789 = vmul.f32 %v2785, 0.020408163
  %v2790 = vmul.f32 %v2786, 0.020408163
  %v2791 = vsub.f32 %v2767, %v2787
  %v2792 = vsub.f32 %v2768, %v2788
  %v2793 = vsub.f32 %v2769, %v2789
  %v2794 = vsub.f32 %v2770, %v2790
  %v2795 = vmul.f32 %v2791, %v2791
  %v2796 = vmul.f32 %v2792, %v2792
  %v2797 = vmul.f32 %v2793, %v2793
  %v2798 = vmul.f32 %v2794, %v2794
  %v2799 = vsel %vm54, %v2795, 0.0
  %2800 = vadd.xlane.f32.xlu0 %v2799
  %v2801 = vpop.xlane.xlu0 %2800
  %v2802 = vsel %vm54, %v2796, 0.0
  %2803 = vadd.xlane.f32.xlu0 %v2802
  %v2804 = vpop.xlane.xlu0 %2803
  %v2805 = vsel %vm54, %v2797, 0.0
  %2806 = vadd.xlane.f32.xlu0 %v2805
  %v2807 = vpop.xlane.xlu0 %2806
  %v2808 = vsel %vm54, %v2798, 0.0
  %2809 = vadd.xlane.f32.xlu0 %v2808
  %v2810 = vpop.xlane.xlu0 %2809
  %v2811 = vadd.f32 %v2801, 0.0
  %v2812 = vadd.f32 %v2804, 0.0
  %v2813 = vadd.f32 %v2807, 0.0
  %v2814 = vadd.f32 %v2810, 0.0
  %v2815 = vmul.f32 %v2811, 0.020408163
  %v2816 = vmul.f32 %v2812, 0.020408163
  %v2817 = vmul.f32 %v2813, 0.020408163
  %v2818 = vmul.f32 %v2814, 0.020408163
  %v2819 = vld [vmem:[%s9 + $0x2c0] sm:$0xff]
  %v2820 = vld [vmem:[%s9 + $0x2c8] sm:$0xff]
  %v2821 = vld [vmem:[%s9 + $0x2d0] sm:$0xff]
  %v2822 = vld [vmem:[%s9 + $0x2d8] sm:$0xff]
  %v2823 = vld [vmem:[%s10 + $0x2c0] sm:$0xff]
  %v2824 = vld [vmem:[%s10 + $0x2c8] sm:$0xff]
  %v2825 = vld [vmem:[%s10 + $0x2d0] sm:$0xff]
  %v2826 = vld [vmem:[%s10 + $0x2d8] sm:$0xff]
  %v2827 = vadd.f32 %v2815, 1e-05
  %v2828 = vadd.f32 %v2816, 1e-05
  %v2829 = vadd.f32 %v2817, 1e-05
  %v2830 = vadd.f32 %v2818, 1e-05
  %v2831 = vrsqrt.pop %v2827
  %v2832 = vrsqrt.pop %v2828
  %v2833 = vrsqrt.pop %v2829
  %v2834 = vrsqrt.pop %v2830
  %v2835 = vmul.f32 %v2831, %v2819
  %v2836 = vmul.f32 %v2832, %v2820
  %v2837 = vmul.f32 %v2833, %v2821
  %v2838 = vmul.f32 %v2834, %v2822
  %2840 = vset.pattern.permute.xlu0 0
  %2841 = vperm.xlu0 %2840, %v2835
  %v2842 = vpop.permute.xlu0 %2841
  %2845 = vset.pattern.permute.xlu0 0
  %2846 = vperm.xlu0 %2845, %v2836
  %v2847 = vpop.permute.xlu0 %2846
  %2850 = vset.pattern.permute.xlu0 0
  %2851 = vperm.xlu0 %2850, %v2837
  %v2852 = vpop.permute.xlu0 %2851
  %2855 = vset.pattern.permute.xlu0 0
  %2856 = vperm.xlu0 %2855, %v2838
  %v2857 = vpop.permute.xlu0 %2856
  %v2859 = vmul.f32 %v2791, %v2842
  %v2860 = vmul.f32 %v2792, %v2847
  %v2861 = vmul.f32 %v2793, %v2852
  %v2862 = vmul.f32 %v2794, %v2857
  %2864 = vset.pattern.permute.xlu0 0
  %2865 = vperm.xlu0 %2864, %v2823
  %v2866 = vpop.permute.xlu0 %2865
  %2869 = vset.pattern.permute.xlu0 0
  %2870 = vperm.xlu0 %2869, %v2824
  %v2871 = vpop.permute.xlu0 %2870
  %2874 = vset.pattern.permute.xlu0 0
  %2875 = vperm.xlu0 %2874, %v2825
  %v2876 = vpop.permute.xlu0 %2875
  %2879 = vset.pattern.permute.xlu0 0
  %2880 = vperm.xlu0 %2879, %v2826
  %v2881 = vpop.permute.xlu0 %2880
  %v2883 = vadd.f32 %v2859, %v2866
  %v2884 = vadd.f32 %v2860, %v2871
  %v2885 = vadd.f32 %v2861, %v2876
  %v2886 = vadd.f32 %v2862, %v2881
  %2887 = vst.msk [vmem:[%s11 + $0x2c0] sm:$0xff] %vm54, %v2883
  %2888 = vst.msk [vmem:[%s11 + $0x2c8] sm:$0xff] %vm54, %v2884
  %2889 = vst.msk [vmem:[%s11 + $0x2d0] sm:$0xff] %vm54, %v2885
  %2890 = vst.msk [vmem:[%s11 + $0x2d8] sm:$0xff] %vm54, %v2886
  %v2891 = vld [vmem:[%s8] sm:$0xff]
  %v2892 = vld [vmem:[%s8 + $0x8] sm:$0xff]
  %v2893 = vld [vmem:[%s8 + $0x10] sm:$0xff]
  %v2894 = vld [vmem:[%s8 + $0x18] sm:$0xff]
  %v2895 = vsel %vm54, %v2891, 0.0
  %2896 = vadd.xlane.f32.xlu0 %v2895
  %v2897 = vpop.xlane.xlu0 %2896
  %v2898 = vsel %vm54, %v2892, 0.0
  %2899 = vadd.xlane.f32.xlu0 %v2898
  %v2900 = vpop.xlane.xlu0 %2899
  %v2901 = vsel %vm54, %v2893, 0.0
  %2902 = vadd.xlane.f32.xlu0 %v2901
  %v2903 = vpop.xlane.xlu0 %2902
  %v2904 = vsel %vm54, %v2894, 0.0
  %2905 = vadd.xlane.f32.xlu0 %v2904
  %v2906 = vpop.xlane.xlu0 %2905
  %v2907 = vadd.f32 %v2897, 0.0
  %v2908 = vadd.f32 %v2900, 0.0
  %v2909 = vadd.f32 %v2903, 0.0
  %v2910 = vadd.f32 %v2906, 0.0
  %v2911 = vmul.f32 %v2907, 0.020408163
  %v2912 = vmul.f32 %v2908, 0.020408163
  %v2913 = vmul.f32 %v2909, 0.020408163
  %v2914 = vmul.f32 %v2910, 0.020408163
  %v2915 = vsub.f32 %v2891, %v2911
  %v2916 = vsub.f32 %v2892, %v2912
  %v2917 = vsub.f32 %v2893, %v2913
  %v2918 = vsub.f32 %v2894, %v2914
  %v2919 = vmul.f32 %v2915, %v2915
  %v2920 = vmul.f32 %v2916, %v2916
  %v2921 = vmul.f32 %v2917, %v2917
  %v2922 = vmul.f32 %v2918, %v2918
  %v2923 = vsel %vm54, %v2919, 0.0
  %2924 = vadd.xlane.f32.xlu0 %v2923
  %v2925 = vpop.xlane.xlu0 %2924
  %v2926 = vsel %vm54, %v2920, 0.0
  %2927 = vadd.xlane.f32.xlu0 %v2926
  %v2928 = vpop.xlane.xlu0 %2927
  %v2929 = vsel %vm54, %v2921, 0.0
  %2930 = vadd.xlane.f32.xlu0 %v2929
  %v2931 = vpop.xlane.xlu0 %2930
  %v2932 = vsel %vm54, %v2922, 0.0
  %2933 = vadd.xlane.f32.xlu0 %v2932
  %v2934 = vpop.xlane.xlu0 %2933
  %v2935 = vadd.f32 %v2925, 0.0
  %v2936 = vadd.f32 %v2928, 0.0
  %v2937 = vadd.f32 %v2931, 0.0
  %v2938 = vadd.f32 %v2934, 0.0
  %v2939 = vmul.f32 %v2935, 0.020408163
  %v2940 = vmul.f32 %v2936, 0.020408163
  %v2941 = vmul.f32 %v2937, 0.020408163
  %v2942 = vmul.f32 %v2938, 0.020408163
  %v2943 = vld [vmem:[%s9 + $0x2e0] sm:$0xff]
  %v2944 = vld [vmem:[%s9 + $0x2e8] sm:$0xff]
  %v2945 = vld [vmem:[%s9 + $0x2f0] sm:$0xff]
  %v2946 = vld [vmem:[%s9 + $0x2f8] sm:$0xff]
  %v2947 = vld [vmem:[%s10 + $0x2e0] sm:$0xff]
  %v2948 = vld [vmem:[%s10 + $0x2e8] sm:$0xff]
  %v2949 = vld [vmem:[%s10 + $0x2f0] sm:$0xff]
  %v2950 = vld [vmem:[%s10 + $0x2f8] sm:$0xff]
  %v2951 = vadd.f32 %v2939, 1e-05
  %v2952 = vadd.f32 %v2940, 1e-05
  %v2953 = vadd.f32 %v2941, 1e-05
  %v2954 = vadd.f32 %v2942, 1e-05
  %v2955 = vrsqrt.pop %v2951
  %v2956 = vrsqrt.pop %v2952
  %v2957 = vrsqrt.pop %v2953
  %v2958 = vrsqrt.pop %v2954
  %v2959 = vmul.f32 %v2955, %v2943
  %v2960 = vmul.f32 %v2956, %v2944
  %v2961 = vmul.f32 %v2957, %v2945
  %v2962 = vmul.f32 %v2958, %v2946
  %2964 = vset.pattern.permute.xlu0 0
  %2965 = vperm.xlu0 %2964, %v2959
  %v2966 = vpop.permute.xlu0 %2965
  %2969 = vset.pattern.permute.xlu0 0
  %2970 = vperm.xlu0 %2969, %v2960
  %v2971 = vpop.permute.xlu0 %2970
  %2974 = vset.pattern.permute.xlu0 0
  %2975 = vperm.xlu0 %2974, %v2961
  %v2976 = vpop.permute.xlu0 %2975
  %2979 = vset.pattern.permute.xlu0 0
  %2980 = vperm.xlu0 %2979, %v2962
  %v2981 = vpop.permute.xlu0 %2980
  %v2983 = vmul.f32 %v2915, %v2966
  %v2984 = vmul.f32 %v2916, %v2971
  %v2985 = vmul.f32 %v2917, %v2976
  %v2986 = vmul.f32 %v2918, %v2981
  %2988 = vset.pattern.permute.xlu0 0
  %2989 = vperm.xlu0 %2988, %v2947
  %v2990 = vpop.permute.xlu0 %2989
  %2993 = vset.pattern.permute.xlu0 0
  %2994 = vperm.xlu0 %2993, %v2948
  %v2995 = vpop.permute.xlu0 %2994
  %2998 = vset.pattern.permute.xlu0 0
  %2999 = vperm.xlu0 %2998, %v2949
  %v3000 = vpop.permute.xlu0 %2999
  %3003 = vset.pattern.permute.xlu0 0
  %3004 = vperm.xlu0 %3003, %v2950
  %v3005 = vpop.permute.xlu0 %3004
  %v3007 = vadd.f32 %v2983, %v2990
  %v3008 = vadd.f32 %v2984, %v2995
  %v3009 = vadd.f32 %v2985, %v3000
  %v3010 = vadd.f32 %v2986, %v3005
  %3011 = vst.msk [vmem:[%s11 + $0x2e0] sm:$0xff] %vm54, %v3007
  %3012 = vst.msk [vmem:[%s11 + $0x2e8] sm:$0xff] %vm54, %v3008
  %3013 = vst.msk [vmem:[%s11 + $0x2f0] sm:$0xff] %vm54, %v3009
  %3014 = vst.msk [vmem:[%s11 + $0x2f8] sm:$0xff] %vm54, %v3010
  // Predicated region
  $region46: #{tpu_custom_call.1} parent=0 // pred_check
    _
  $region47: #{tpu_custom_call.1} parent=0 // pred_check_branch
    %3016 = sbr.rel (0) target = $region49
  $region48: #{tpu_custom_call.1} parent=0 // pred_region
    _
  $region49: #{tpu_custom_call.1} parent=0 // pred_fallthru
    _
  // Predicated region
  $region50: #{tpu_custom_call.1} parent=0 // pred_check
    _
  $region51: #{tpu_custom_call.1} parent=0 // pred_check_branch
    %3018 = sbr.rel (0) target = $region53
  $region52: #{tpu_custom_call.1} parent=0 // pred_region
    _
  $region53: #{tpu_custom_call.1} parent=0 // pred_fallthru
    _

</llo_original>
